<compile_context>
chip_gen: v7x
topology: tpu7x:2x2x1
jax: 0.10.0
libtpu: 0.0.40
codegen_flags: <defaults>
</compile_context>

<pallas_src>
import jax
import jax.numpy as jnp
from jax.experimental import pallas as pl
from jax.experimental.pallas import tpu as pltpu


BTILE = 128   # batch elements per grid step = one full lane dimension
O_PAD = 8     # output rows padded to one full sublane tile (lane-dense store)


def cnn_lstm_kernel(x_ref, wc_ref, bc_ref, wih_ref, whh_ref, bls_ref,
                    wl_ref, bl_ref, out_ref):
    """One grid step processes a (BTILE,) slab of batch elements, batch-in-lanes.

    Block shapes:
      x_ref   : (L, Cin, Bt)     time-major input tile, batch on lanes
      wc_ref  : (Cout, K*Cin)    conv weight, im2col layout (k-major, cin-minor)
      bc_ref  : (Cout, 1)
      wih_ref : (4H, Cout)       LSTM W_ih (PyTorch layout, used directly)
      whh_ref : (4H, H)          LSTM W_hh
      bls_ref : (4H, 1)          b_ih + b_hh
      wl_ref  : (O_pad, H)       Linear weight, rows >= O are zero
      bl_ref  : (O_pad, 1)       Linear bias, rows >= O are -1e30 (softmax-neutral)
      out_ref : (O_pad, Bt)      softmax probabilities (pad rows are ~0)
    """
    L, Cin, Bt = x_ref.shape
    Cout, KCin = wc_ref.shape
    K = KCin // Cin
    G, H = whh_ref.shape                       # G = 4H
    Lout = L - K + 1

    # Hoist weight loads and lane-broadcast biases out of the recurrence.
    wc = wc_ref[...]                           # (Cout, K*Cin)
    wih = wih_ref[...]                         # (4H, Cout)
    whh = whh_ref[...]                         # (4H, H)
    bc = jnp.broadcast_to(bc_ref[...], (Cout, Bt))
    bls = jnp.broadcast_to(bls_ref[...], (G, Bt))

    def step(t, carry):
        h, c = carry
        # ---- Conv1d(k=K) as one im2col matmul for output timestep t. ----
        # Leading-axis dynamic slice + tile-aligned reshape (Cin = 8 sublanes
        # per tap): (K, Cin, Bt) -> (K*Cin, Bt) is a pure relabeling.
        xc = x_ref[pl.ds(t, K), :, :].reshape(KCin, Bt)
        conv = jnp.maximum(
            jnp.dot(wc, xc, preferred_element_type=jnp.float32) + bc, 0.0)
        # ---- LSTM gates: input projection + recurrent projection. ----
        gates = (jnp.dot(wih, conv, preferred_element_type=jnp.float32) + bls
                 + jnp.dot(whh, h, preferred_element_type=jnp.float32))
        # PyTorch gate order (i, f, g, o); slices are sublane-aligned (x32).
        i = jax.nn.sigmoid(gates[0 * H:1 * H])
        f = jax.nn.sigmoid(gates[1 * H:2 * H])
        g = jnp.tanh(gates[2 * H:3 * H])
        o = jax.nn.sigmoid(gates[3 * H:4 * H])
        c = f * c + i * g
        h = o * jnp.tanh(c)
        return h, c

    h0 = jnp.zeros((H, Bt), jnp.float32)
    c0 = jnp.zeros((H, Bt), jnp.float32)
    # Short sequences: fully unroll.  Long sequences: partial unroll of 8 so
    # the scheduler can overlap conv/xp of step t+1 with EUP/VPU of step t.
    unroll = True if Lout <= 32 else 8
    h, _ = jax.lax.fori_loop(0, Lout, step, (h0, c0), unroll=unroll)

    # ---- Linear(H -> O_pad) + softmax over the sublane (class) axis. ----
    logits = jnp.dot(wl_ref[...], h, preferred_element_type=jnp.float32) + bl_ref[...]
    logits = logits - jnp.max(logits, axis=0, keepdims=True)
    e = jnp.exp(logits)                         # pad rows -> exp(-1e30) = 0
    out_ref[...] = e / jnp.sum(e, axis=0, keepdims=True)


def cnn_lstm_forward(x, params, *, btile=BTILE):
    """x: (B, L, Cin) float32. Returns (B, O) softmax probabilities."""
    wc, bc, wih, whh, bls, wl, bl = params
    B, L, Cin = x.shape
    Cout, KCin = wc.shape
    G, H = whh.shape
    O = wl.shape[0]

    # Pad batch to a multiple of the lane tile and go (L, Cin, B) time-major,
    # batch-in-lanes.
    Bp = int(pl.cdiv(B, btile)) * btile
    xt = jnp.transpose(x, (1, 2, 0))                        # (L, Cin, B)
    if Bp != B:
        xt = jnp.pad(xt, ((0, 0), (0, 0), (0, Bp - B)))

    # Pad the classification head to O_PAD sublane rows so the output store is
    # a full unmasked (8, 128) vreg.  Pad biases are -1e30 -> softmax weight 0.
    wl_p = jnp.zeros((O_PAD, H), jnp.float32).at[:O, :].set(wl)
    bl_p = jnp.full((O_PAD, 1), -1e30, jnp.float32).at[:O, :].set(bl)

    def bcast_spec(shape):
        n = len(shape)
        return pl.BlockSpec(shape, lambda b, _n=n: (0,) * _n)

    out = pl.pallas_call(
        cnn_lstm_kernel,
        out_shape=jax.ShapeDtypeStruct((O_PAD, Bp), jnp.float32),
        grid=(Bp // btile,),
        in_specs=[
            pl.BlockSpec((L, Cin, btile), lambda b: (0, 0, b)),   # batch tile
            bcast_spec(wc.shape),
            bcast_spec(bc.shape),
            bcast_spec(wih.shape),
            bcast_spec(whh.shape),
            bcast_spec(bls.shape),
            bcast_spec(wl_p.shape),
            bcast_spec(bl_p.shape),
        ],
        out_specs=pl.BlockSpec((O_PAD, btile), lambda b: (0, b)),
        compiler_params=pltpu.CompilerParams(
            dimension_semantics=("parallel",)),
    )(xt, wc, bc, wih, whh, bls, wl_p, bl_p)

    return jnp.transpose(out[:O, :B], (1, 0))                # (B, O)


def reference_forward(x, params):
    """Pure-JAX reference mirroring the PyTorch forward semantics."""
    wc, bc, wih, whh, bls, wl, bl = params
    B, L, Cin = x.shape
    Cout, KCin = wc.shape
    K = KCin // Cin
    H = whh.shape[1]
    Lout = L - K + 1

    wck = wc.reshape(Cout, K, Cin)
    conv = jnp.zeros((B, Lout, Cout), jnp.float32)
    for k in range(K):
        conv = conv + jnp.einsum('blc,oc->blo', x[:, k:k + Lout, :], wck[:, k, :])
    conv = jax.nn.relu(conv + bc[:, 0][None, None, :])

    xp = jnp.einsum('blo,go->blg', conv, wih) + bls[:, 0][None, None, :]
    h = jnp.zeros((B, H), jnp.float32)
    c = jnp.zeros((B, H), jnp.float32)
    for t in range(Lout):
        gates = xp[:, t, :] + h @ whh.T
        i = jax.nn.sigmoid(gates[:, 0 * H:1 * H])
        f = jax.nn.sigmoid(gates[:, 1 * H:2 * H])
        g = jnp.tanh(gates[:, 2 * H:3 * H])
        o = jax.nn.sigmoid(gates[:, 3 * H:4 * H])
        c = f * c + i * g
        h = o * jnp.tanh(c)
    logits = h @ wl.T + bl[:, 0][None, :]
    return jax.nn.softmax(logits, axis=-1)


if __name__ == "__main__":
    # Small shapes consistent with the module: conv out=64, LSTM hidden=32, out=4.
    B, L, Cin = 2, 10, 8
    K, Cout, H, O = 3, 64, 32, 4

    key = jax.random.PRNGKey(0)
    ks = jax.random.split(key, 9)

    def uinit(k, shape, fan_in):
        bound = 1.0 / jnp.sqrt(jnp.float32(fan_in))
        return jax.random.uniform(k, shape, jnp.float32, -bound, bound)

    x = jax.random.normal(ks[0], (B, L, Cin), jnp.float32)

    wc  = uinit(ks[1], (Cout, K * Cin), Cin * K)   # Conv1d weight, im2col layout
    bc  = uinit(ks[2], (Cout, 1), Cin * K)         # Conv1d bias
    wih = uinit(ks[3], (4 * H, Cout), H)           # LSTM W_ih
    whh = uinit(ks[4], (4 * H, H), H)              # LSTM W_hh
    bls = uinit(ks[5], (4 * H, 1), H) + uinit(ks[6], (4 * H, 1), H)  # b_ih + b_hh
    wl  = uinit(ks[7], (O, H), H)                  # Linear weight
    bl  = uinit(ks[8], (O, 1), H)                  # Linear bias
    params = (wc, bc, wih, whh, bls, wl, bl)

    y = jax.block_until_ready(cnn_lstm_forward(x, params))
    y_ref = reference_forward(x, params)

    assert y.shape == (B, O)
    assert bool(jnp.all(jnp.isfinite(y)))
    assert bool(jnp.allclose(jnp.sum(y, axis=-1), 1.0, atol=1e-4))
    assert bool(jnp.allclose(y, y_ref, atol=1e-3, rtol=1e-3))

    print("KERNEL_OK")
</pallas_src>

<mosaic_0001>
module attributes {stable_mosaic.version = 11 : i64} {
  func.func @cnn_lstm_kernel(%arg0: i32, %arg1: memref<10x8x128xf32, #tpu.memory_space<vmem>>, %arg2: memref<64x24xf32, #tpu.memory_space<vmem>>, %arg3: memref<64x1xf32, #tpu.memory_space<vmem>>, %arg4: memref<128x64xf32, #tpu.memory_space<vmem>>, %arg5: memref<128x32xf32, #tpu.memory_space<vmem>>, %arg6: memref<128x1xf32, #tpu.memory_space<vmem>>, %arg7: memref<8x32xf32, #tpu.memory_space<vmem>>, %arg8: memref<8x1xf32, #tpu.memory_space<vmem>>, %arg9: memref<8x128xf32, #tpu.memory_space<vmem>>) attributes {dimension_semantics = [#tpu.dimension_semantics<parallel>], iteration_bounds = array<i64: 1>, scalar_prefetch = 0 : i64, scratch_operands = 0 : i64, tpu.core_type = #tpu.core_type<tc>, window_params = [{transform_indices = @transform_0, window_bounds = array<i64: 10, 8, 128>}, {pipeline_mode = #tpu.pipeline_mode<synchronous>, transform_indices = @transform_1, window_bounds = array<i64: 64, 24>}, {pipeline_mode = #tpu.pipeline_mode<synchronous>, transform_indices = @transform_2, window_bounds = array<i64: 64, 1>}, {pipeline_mode = #tpu.pipeline_mode<synchronous>, transform_indices = @transform_3, window_bounds = array<i64: 128, 64>}, {pipeline_mode = #tpu.pipeline_mode<synchronous>, transform_indices = @transform_4, window_bounds = array<i64: 128, 32>}, {pipeline_mode = #tpu.pipeline_mode<synchronous>, transform_indices = @transform_5, window_bounds = array<i64: 128, 1>}, {pipeline_mode = #tpu.pipeline_mode<synchronous>, transform_indices = @transform_6, window_bounds = array<i64: 8, 32>}, {pipeline_mode = #tpu.pipeline_mode<synchronous>, transform_indices = @transform_7, window_bounds = array<i64: 8, 1>}, {transform_indices = @transform_8, window_bounds = array<i64: 8, 128>}]} {
    %c0 = arith.constant 0 : index
    %c0_0 = arith.constant 0 : index
    %0 = vector.load %arg2[%c0, %c0_0] : memref<64x24xf32, #tpu.memory_space<vmem>>, vector<64x24xf32>
    %c0_1 = arith.constant 0 : index
    %c0_2 = arith.constant 0 : index
    %1 = vector.load %arg4[%c0_1, %c0_2] : memref<128x64xf32, #tpu.memory_space<vmem>>, vector<128x64xf32>
    %c0_3 = arith.constant 0 : index
    %c0_4 = arith.constant 0 : index
    %2 = vector.load %arg5[%c0_3, %c0_4] : memref<128x32xf32, #tpu.memory_space<vmem>>, vector<128x32xf32>
    %c0_5 = arith.constant 0 : index
    %c0_6 = arith.constant 0 : index
    %3 = vector.load %arg3[%c0_5, %c0_6] : memref<64x1xf32, #tpu.memory_space<vmem>>, vector<64x1xf32>
    %4 = vector.shape_cast %3 : vector<64x1xf32> to vector<64x1xf32>
    %5 = vector.broadcast %4 : vector<64x1xf32> to vector<64x128xf32>
    %c0_7 = arith.constant 0 : index
    %c0_8 = arith.constant 0 : index
    %6 = vector.load %arg6[%c0_7, %c0_8] : memref<128x1xf32, #tpu.memory_space<vmem>>, vector<128x1xf32>
    %7 = vector.shape_cast %6 : vector<128x1xf32> to vector<128x1xf32>
    %8 = vector.broadcast %7 : vector<128x1xf32> to vector<128x128xf32>
    %cst = arith.constant 0.000000e+00 : f32
    %9 = vector.broadcast %cst : f32 to vector<32x128xf32>
    %cst_9 = arith.constant 0.000000e+00 : f32
    %10 = vector.broadcast %cst_9 : f32 to vector<32x128xf32>
    %c0_i32 = arith.constant 0 : i32
    %11 = arith.index_cast %c0_i32 : i32 to index
    %c0_10 = arith.constant 0 : index
    %c0_11 = arith.constant 0 : index
    %12 = vector.load %arg1[%11, %c0_10, %c0_11] : memref<10x8x128xf32, #tpu.memory_space<vmem>>, vector<3x8x128xf32>
    %13 = vector.shape_cast %12 : vector<3x8x128xf32> to vector<24x128xf32>
    %cst_12 = arith.constant dense<0.000000e+00> : vector<64x128xf32>
    %14 = tpu.matmul %0, %13, %cst_12 {dimension_numbers = #tpu.dot_dimension_numbers<[1], [0], [0], [1], [0, 0, 1, 1], [], []>} : vector<64x24xf32>, vector<24x128xf32>, vector<64x128xf32> -> vector<64x128xf32>
    %15 = arith.addf %14, %5 : vector<64x128xf32>
    %cst_13 = arith.constant 0.000000e+00 : f32
    %16 = vector.broadcast %cst_13 : f32 to vector<64x128xf32>
    %17 = arith.maximumf %15, %16 : vector<64x128xf32>
    %cst_14 = arith.constant dense<0.000000e+00> : vector<128x128xf32>
    %18 = tpu.matmul %1, %17, %cst_14 {dimension_numbers = #tpu.dot_dimension_numbers<[1], [0], [0], [1], [0, 0, 1, 1], [], []>} : vector<128x64xf32>, vector<64x128xf32>, vector<128x128xf32> -> vector<128x128xf32>
    %19 = arith.addf %18, %8 : vector<128x128xf32>
    %cst_15 = arith.constant dense<0.000000e+00> : vector<128x128xf32>
    %20 = tpu.matmul %2, %9, %cst_15 {dimension_numbers = #tpu.dot_dimension_numbers<[1], [0], [0], [1], [0, 0, 1, 1], [], []>} : vector<128x32xf32>, vector<32x128xf32>, vector<128x128xf32> -> vector<128x128xf32>
    %21 = arith.addf %19, %20 : vector<128x128xf32>
    %22 = vector.extract_strided_slice %21 {offsets = [0, 0], sizes = [32, 128], strides = [1, 1]} : vector<128x128xf32> to vector<32x128xf32>
    %23 = arith.negf %22 : vector<32x128xf32>
    %24 = math.exp %23 : vector<32x128xf32>
    %cst_16 = arith.constant 1.000000e+00 : f32
    %25 = vector.broadcast %cst_16 : f32 to vector<32x128xf32>
    %26 = arith.addf %25, %24 : vector<32x128xf32>
    %27 = arith.divf %25, %26 : vector<32x128xf32>
    %28 = vector.extract_strided_slice %21 {offsets = [32, 0], sizes = [32, 128], strides = [1, 1]} : vector<128x128xf32> to vector<32x128xf32>
    %29 = arith.negf %28 : vector<32x128xf32>
    %30 = math.exp %29 : vector<32x128xf32>
    %cst_17 = arith.constant 1.000000e+00 : f32
    %31 = vector.broadcast %cst_17 : f32 to vector<32x128xf32>
    %32 = arith.addf %31, %30 : vector<32x128xf32>
    %33 = arith.divf %31, %32 : vector<32x128xf32>
    %34 = vector.extract_strided_slice %21 {offsets = [64, 0], sizes = [32, 128], strides = [1, 1]} : vector<128x128xf32> to vector<32x128xf32>
    %35 = math.tanh %34 : vector<32x128xf32>
    %36 = vector.extract_strided_slice %21 {offsets = [96, 0], sizes = [32, 128], strides = [1, 1]} : vector<128x128xf32> to vector<32x128xf32>
    %37 = arith.negf %36 : vector<32x128xf32>
    %38 = math.exp %37 : vector<32x128xf32>
    %cst_18 = arith.constant 1.000000e+00 : f32
    %39 = vector.broadcast %cst_18 : f32 to vector<32x128xf32>
    %40 = arith.addf %39, %38 : vector<32x128xf32>
    %41 = arith.divf %39, %40 : vector<32x128xf32>
    %42 = arith.mulf %33, %10 : vector<32x128xf32>
    %43 = arith.mulf %27, %35 : vector<32x128xf32>
    %44 = arith.addf %42, %43 : vector<32x128xf32>
    %45 = math.tanh %44 : vector<32x128xf32>
    %46 = arith.mulf %41, %45 : vector<32x128xf32>
    %c1_i32 = arith.constant 1 : i32
    %47 = arith.index_cast %c1_i32 : i32 to index
    %c0_19 = arith.constant 0 : index
    %c0_20 = arith.constant 0 : index
    %48 = vector.load %arg1[%47, %c0_19, %c0_20] : memref<10x8x128xf32, #tpu.memory_space<vmem>>, vector<3x8x128xf32>
    %49 = vector.shape_cast %48 : vector<3x8x128xf32> to vector<24x128xf32>
    %cst_21 = arith.constant dense<0.000000e+00> : vector<64x128xf32>
    %50 = tpu.matmul %0, %49, %cst_21 {dimension_numbers = #tpu.dot_dimension_numbers<[1], [0], [0], [1], [0, 0, 1, 1], [], []>} : vector<64x24xf32>, vector<24x128xf32>, vector<64x128xf32> -> vector<64x128xf32>
    %51 = arith.addf %50, %5 : vector<64x128xf32>
    %cst_22 = arith.constant 0.000000e+00 : f32
    %52 = vector.broadcast %cst_22 : f32 to vector<64x128xf32>
    %53 = arith.maximumf %51, %52 : vector<64x128xf32>
    %cst_23 = arith.constant dense<0.000000e+00> : vector<128x128xf32>
    %54 = tpu.matmul %1, %53, %cst_23 {dimension_numbers = #tpu.dot_dimension_numbers<[1], [0], [0], [1], [0, 0, 1, 1], [], []>} : vector<128x64xf32>, vector<64x128xf32>, vector<128x128xf32> -> vector<128x128xf32>
    %55 = arith.addf %54, %8 : vector<128x128xf32>
    %cst_24 = arith.constant dense<0.000000e+00> : vector<128x128xf32>
    %56 = tpu.matmul %2, %46, %cst_24 {dimension_numbers = #tpu.dot_dimension_numbers<[1], [0], [0], [1], [0, 0, 1, 1], [], []>} : vector<128x32xf32>, vector<32x128xf32>, vector<128x128xf32> -> vector<128x128xf32>
    %57 = arith.addf %55, %56 : vector<128x128xf32>
    %58 = vector.extract_strided_slice %57 {offsets = [0, 0], sizes = [32, 128], strides = [1, 1]} : vector<128x128xf32> to vector<32x128xf32>
    %59 = arith.negf %58 : vector<32x128xf32>
    %60 = math.exp %59 : vector<32x128xf32>
    %cst_25 = arith.constant 1.000000e+00 : f32
    %61 = vector.broadcast %cst_25 : f32 to vector<32x128xf32>
    %62 = arith.addf %61, %60 : vector<32x128xf32>
    %63 = arith.divf %61, %62 : vector<32x128xf32>
    %64 = vector.extract_strided_slice %57 {offsets = [32, 0], sizes = [32, 128], strides = [1, 1]} : vector<128x128xf32> to vector<32x128xf32>
    %65 = arith.negf %64 : vector<32x128xf32>
    %66 = math.exp %65 : vector<32x128xf32>
    %cst_26 = arith.constant 1.000000e+00 : f32
    %67 = vector.broadcast %cst_26 : f32 to vector<32x128xf32>
    %68 = arith.addf %67, %66 : vector<32x128xf32>
    %69 = arith.divf %67, %68 : vector<32x128xf32>
    %70 = vector.extract_strided_slice %57 {offsets = [64, 0], sizes = [32, 128], strides = [1, 1]} : vector<128x128xf32> to vector<32x128xf32>
    %71 = math.tanh %70 : vector<32x128xf32>
    %72 = vector.extract_strided_slice %57 {offsets = [96, 0], sizes = [32, 128], strides = [1, 1]} : vector<128x128xf32> to vector<32x128xf32>
    %73 = arith.negf %72 : vector<32x128xf32>
    %74 = math.exp %73 : vector<32x128xf32>
    %cst_27 = arith.constant 1.000000e+00 : f32
    %75 = vector.broadcast %cst_27 : f32 to vector<32x128xf32>
    %76 = arith.addf %75, %74 : vector<32x128xf32>
    %77 = arith.divf %75, %76 : vector<32x128xf32>
    %78 = arith.mulf %69, %44 : vector<32x128xf32>
    %79 = arith.mulf %63, %71 : vector<32x128xf32>
    %80 = arith.addf %78, %79 : vector<32x128xf32>
    %81 = math.tanh %80 : vector<32x128xf32>
    %82 = arith.mulf %77, %81 : vector<32x128xf32>
    %c2_i32 = arith.constant 2 : i32
    %83 = arith.index_cast %c2_i32 : i32 to index
    %c0_28 = arith.constant 0 : index
    %c0_29 = arith.constant 0 : index
    %84 = vector.load %arg1[%83, %c0_28, %c0_29] : memref<10x8x128xf32, #tpu.memory_space<vmem>>, vector<3x8x128xf32>
    %85 = vector.shape_cast %84 : vector<3x8x128xf32> to vector<24x128xf32>
    %cst_30 = arith.constant dense<0.000000e+00> : vector<64x128xf32>
    %86 = tpu.matmul %0, %85, %cst_30 {dimension_numbers = #tpu.dot_dimension_numbers<[1], [0], [0], [1], [0, 0, 1, 1], [], []>} : vector<64x24xf32>, vector<24x128xf32>, vector<64x128xf32> -> vector<64x128xf32>
    %87 = arith.addf %86, %5 : vector<64x128xf32>
    %cst_31 = arith.constant 0.000000e+00 : f32
    %88 = vector.broadcast %cst_31 : f32 to vector<64x128xf32>
    %89 = arith.maximumf %87, %88 : vector<64x128xf32>
    %cst_32 = arith.constant dense<0.000000e+00> : vector<128x128xf32>
    %90 = tpu.matmul %1, %89, %cst_32 {dimension_numbers = #tpu.dot_dimension_numbers<[1], [0], [0], [1], [0, 0, 1, 1], [], []>} : vector<128x64xf32>, vector<64x128xf32>, vector<128x128xf32> -> vector<128x128xf32>
    %91 = arith.addf %90, %8 : vector<128x128xf32>
    %cst_33 = arith.constant dense<0.000000e+00> : vector<128x128xf32>
    %92 = tpu.matmul %2, %82, %cst_33 {dimension_numbers = #tpu.dot_dimension_numbers<[1], [0], [0], [1], [0, 0, 1, 1], [], []>} : vector<128x32xf32>, vector<32x128xf32>, vector<128x128xf32> -> vector<128x128xf32>
    %93 = arith.addf %91, %92 : vector<128x128xf32>
    %94 = vector.extract_strided_slice %93 {offsets = [0, 0], sizes = [32, 128], strides = [1, 1]} : vector<128x128xf32> to vector<32x128xf32>
    %95 = arith.negf %94 : vector<32x128xf32>
    %96 = math.exp %95 : vector<32x128xf32>
    %cst_34 = arith.constant 1.000000e+00 : f32
    %97 = vector.broadcast %cst_34 : f32 to vector<32x128xf32>
    %98 = arith.addf %97, %96 : vector<32x128xf32>
    %99 = arith.divf %97, %98 : vector<32x128xf32>
    %100 = vector.extract_strided_slice %93 {offsets = [32, 0], sizes = [32, 128], strides = [1, 1]} : vector<128x128xf32> to vector<32x128xf32>
    %101 = arith.negf %100 : vector<32x128xf32>
    %102 = math.exp %101 : vector<32x128xf32>
    %cst_35 = arith.constant 1.000000e+00 : f32
    %103 = vector.broadcast %cst_35 : f32 to vector<32x128xf32>
    %104 = arith.addf %103, %102 : vector<32x128xf32>
    %105 = arith.divf %103, %104 : vector<32x128xf32>
    %106 = vector.extract_strided_slice %93 {offsets = [64, 0], sizes = [32, 128], strides = [1, 1]} : vector<128x128xf32> to vector<32x128xf32>
    %107 = math.tanh %106 : vector<32x128xf32>
    %108 = vector.extract_strided_slice %93 {offsets = [96, 0], sizes = [32, 128], strides = [1, 1]} : vector<128x128xf32> to vector<32x128xf32>
    %109 = arith.negf %108 : vector<32x128xf32>
    %110 = math.exp %109 : vector<32x128xf32>
    %cst_36 = arith.constant 1.000000e+00 : f32
    %111 = vector.broadcast %cst_36 : f32 to vector<32x128xf32>
    %112 = arith.addf %111, %110 : vector<32x128xf32>
    %113 = arith.divf %111, %112 : vector<32x128xf32>
    %114 = arith.mulf %105, %80 : vector<32x128xf32>
    %115 = arith.mulf %99, %107 : vector<32x128xf32>
    %116 = arith.addf %114, %115 : vector<32x128xf32>
    %117 = math.tanh %116 : vector<32x128xf32>
    %118 = arith.mulf %113, %117 : vector<32x128xf32>
    %c3_i32 = arith.constant 3 : i32
    %119 = arith.index_cast %c3_i32 : i32 to index
    %c0_37 = arith.constant 0 : index
    %c0_38 = arith.constant 0 : index
    %120 = vector.load %arg1[%119, %c0_37, %c0_38] : memref<10x8x128xf32, #tpu.memory_space<vmem>>, vector<3x8x128xf32>
    %121 = vector.shape_cast %120 : vector<3x8x128xf32> to vector<24x128xf32>
    %cst_39 = arith.constant dense<0.000000e+00> : vector<64x128xf32>
    %122 = tpu.matmul %0, %121, %cst_39 {dimension_numbers = #tpu.dot_dimension_numbers<[1], [0], [0], [1], [0, 0, 1, 1], [], []>} : vector<64x24xf32>, vector<24x128xf32>, vector<64x128xf32> -> vector<64x128xf32>
    %123 = arith.addf %122, %5 : vector<64x128xf32>
    %cst_40 = arith.constant 0.000000e+00 : f32
    %124 = vector.broadcast %cst_40 : f32 to vector<64x128xf32>
    %125 = arith.maximumf %123, %124 : vector<64x128xf32>
    %cst_41 = arith.constant dense<0.000000e+00> : vector<128x128xf32>
    %126 = tpu.matmul %1, %125, %cst_41 {dimension_numbers = #tpu.dot_dimension_numbers<[1], [0], [0], [1], [0, 0, 1, 1], [], []>} : vector<128x64xf32>, vector<64x128xf32>, vector<128x128xf32> -> vector<128x128xf32>
    %127 = arith.addf %126, %8 : vector<128x128xf32>
    %cst_42 = arith.constant dense<0.000000e+00> : vector<128x128xf32>
    %128 = tpu.matmul %2, %118, %cst_42 {dimension_numbers = #tpu.dot_dimension_numbers<[1], [0], [0], [1], [0, 0, 1, 1], [], []>} : vector<128x32xf32>, vector<32x128xf32>, vector<128x128xf32> -> vector<128x128xf32>
    %129 = arith.addf %127, %128 : vector<128x128xf32>
    %130 = vector.extract_strided_slice %129 {offsets = [0, 0], sizes = [32, 128], strides = [1, 1]} : vector<128x128xf32> to vector<32x128xf32>
    %131 = arith.negf %130 : vector<32x128xf32>
    %132 = math.exp %131 : vector<32x128xf32>
    %cst_43 = arith.constant 1.000000e+00 : f32
    %133 = vector.broadcast %cst_43 : f32 to vector<32x128xf32>
    %134 = arith.addf %133, %132 : vector<32x128xf32>
    %135 = arith.divf %133, %134 : vector<32x128xf32>
    %136 = vector.extract_strided_slice %129 {offsets = [32, 0], sizes = [32, 128], strides = [1, 1]} : vector<128x128xf32> to vector<32x128xf32>
    %137 = arith.negf %136 : vector<32x128xf32>
    %138 = math.exp %137 : vector<32x128xf32>
    %cst_44 = arith.constant 1.000000e+00 : f32
    %139 = vector.broadcast %cst_44 : f32 to vector<32x128xf32>
    %140 = arith.addf %139, %138 : vector<32x128xf32>
    %141 = arith.divf %139, %140 : vector<32x128xf32>
    %142 = vector.extract_strided_slice %129 {offsets = [64, 0], sizes = [32, 128], strides = [1, 1]} : vector<128x128xf32> to vector<32x128xf32>
    %143 = math.tanh %142 : vector<32x128xf32>
    %144 = vector.extract_strided_slice %129 {offsets = [96, 0], sizes = [32, 128], strides = [1, 1]} : vector<128x128xf32> to vector<32x128xf32>
    %145 = arith.negf %144 : vector<32x128xf32>
    %146 = math.exp %145 : vector<32x128xf32>
    %cst_45 = arith.constant 1.000000e+00 : f32
    %147 = vector.broadcast %cst_45 : f32 to vector<32x128xf32>
    %148 = arith.addf %147, %146 : vector<32x128xf32>
    %149 = arith.divf %147, %148 : vector<32x128xf32>
    %150 = arith.mulf %141, %116 : vector<32x128xf32>
    %151 = arith.mulf %135, %143 : vector<32x128xf32>
    %152 = arith.addf %150, %151 : vector<32x128xf32>
    %153 = math.tanh %152 : vector<32x128xf32>
    %154 = arith.mulf %149, %153 : vector<32x128xf32>
    %c4_i32 = arith.constant 4 : i32
    %155 = arith.index_cast %c4_i32 : i32 to index
    %c0_46 = arith.constant 0 : index
    %c0_47 = arith.constant 0 : index
    %156 = vector.load %arg1[%155, %c0_46, %c0_47] : memref<10x8x128xf32, #tpu.memory_space<vmem>>, vector<3x8x128xf32>
    %157 = vector.shape_cast %156 : vector<3x8x128xf32> to vector<24x128xf32>
    %cst_48 = arith.constant dense<0.000000e+00> : vector<64x128xf32>
    %158 = tpu.matmul %0, %157, %cst_48 {dimension_numbers = #tpu.dot_dimension_numbers<[1], [0], [0], [1], [0, 0, 1, 1], [], []>} : vector<64x24xf32>, vector<24x128xf32>, vector<64x128xf32> -> vector<64x128xf32>
    %159 = arith.addf %158, %5 : vector<64x128xf32>
    %cst_49 = arith.constant 0.000000e+00 : f32
    %160 = vector.broadcast %cst_49 : f32 to vector<64x128xf32>
    %161 = arith.maximumf %159, %160 : vector<64x128xf32>
    %cst_50 = arith.constant dense<0.000000e+00> : vector<128x128xf32>
    %162 = tpu.matmul %1, %161, %cst_50 {dimension_numbers = #tpu.dot_dimension_numbers<[1], [0], [0], [1], [0, 0, 1, 1], [], []>} : vector<128x64xf32>, vector<64x128xf32>, vector<128x128xf32> -> vector<128x128xf32>
    %163 = arith.addf %162, %8 : vector<128x128xf32>
    %cst_51 = arith.constant dense<0.000000e+00> : vector<128x128xf32>
    %164 = tpu.matmul %2, %154, %cst_51 {dimension_numbers = #tpu.dot_dimension_numbers<[1], [0], [0], [1], [0, 0, 1, 1], [], []>} : vector<128x32xf32>, vector<32x128xf32>, vector<128x128xf32> -> vector<128x128xf32>
    %165 = arith.addf %163, %164 : vector<128x128xf32>
    %166 = vector.extract_strided_slice %165 {offsets = [0, 0], sizes = [32, 128], strides = [1, 1]} : vector<128x128xf32> to vector<32x128xf32>
    %167 = arith.negf %166 : vector<32x128xf32>
    %168 = math.exp %167 : vector<32x128xf32>
    %cst_52 = arith.constant 1.000000e+00 : f32
    %169 = vector.broadcast %cst_52 : f32 to vector<32x128xf32>
    %170 = arith.addf %169, %168 : vector<32x128xf32>
    %171 = arith.divf %169, %170 : vector<32x128xf32>
    %172 = vector.extract_strided_slice %165 {offsets = [32, 0], sizes = [32, 128], strides = [1, 1]} : vector<128x128xf32> to vector<32x128xf32>
    %173 = arith.negf %172 : vector<32x128xf32>
    %174 = math.exp %173 : vector<32x128xf32>
    %cst_53 = arith.constant 1.000000e+00 : f32
    %175 = vector.broadcast %cst_53 : f32 to vector<32x128xf32>
    %176 = arith.addf %175, %174 : vector<32x128xf32>
    %177 = arith.divf %175, %176 : vector<32x128xf32>
    %178 = vector.extract_strided_slice %165 {offsets = [64, 0], sizes = [32, 128], strides = [1, 1]} : vector<128x128xf32> to vector<32x128xf32>
    %179 = math.tanh %178 : vector<32x128xf32>
    %180 = vector.extract_strided_slice %165 {offsets = [96, 0], sizes = [32, 128], strides = [1, 1]} : vector<128x128xf32> to vector<32x128xf32>
    %181 = arith.negf %180 : vector<32x128xf32>
    %182 = math.exp %181 : vector<32x128xf32>
    %cst_54 = arith.constant 1.000000e+00 : f32
    %183 = vector.broadcast %cst_54 : f32 to vector<32x128xf32>
    %184 = arith.addf %183, %182 : vector<32x128xf32>
    %185 = arith.divf %183, %184 : vector<32x128xf32>
    %186 = arith.mulf %177, %152 : vector<32x128xf32>
    %187 = arith.mulf %171, %179 : vector<32x128xf32>
    %188 = arith.addf %186, %187 : vector<32x128xf32>
    %189 = math.tanh %188 : vector<32x128xf32>
    %190 = arith.mulf %185, %189 : vector<32x128xf32>
    %c5_i32 = arith.constant 5 : i32
    %191 = arith.index_cast %c5_i32 : i32 to index
    %c0_55 = arith.constant 0 : index
    %c0_56 = arith.constant 0 : index
    %192 = vector.load %arg1[%191, %c0_55, %c0_56] : memref<10x8x128xf32, #tpu.memory_space<vmem>>, vector<3x8x128xf32>
    %193 = vector.shape_cast %192 : vector<3x8x128xf32> to vector<24x128xf32>
    %cst_57 = arith.constant dense<0.000000e+00> : vector<64x128xf32>
    %194 = tpu.matmul %0, %193, %cst_57 {dimension_numbers = #tpu.dot_dimension_numbers<[1], [0], [0], [1], [0, 0, 1, 1], [], []>} : vector<64x24xf32>, vector<24x128xf32>, vector<64x128xf32> -> vector<64x128xf32>
    %195 = arith.addf %194, %5 : vector<64x128xf32>
    %cst_58 = arith.constant 0.000000e+00 : f32
    %196 = vector.broadcast %cst_58 : f32 to vector<64x128xf32>
    %197 = arith.maximumf %195, %196 : vector<64x128xf32>
    %cst_59 = arith.constant dense<0.000000e+00> : vector<128x128xf32>
    %198 = tpu.matmul %1, %197, %cst_59 {dimension_numbers = #tpu.dot_dimension_numbers<[1], [0], [0], [1], [0, 0, 1, 1], [], []>} : vector<128x64xf32>, vector<64x128xf32>, vector<128x128xf32> -> vector<128x128xf32>
    %199 = arith.addf %198, %8 : vector<128x128xf32>
    %cst_60 = arith.constant dense<0.000000e+00> : vector<128x128xf32>
    %200 = tpu.matmul %2, %190, %cst_60 {dimension_numbers = #tpu.dot_dimension_numbers<[1], [0], [0], [1], [0, 0, 1, 1], [], []>} : vector<128x32xf32>, vector<32x128xf32>, vector<128x128xf32> -> vector<128x128xf32>
    %201 = arith.addf %199, %200 : vector<128x128xf32>
    %202 = vector.extract_strided_slice %201 {offsets = [0, 0], sizes = [32, 128], strides = [1, 1]} : vector<128x128xf32> to vector<32x128xf32>
    %203 = arith.negf %202 : vector<32x128xf32>
    %204 = math.exp %203 : vector<32x128xf32>
    %cst_61 = arith.constant 1.000000e+00 : f32
    %205 = vector.broadcast %cst_61 : f32 to vector<32x128xf32>
    %206 = arith.addf %205, %204 : vector<32x128xf32>
    %207 = arith.divf %205, %206 : vector<32x128xf32>
    %208 = vector.extract_strided_slice %201 {offsets = [32, 0], sizes = [32, 128], strides = [1, 1]} : vector<128x128xf32> to vector<32x128xf32>
    %209 = arith.negf %208 : vector<32x128xf32>
    %210 = math.exp %209 : vector<32x128xf32>
    %cst_62 = arith.constant 1.000000e+00 : f32
    %211 = vector.broadcast %cst_62 : f32 to vector<32x128xf32>
    %212 = arith.addf %211, %210 : vector<32x128xf32>
    %213 = arith.divf %211, %212 : vector<32x128xf32>
    %214 = vector.extract_strided_slice %201 {offsets = [64, 0], sizes = [32, 128], strides = [1, 1]} : vector<128x128xf32> to vector<32x128xf32>
    %215 = math.tanh %214 : vector<32x128xf32>
    %216 = vector.extract_strided_slice %201 {offsets = [96, 0], sizes = [32, 128], strides = [1, 1]} : vector<128x128xf32> to vector<32x128xf32>
    %217 = arith.negf %216 : vector<32x128xf32>
    %218 = math.exp %217 : vector<32x128xf32>
    %cst_63 = arith.constant 1.000000e+00 : f32
    %219 = vector.broadcast %cst_63 : f32 to vector<32x128xf32>
    %220 = arith.addf %219, %218 : vector<32x128xf32>
    %221 = arith.divf %219, %220 : vector<32x128xf32>
    %222 = arith.mulf %213, %188 : vector<32x128xf32>
    %223 = arith.mulf %207, %215 : vector<32x128xf32>
    %224 = arith.addf %222, %223 : vector<32x128xf32>
    %225 = math.tanh %224 : vector<32x128xf32>
    %226 = arith.mulf %221, %225 : vector<32x128xf32>
    %c6_i32 = arith.constant 6 : i32
    %227 = arith.index_cast %c6_i32 : i32 to index
    %c0_64 = arith.constant 0 : index
    %c0_65 = arith.constant 0 : index
    %228 = vector.load %arg1[%227, %c0_64, %c0_65] : memref<10x8x128xf32, #tpu.memory_space<vmem>>, vector<3x8x128xf32>
    %229 = vector.shape_cast %228 : vector<3x8x128xf32> to vector<24x128xf32>
    %cst_66 = arith.constant dense<0.000000e+00> : vector<64x128xf32>
    %230 = tpu.matmul %0, %229, %cst_66 {dimension_numbers = #tpu.dot_dimension_numbers<[1], [0], [0], [1], [0, 0, 1, 1], [], []>} : vector<64x24xf32>, vector<24x128xf32>, vector<64x128xf32> -> vector<64x128xf32>
    %231 = arith.addf %230, %5 : vector<64x128xf32>
    %cst_67 = arith.constant 0.000000e+00 : f32
    %232 = vector.broadcast %cst_67 : f32 to vector<64x128xf32>
    %233 = arith.maximumf %231, %232 : vector<64x128xf32>
    %cst_68 = arith.constant dense<0.000000e+00> : vector<128x128xf32>
    %234 = tpu.matmul %1, %233, %cst_68 {dimension_numbers = #tpu.dot_dimension_numbers<[1], [0], [0], [1], [0, 0, 1, 1], [], []>} : vector<128x64xf32>, vector<64x128xf32>, vector<128x128xf32> -> vector<128x128xf32>
    %235 = arith.addf %234, %8 : vector<128x128xf32>
    %cst_69 = arith.constant dense<0.000000e+00> : vector<128x128xf32>
    %236 = tpu.matmul %2, %226, %cst_69 {dimension_numbers = #tpu.dot_dimension_numbers<[1], [0], [0], [1], [0, 0, 1, 1], [], []>} : vector<128x32xf32>, vector<32x128xf32>, vector<128x128xf32> -> vector<128x128xf32>
    %237 = arith.addf %235, %236 : vector<128x128xf32>
    %238 = vector.extract_strided_slice %237 {offsets = [0, 0], sizes = [32, 128], strides = [1, 1]} : vector<128x128xf32> to vector<32x128xf32>
    %239 = arith.negf %238 : vector<32x128xf32>
    %240 = math.exp %239 : vector<32x128xf32>
    %cst_70 = arith.constant 1.000000e+00 : f32
    %241 = vector.broadcast %cst_70 : f32 to vector<32x128xf32>
    %242 = arith.addf %241, %240 : vector<32x128xf32>
    %243 = arith.divf %241, %242 : vector<32x128xf32>
    %244 = vector.extract_strided_slice %237 {offsets = [32, 0], sizes = [32, 128], strides = [1, 1]} : vector<128x128xf32> to vector<32x128xf32>
    %245 = arith.negf %244 : vector<32x128xf32>
    %246 = math.exp %245 : vector<32x128xf32>
    %cst_71 = arith.constant 1.000000e+00 : f32
    %247 = vector.broadcast %cst_71 : f32 to vector<32x128xf32>
    %248 = arith.addf %247, %246 : vector<32x128xf32>
    %249 = arith.divf %247, %248 : vector<32x128xf32>
    %250 = vector.extract_strided_slice %237 {offsets = [64, 0], sizes = [32, 128], strides = [1, 1]} : vector<128x128xf32> to vector<32x128xf32>
    %251 = math.tanh %250 : vector<32x128xf32>
    %252 = vector.extract_strided_slice %237 {offsets = [96, 0], sizes = [32, 128], strides = [1, 1]} : vector<128x128xf32> to vector<32x128xf32>
    %253 = arith.negf %252 : vector<32x128xf32>
    %254 = math.exp %253 : vector<32x128xf32>
    %cst_72 = arith.constant 1.000000e+00 : f32
    %255 = vector.broadcast %cst_72 : f32 to vector<32x128xf32>
    %256 = arith.addf %255, %254 : vector<32x128xf32>
    %257 = arith.divf %255, %256 : vector<32x128xf32>
    %258 = arith.mulf %249, %224 : vector<32x128xf32>
    %259 = arith.mulf %243, %251 : vector<32x128xf32>
    %260 = arith.addf %258, %259 : vector<32x128xf32>
    %261 = math.tanh %260 : vector<32x128xf32>
    %262 = arith.mulf %257, %261 : vector<32x128xf32>
    %c7_i32 = arith.constant 7 : i32
    %263 = arith.index_cast %c7_i32 : i32 to index
    %c0_73 = arith.constant 0 : index
    %c0_74 = arith.constant 0 : index
    %264 = vector.load %arg1[%263, %c0_73, %c0_74] : memref<10x8x128xf32, #tpu.memory_space<vmem>>, vector<3x8x128xf32>
    %265 = vector.shape_cast %264 : vector<3x8x128xf32> to vector<24x128xf32>
    %cst_75 = arith.constant dense<0.000000e+00> : vector<64x128xf32>
    %266 = tpu.matmul %0, %265, %cst_75 {dimension_numbers = #tpu.dot_dimension_numbers<[1], [0], [0], [1], [0, 0, 1, 1], [], []>} : vector<64x24xf32>, vector<24x128xf32>, vector<64x128xf32> -> vector<64x128xf32>
    %267 = arith.addf %266, %5 : vector<64x128xf32>
    %cst_76 = arith.constant 0.000000e+00 : f32
    %268 = vector.broadcast %cst_76 : f32 to vector<64x128xf32>
    %269 = arith.maximumf %267, %268 : vector<64x128xf32>
    %cst_77 = arith.constant dense<0.000000e+00> : vector<128x128xf32>
    %270 = tpu.matmul %1, %269, %cst_77 {dimension_numbers = #tpu.dot_dimension_numbers<[1], [0], [0], [1], [0, 0, 1, 1], [], []>} : vector<128x64xf32>, vector<64x128xf32>, vector<128x128xf32> -> vector<128x128xf32>
    %271 = arith.addf %270, %8 : vector<128x128xf32>
    %cst_78 = arith.constant dense<0.000000e+00> : vector<128x128xf32>
    %272 = tpu.matmul %2, %262, %cst_78 {dimension_numbers = #tpu.dot_dimension_numbers<[1], [0], [0], [1], [0, 0, 1, 1], [], []>} : vector<128x32xf32>, vector<32x128xf32>, vector<128x128xf32> -> vector<128x128xf32>
    %273 = arith.addf %271, %272 : vector<128x128xf32>
    %274 = vector.extract_strided_slice %273 {offsets = [0, 0], sizes = [32, 128], strides = [1, 1]} : vector<128x128xf32> to vector<32x128xf32>
    %275 = arith.negf %274 : vector<32x128xf32>
    %276 = math.exp %275 : vector<32x128xf32>
    %cst_79 = arith.constant 1.000000e+00 : f32
    %277 = vector.broadcast %cst_79 : f32 to vector<32x128xf32>
    %278 = arith.addf %277, %276 : vector<32x128xf32>
    %279 = arith.divf %277, %278 : vector<32x128xf32>
    %280 = vector.extract_strided_slice %273 {offsets = [32, 0], sizes = [32, 128], strides = [1, 1]} : vector<128x128xf32> to vector<32x128xf32>
    %281 = arith.negf %280 : vector<32x128xf32>
    %282 = math.exp %281 : vector<32x128xf32>
    %cst_80 = arith.constant 1.000000e+00 : f32
    %283 = vector.broadcast %cst_80 : f32 to vector<32x128xf32>
    %284 = arith.addf %283, %282 : vector<32x128xf32>
    %285 = arith.divf %283, %284 : vector<32x128xf32>
    %286 = vector.extract_strided_slice %273 {offsets = [64, 0], sizes = [32, 128], strides = [1, 1]} : vector<128x128xf32> to vector<32x128xf32>
    %287 = math.tanh %286 : vector<32x128xf32>
    %288 = vector.extract_strided_slice %273 {offsets = [96, 0], sizes = [32, 128], strides = [1, 1]} : vector<128x128xf32> to vector<32x128xf32>
    %289 = arith.negf %288 : vector<32x128xf32>
    %290 = math.exp %289 : vector<32x128xf32>
    %cst_81 = arith.constant 1.000000e+00 : f32
    %291 = vector.broadcast %cst_81 : f32 to vector<32x128xf32>
    %292 = arith.addf %291, %290 : vector<32x128xf32>
    %293 = arith.divf %291, %292 : vector<32x128xf32>
    %294 = arith.mulf %285, %260 : vector<32x128xf32>
    %295 = arith.mulf %279, %287 : vector<32x128xf32>
    %296 = arith.addf %294, %295 : vector<32x128xf32>
    %297 = math.tanh %296 : vector<32x128xf32>
    %298 = arith.mulf %293, %297 : vector<32x128xf32>
    %c8_i32 = arith.constant 8 : i32
    %c0_82 = arith.constant 0 : index
    %c0_83 = arith.constant 0 : index
    %299 = vector.load %arg7[%c0_82, %c0_83] : memref<8x32xf32, #tpu.memory_space<vmem>>, vector<8x32xf32>
    %cst_84 = arith.constant dense<0.000000e+00> : vector<8x128xf32>
    %300 = tpu.matmul %299, %298, %cst_84 {dimension_numbers = #tpu.dot_dimension_numbers<[1], [0], [0], [1], [0, 0, 1, 1], [], []>} : vector<8x32xf32>, vector<32x128xf32>, vector<8x128xf32> -> vector<8x128xf32>
    %c0_85 = arith.constant 0 : index
    %c0_86 = arith.constant 0 : index
    %301 = vector.load %arg8[%c0_85, %c0_86] : memref<8x1xf32, #tpu.memory_space<vmem>>, vector<8x1xf32>
    %302 = vector.broadcast %301 : vector<8x1xf32> to vector<8x128xf32>
    %303 = arith.addf %300, %302 : vector<8x128xf32>
    %cst_87 = arith.constant dense<0xFF800000> : vector<128xf32>
    %304 = vector.multi_reduction <maximumf>, %303, %cst_87 [0] : vector<8x128xf32> to vector<128xf32>
    %305 = vector.shape_cast %304 : vector<128xf32> to vector<1x128xf32>
    %306 = vector.broadcast %305 : vector<1x128xf32> to vector<8x128xf32>
    %307 = arith.subf %303, %306 : vector<8x128xf32>
    %308 = math.exp %307 : vector<8x128xf32>
    %cst_88 = arith.constant dense<0.000000e+00> : vector<128xf32>
    %309 = vector.multi_reduction <add>, %308, %cst_88 [0] : vector<8x128xf32> to vector<128xf32>
    %310 = vector.shape_cast %309 : vector<128xf32> to vector<1x128xf32>
    %311 = vector.broadcast %310 : vector<1x128xf32> to vector<8x128xf32>
    %312 = arith.divf %308, %311 : vector<8x128xf32>
    %c0_89 = arith.constant 0 : index
    %c0_90 = arith.constant 0 : index
    %313 = vector.load %arg9[%c0_89, %c0_90] : memref<8x128xf32, #tpu.memory_space<vmem>>, vector<8x128xf32>
    tpu.vector_store %arg9[%c0_89, %c0_90], %312 {strides = array<i32>} : memref<8x128xf32, #tpu.memory_space<vmem>>, vector<8x128xf32>,
    return
  }
  func.func @transform_0(%arg0: i32) -> (i32, i32, i32) {
    %c0_i32 = arith.constant 0 : i32
    %c0_i32_0 = arith.constant 0 : i32
    %c0_i32_1 = arith.constant 0 : i32
    return %c0_i32, %c0_i32_0, %arg0 : i32, i32, i32
  }
  func.func @transform_1(%arg0: i32) -> (i32, i32) {
    %c0_i32 = arith.constant 0 : i32
    %c0_i32_0 = arith.constant 0 : i32
    %c0_i32_1 = arith.constant 0 : i32
    return %c0_i32, %c0_i32_0 : i32, i32
  }
  func.func @transform_2(%arg0: i32) -> (i32, i32) {
    %c0_i32 = arith.constant 0 : i32
    %c0_i32_0 = arith.constant 0 : i32
    %c0_i32_1 = arith.constant 0 : i32
    return %c0_i32, %c0_i32_0 : i32, i32
  }
  func.func @transform_3(%arg0: i32) -> (i32, i32) {
    %c0_i32 = arith.constant 0 : i32
    %c0_i32_0 = arith.constant 0 : i32
    %c0_i32_1 = arith.constant 0 : i32
    return %c0_i32, %c0_i32_0 : i32, i32
  }
  func.func @transform_4(%arg0: i32) -> (i32, i32) {
    %c0_i32 = arith.constant 0 : i32
    %c0_i32_0 = arith.constant 0 : i32
    %c0_i32_1 = arith.constant 0 : i32
    return %c0_i32, %c0_i32_0 : i32, i32
  }
  func.func @transform_5(%arg0: i32) -> (i32, i32) {
    %c0_i32 = arith.constant 0 : i32
    %c0_i32_0 = arith.constant 0 : i32
    %c0_i32_1 = arith.constant 0 : i32
    return %c0_i32, %c0_i32_0 : i32, i32
  }
  func.func @transform_6(%arg0: i32) -> (i32, i32) {
    %c0_i32 = arith.constant 0 : i32
    %c0_i32_0 = arith.constant 0 : i32
    %c0_i32_1 = arith.constant 0 : i32
    return %c0_i32, %c0_i32_0 : i32, i32
  }
  func.func @transform_7(%arg0: i32) -> (i32, i32) {
    %c0_i32 = arith.constant 0 : i32
    %c0_i32_0 = arith.constant 0 : i32
    %c0_i32_1 = arith.constant 0 : i32
    return %c0_i32, %c0_i32_0 : i32, i32
  }
  func.func @transform_8(%arg0: i32) -> (i32, i32) {
    %c0_i32 = arith.constant 0 : i32
    %c0_i32_0 = arith.constant 0 : i32
    return %c0_i32, %arg0 : i32, i32
  }
}

</mosaic_0001>

<llo_original>
// kernel: tpu_custom_call.1
$region0: #{tpu_custom_call.1}
  #allocation0 [shape = 'u32[]', space=smem, size = 0x4, offset = 0x4, fixed_abs, tag = 'smem constant byte address 0x4 - core index']
  #allocation1 [shape = 'u32[144,128]{1,0:T(1,128)}', space=vmem, size = 0x12000, scoped, tag = 'internal scratch']
  %s0 = inlined_call_operand.vmem [shape: f32[10,8,128], index: 0, kind: input, shape index: {}]
  %s1 = inlined_call_operand.vmem [shape: f32[64,24], index: 1, kind: input, shape index: {}]
  %s2 = inlined_call_operand.vmem [shape: f32[64,1], index: 2, kind: input, shape index: {}]
  %s3 = inlined_call_operand.vmem [shape: f32[128,64], index: 3, kind: input, shape index: {}]
  %s4 = inlined_call_operand.vmem [shape: f32[128,32], index: 4, kind: input, shape index: {}]
  %s5 = inlined_call_operand.vmem [shape: f32[128,1], index: 5, kind: input, shape index: {}]
  %s6 = inlined_call_operand.vmem [shape: f32[8,32], index: 6, kind: input, shape index: {}]
  %s7 = inlined_call_operand.vmem [shape: f32[8,1], index: 7, kind: input, shape index: {}]
  %s8 = inlined_call_operand.hbm [shape: f32[8,128], index: 8, kind: output, shape index: {}]
  %s9 = sld [smem:[#allocation0]]
  $region42: #{tpu_custom_call.1} parent=0
    _
  %s11 = ssub.s32 1, %s9
  %s12 = scalar_select 0, %s11, %s9
  $region1: #{tpu_custom_call.1} parent=0
    #allocation2 [shape = 'u8[4096]{0}', space=vmem, size = 0x1000, scoped, tag = 'output window, operand 0, single buffered']
    #allocation3 [shape = 's32[1]{0}', space=sflag, size = 0x4, scoped, tag = 'scoped memory for tpu_custom_call.1']
    %13 = vsyncpa [#allocation3], 0
    // Predicated region
    $region2: #{tpu_custom_call.1} parent=1 // pred_check
      _
    $region3: #{tpu_custom_call.1} parent=1 // pred_check_branch
      %15 = sbr.rel (0) target = $region5
    $region4: #{tpu_custom_call.1} parent=1 // pred_region
      _
    $region5: #{tpu_custom_call.1} parent=1 // pred_fallthru
      _
    // Predicated region
    $region6: #{tpu_custom_call.1} parent=1 // pred_check
      _
    $region7: #{tpu_custom_call.1} parent=1 // pred_check_branch
      %17 = sbr.rel (0) target = $region9
    $region8: #{tpu_custom_call.1} parent=1 // pred_region
      _
    $region9: #{tpu_custom_call.1} parent=1 // pred_fallthru
      _
    // Predicated region
    $region10: #{tpu_custom_call.1} parent=1 // pred_check
      _
    $region11: #{tpu_custom_call.1} parent=1 // pred_check_branch
      %19 = sbr.rel (0) target = $region13
    $region12: #{tpu_custom_call.1} parent=1 // pred_region
      _
    $region13: #{tpu_custom_call.1} parent=1 // pred_fallthru
      _
    // Predicated region
    $region14: #{tpu_custom_call.1} parent=1 // pred_check
      _
    $region15: #{tpu_custom_call.1} parent=1 // pred_check_branch
      %21 = sbr.rel (0) target = $region17
    $region16: #{tpu_custom_call.1} parent=1 // pred_region
      _
    $region17: #{tpu_custom_call.1} parent=1 // pred_fallthru
      _
    // Predicated region
    $region18: #{tpu_custom_call.1} parent=1 // pred_check
      _
    $region19: #{tpu_custom_call.1} parent=1 // pred_check_branch
      %23 = sbr.rel (0) target = $region21
    $region20: #{tpu_custom_call.1} parent=1 // pred_region
      _
    $region21: #{tpu_custom_call.1} parent=1 // pred_fallthru
      _
    // Predicated region
    $region22: #{tpu_custom_call.1} parent=1 // pred_check
      _
    $region23: #{tpu_custom_call.1} parent=1 // pred_check_branch
      %25 = sbr.rel (0) target = $region25
    $region24: #{tpu_custom_call.1} parent=1 // pred_region
      _
    $region25: #{tpu_custom_call.1} parent=1 // pred_fallthru
      _
    // Predicated region
    $region26: #{tpu_custom_call.1} parent=1 // pred_check
      _
    $region27: #{tpu_custom_call.1} parent=1 // pred_check_branch
      %27 = sbr.rel (0) target = $region29
    $region28: #{tpu_custom_call.1} parent=1 // pred_region
      _
    $region29: #{tpu_custom_call.1} parent=1 // pred_fallthru
      _
    // Predicated region
    $region30: #{tpu_custom_call.1} parent=1 // pred_check
      _
    $region31: #{tpu_custom_call.1} parent=1 // pred_check_branch
      %29 = sbr.rel (0) target = $region33
    $region32: #{tpu_custom_call.1} parent=1 // pred_region
      _
    $region33: #{tpu_custom_call.1} parent=1 // pred_fallthru
      _
    %v30 = vld [vmem:[%s1] sm:$0xff]
    %v31 = vld [vmem:[%s1 + $0x8] sm:$0xff]
    %v32 = vld [vmem:[%s1 + $0x10] sm:$0xff]
    %v33 = vld [vmem:[%s1 + $0x18] sm:$0xff]
    %v34 = vld [vmem:[%s1 + $0x20] sm:$0xff]
    %v35 = vld [vmem:[%s1 + $0x28] sm:$0xff]
    %v36 = vld [vmem:[%s1 + $0x30] sm:$0xff]
    %v37 = vld [vmem:[%s1 + $0x38] sm:$0xff]
    %v38 = vld [vmem:[%s3] sm:$0xff]
    %v39 = vld [vmem:[%s3 + $0x8] sm:$0xff]
    %v40 = vld [vmem:[%s3 + $0x10] sm:$0xff]
    %v41 = vld [vmem:[%s3 + $0x18] sm:$0xff]
    %v42 = vld [vmem:[%s3 + $0x20] sm:$0xff]
    %v43 = vld [vmem:[%s3 + $0x28] sm:$0xff]
    %v44 = vld [vmem:[%s3 + $0x30] sm:$0xff]
    %v45 = vld [vmem:[%s3 + $0x38] sm:$0xff]
    %v46 = vld [vmem:[%s3 + $0x40] sm:$0xff]
    %v47 = vld [vmem:[%s3 + $0x48] sm:$0xff]
    %v48 = vld [vmem:[%s3 + $0x50] sm:$0xff]
    %v49 = vld [vmem:[%s3 + $0x58] sm:$0xff]
    %v50 = vld [vmem:[%s3 + $0x60] sm:$0xff]
    %v51 = vld [vmem:[%s3 + $0x68] sm:$0xff]
    %v52 = vld [vmem:[%s3 + $0x70] sm:$0xff]
    %v53 = vld [vmem:[%s3 + $0x78] sm:$0xff]
    %v54 = vld [vmem:[%s4] sm:$0xff]
    %v55 = vld [vmem:[%s4 + $0x8] sm:$0xff]
    %v56 = vld [vmem:[%s4 + $0x10] sm:$0xff]
    %v57 = vld [vmem:[%s4 + $0x18] sm:$0xff]
    %v58 = vld [vmem:[%s4 + $0x20] sm:$0xff]
    %v59 = vld [vmem:[%s4 + $0x28] sm:$0xff]
    %v60 = vld [vmem:[%s4 + $0x30] sm:$0xff]
    %v61 = vld [vmem:[%s4 + $0x38] sm:$0xff]
    %v62 = vld [vmem:[%s4 + $0x40] sm:$0xff]
    %v63 = vld [vmem:[%s4 + $0x48] sm:$0xff]
    %v64 = vld [vmem:[%s4 + $0x50] sm:$0xff]
    %v65 = vld [vmem:[%s4 + $0x58] sm:$0xff]
    %v66 = vld [vmem:[%s4 + $0x60] sm:$0xff]
    %v67 = vld [vmem:[%s4 + $0x68] sm:$0xff]
    %v68 = vld [vmem:[%s4 + $0x70] sm:$0xff]
    %v69 = vld [vmem:[%s4 + $0x78] sm:$0xff]
    %v70 = vld [vmem:[%s2] sm:$0xff]
    %v71 = vld [vmem:[%s2 + $0x8] sm:$0xff]
    %v72 = vld [vmem:[%s2 + $0x10] sm:$0xff]
    %v73 = vld [vmem:[%s2 + $0x18] sm:$0xff]
    %v74 = vld [vmem:[%s2 + $0x20] sm:$0xff]
    %v75 = vld [vmem:[%s2 + $0x28] sm:$0xff]
    %v76 = vld [vmem:[%s2 + $0x30] sm:$0xff]
    %v77 = vld [vmem:[%s2 + $0x38] sm:$0xff]
    %79 = vset.pattern.permute.xlu0 0
    %80 = vperm.xlu0 %79, %v70
    %v81 = vpop.permute.xlu0 %80
    %84 = vset.pattern.permute.xlu0 0
    %85 = vperm.xlu0 %84, %v71
    %v86 = vpop.permute.xlu0 %85
    %89 = vset.pattern.permute.xlu0 0
    %90 = vperm.xlu0 %89, %v72
    %v91 = vpop.permute.xlu0 %90
    %94 = vset.pattern.permute.xlu0 0
    %95 = vperm.xlu0 %94, %v73
    %v96 = vpop.permute.xlu0 %95
    %99 = vset.pattern.permute.xlu0 0
    %100 = vperm.xlu0 %99, %v74
    %v101 = vpop.permute.xlu0 %100
    %104 = vset.pattern.permute.xlu0 0
    %105 = vperm.xlu0 %104, %v75
    %v106 = vpop.permute.xlu0 %105
    %109 = vset.pattern.permute.xlu0 0
    %110 = vperm.xlu0 %109, %v76
    %v111 = vpop.permute.xlu0 %110
    %114 = vset.pattern.permute.xlu0 0
    %115 = vperm.xlu0 %114, %v77
    %v116 = vpop.permute.xlu0 %115
    %v118 = vld [vmem:[%s5] sm:$0xff]
    %v119 = vld [vmem:[%s5 + $0x8] sm:$0xff]
    %v120 = vld [vmem:[%s5 + $0x10] sm:$0xff]
    %v121 = vld [vmem:[%s5 + $0x18] sm:$0xff]
    %v122 = vld [vmem:[%s5 + $0x20] sm:$0xff]
    %v123 = vld [vmem:[%s5 + $0x28] sm:$0xff]
    %v124 = vld [vmem:[%s5 + $0x30] sm:$0xff]
    %v125 = vld [vmem:[%s5 + $0x38] sm:$0xff]
    %v126 = vld [vmem:[%s5 + $0x40] sm:$0xff]
    %v127 = vld [vmem:[%s5 + $0x48] sm:$0xff]
    %v128 = vld [vmem:[%s5 + $0x50] sm:$0xff]
    %v129 = vld [vmem:[%s5 + $0x58] sm:$0xff]
    %v130 = vld [vmem:[%s5 + $0x60] sm:$0xff]
    %v131 = vld [vmem:[%s5 + $0x68] sm:$0xff]
    %v132 = vld [vmem:[%s5 + $0x70] sm:$0xff]
    %v133 = vld [vmem:[%s5 + $0x78] sm:$0xff]
    %135 = vset.pattern.permute.xlu0 0
    %136 = vperm.xlu0 %135, %v118
    %v137 = vpop.permute.xlu0 %136
    %140 = vset.pattern.permute.xlu0 0
    %141 = vperm.xlu0 %140, %v119
    %v142 = vpop.permute.xlu0 %141
    %145 = vset.pattern.permute.xlu0 0
    %146 = vperm.xlu0 %145, %v120
    %v147 = vpop.permute.xlu0 %146
    %150 = vset.pattern.permute.xlu0 0
    %151 = vperm.xlu0 %150, %v121
    %v152 = vpop.permute.xlu0 %151
    %155 = vset.pattern.permute.xlu0 0
    %156 = vperm.xlu0 %155, %v122
    %v157 = vpop.permute.xlu0 %156
    %160 = vset.pattern.permute.xlu0 0
    %161 = vperm.xlu0 %160, %v123
    %v162 = vpop.permute.xlu0 %161
    %165 = vset.pattern.permute.xlu0 0
    %166 = vperm.xlu0 %165, %v124
    %v167 = vpop.permute.xlu0 %166
    %170 = vset.pattern.permute.xlu0 0
    %171 = vperm.xlu0 %170, %v125
    %v172 = vpop.permute.xlu0 %171
    %175 = vset.pattern.permute.xlu0 0
    %176 = vperm.xlu0 %175, %v126
    %v177 = vpop.permute.xlu0 %176
    %180 = vset.pattern.permute.xlu0 0
    %181 = vperm.xlu0 %180, %v127
    %v182 = vpop.permute.xlu0 %181
    %185 = vset.pattern.permute.xlu0 0
    %186 = vperm.xlu0 %185, %v128
    %v187 = vpop.permute.xlu0 %186
    %190 = vset.pattern.permute.xlu0 0
    %191 = vperm.xlu0 %190, %v129
    %v192 = vpop.permute.xlu0 %191
    %195 = vset.pattern.permute.xlu0 0
    %196 = vperm.xlu0 %195, %v130
    %v197 = vpop.permute.xlu0 %196
    %200 = vset.pattern.permute.xlu0 0
    %201 = vperm.xlu0 %200, %v131
    %v202 = vpop.permute.xlu0 %201
    %205 = vset.pattern.permute.xlu0 0
    %206 = vperm.xlu0 %205, %v132
    %v207 = vpop.permute.xlu0 %206
    %210 = vset.pattern.permute.xlu0 0
    %211 = vperm.xlu0 %210, %v133
    %v212 = vpop.permute.xlu0 %211
    %v214 = vld [vmem:[%s0] sm:$0xff]
    %v215 = vld [vmem:[%s0 + $0x8] sm:$0xff]
    %v216 = vld [vmem:[%s0 + $0x10] sm:$0xff]
    %vm217 = vcmask 195584
    %v219 = vsel %vm217, %v30, 0
    %v222 = vsel %vm217, %v31, 0
    %v225 = vsel %vm217, %v32, 0
    %v228 = vsel %vm217, %v33, 0
    %v231 = vsel %vm217, %v34, 0
    %v234 = vsel %vm217, %v35, 0
    %v237 = vsel %vm217, %v36, 0
    %v240 = vsel %vm217, %v37, 0
    %242 = vmatprep.subr.mxu0 0.0
    %243 = vmatpush1.msra.mxu0 %v214
    %244 = vmatprep.subr.mxu0 0.0
    %245 = vmatpush1.msra.mxu0 %v215
    %246 = vmatprep.subr.mxu0 0.0
    %247 = vmatpush1.msra.mxu0 %v216
    %248 = vmatprep.subr.mxu0 0.0
    %249 = vmatpush1.msra.mxu0 0.0
    %250 = vmatprep.subr.mxu0 0.0
    %251 = vmatpush1.msra.mxu0 0.0
    %252 = vmatprep.subr.mxu0 0.0
    %253 = vmatpush1.msra.mxu0 0.0
    %254 = vmatprep.subr.mxu0 0.0
    %255 = vmatpush1.msra.mxu0 0.0
    %256 = vmatprep.subr.mxu0 0.0
    %257 = vmatpush1.msra.mxu0 0.0
    %258 = vmatprep.subr.mxu0 0.0
    %259 = vmatpush1.msra.mxu0 0.0
    %260 = vmatprep.subr.mxu0 0.0
    %261 = vmatpush1.msra.mxu0 0.0
    %262 = vmatprep.subr.mxu0 0.0
    %263 = vmatpush1.msra.mxu0 0.0
    %264 = vmatprep.subr.mxu0 0.0
    %265 = vmatpush1.msra.mxu0 0.0
    %266 = vmatprep.subr.mxu0 0.0
    %267 = vmatpush1.msra.mxu0 0.0
    %268 = vmatprep.subr.mxu0 0.0
    %269 = vmatpush1.msra.mxu0 0.0
    %270 = vmatprep.subr.mxu0 0.0
    %271 = vmatpush1.msra.mxu0 0.0
    %272 = vmatprep.subr.mxu0 0.0
    %273 = vmatpush1.msra.mxu0 0.0
    %274 = vmatprep.subr.mxu0 0.0
    %275 = vmatpush1.msra.mxu0 0.0
    %276 = vmatprep.subr.mxu0 0.0
    %277 = vmatpush1.msra.mxu0 0.0
    %278 = vmatprep.subr.mxu0 0.0
    %279 = vmatpush1.msra.mxu0 0.0
    %280 = vmatprep.subr.mxu0 0.0
    %281 = vmatpush1.msra.mxu0 0.0
    %282 = vmatprep.subr.mxu0 0.0
    %283 = vmatpush1.msra.mxu0 0.0
    %284 = vmatprep.subr.mxu0 0.0
    %285 = vmatpush1.msra.mxu0 0.0
    %286 = vmatprep.subr.mxu0 0.0
    %287 = vmatpush1.msra.mxu0 0.0
    %288 = vmatprep.subr.mxu0 0.0
    %289 = vmatpush1.msra.mxu0 0.0
    %290 = vmatprep.subr.mxu0 0.0
    %291 = vmatpush1.msra.mxu0 0.0
    %292 = vmatprep.subr.mxu0 0.0
    %293 = vmatpush1.msra.mxu0 0.0
    %294 = vmatprep.subr.mxu0 0.0
    %295 = vmatpush1.msra.mxu0 0.0
    %296 = vmatprep.subr.mxu0 0.0
    %297 = vmatpush1.msra.mxu0 0.0
    %298 = vmatprep.subr.mxu0 0.0
    %299 = vmatpush1.msra.mxu0 0.0
    %300 = vmatprep.subr.mxu0 0.0
    %301 = vmatpush1.msra.mxu0 0.0
    %302 = vmatprep.subr.mxu0 0.0
    %303 = vmatpush1.msra.mxu0 0.0
    %304 = vmatprep.subr.mxu0 0.0
    %305 = vmatpush1.msra.mxu0 0.0
    %306 = vmatprep.mubr.f32.mxu0 0.0
    %307 = vmatmul.mubr.f32.gmra.mrb[0].mxu0 %v219
    %v308 = vpop.f32.mrb[0].mxu0
    %v309 = vadd.f32 %v81, %v308
    %v310 = vpop.f32.mrb[0].mxu0
    %311 = vmatprep.mubr.f32.mxu0 0.0
    %312 = vmatmul.mubr.f32.gmra.mrb[0].mxu0 %v222
    %v313 = vpop.f32.mrb[0].mxu0
    %v314 = vadd.f32 %v86, %v313
    %v315 = vpop.f32.mrb[0].mxu0
    %316 = vmatprep.mubr.f32.mxu0 0.0
    %317 = vmatmul.mubr.f32.gmra.mrb[0].mxu0 %v225
    %v318 = vpop.f32.mrb[0].mxu0
    %v319 = vadd.f32 %v91, %v318
    %v320 = vpop.f32.mrb[0].mxu0
    %321 = vmatprep.mubr.f32.mxu0 0.0
    %322 = vmatmul.mubr.f32.gmra.mrb[0].mxu0 %v228
    %v323 = vpop.f32.mrb[0].mxu0
    %v324 = vadd.f32 %v96, %v323
    %v325 = vpop.f32.mrb[0].mxu0
    %326 = vmatprep.mubr.f32.mxu0 0.0
    %327 = vmatmul.mubr.f32.gmra.mrb[0].mxu0 %v231
    %v328 = vpop.f32.mrb[0].mxu0
    %v329 = vadd.f32 %v101, %v328
    %v330 = vpop.f32.mrb[0].mxu0
    %331 = vmatprep.mubr.f32.mxu0 0.0
    %332 = vmatmul.mubr.f32.gmra.mrb[0].mxu0 %v234
    %v333 = vpop.f32.mrb[0].mxu0
    %v334 = vadd.f32 %v106, %v333
    %v335 = vpop.f32.mrb[0].mxu0
    %336 = vmatprep.mubr.f32.mxu0 0.0
    %337 = vmatmul.mubr.f32.gmra.mrb[0].mxu0 %v237
    %v338 = vpop.f32.mrb[0].mxu0
    %v339 = vadd.f32 %v111, %v338
    %v340 = vpop.f32.mrb[0].mxu0
    %341 = vmatprep.mubr.f32.mxu0 0.0
    %342 = vmatmul.mubr.f32.gmra.mrb[0].mxu0 %v240
    %v343 = vpop.f32.mrb[0].mxu0
    %v344 = vadd.f32 %v116, %v343
    %v345 = vpop.f32.mrb[0].mxu0
    %346 = vdwg.mxu0
    %v347 = vmax.f32 %v309, 0.0
    %v348 = vmax.f32 %v314, 0.0
    %v349 = vmax.f32 %v319, 0.0
    %v350 = vmax.f32 %v324, 0.0
    %v351 = vmax.f32 %v329, 0.0
    %v352 = vmax.f32 %v334, 0.0
    %v353 = vmax.f32 %v339, 0.0
    %v354 = vmax.f32 %v344, 0.0
    %vm355 = vcmask 523264
    %v357 = vsel %vm355, %v38, 0
    %v360 = vsel %vm355, %v39, 0
    %v363 = vsel %vm355, %v40, 0
    %v366 = vsel %vm355, %v41, 0
    %v369 = vsel %vm355, %v42, 0
    %v372 = vsel %vm355, %v43, 0
    %v375 = vsel %vm355, %v44, 0
    %v378 = vsel %vm355, %v45, 0
    %v381 = vsel %vm355, %v46, 0
    %v384 = vsel %vm355, %v47, 0
    %v387 = vsel %vm355, %v48, 0
    %v390 = vsel %vm355, %v49, 0
    %v393 = vsel %vm355, %v50, 0
    %v396 = vsel %vm355, %v51, 0
    %v399 = vsel %vm355, %v52, 0
    %v402 = vsel %vm355, %v53, 0
    %404 = vmatprep.subr.mxu0 0.0
    %405 = vmatpush1.msra.mxu0 %v347
    %406 = vmatprep.subr.mxu0 0.0
    %407 = vmatpush1.msra.mxu0 %v348
    %408 = vmatprep.subr.mxu0 0.0
    %409 = vmatpush1.msra.mxu0 %v349
    %410 = vmatprep.subr.mxu0 0.0
    %411 = vmatpush1.msra.mxu0 %v350
    %412 = vmatprep.subr.mxu0 0.0
    %413 = vmatpush1.msra.mxu0 %v351
    %414 = vmatprep.subr.mxu0 0.0
    %415 = vmatpush1.msra.mxu0 %v352
    %416 = vmatprep.subr.mxu0 0.0
    %417 = vmatpush1.msra.mxu0 %v353
    %418 = vmatprep.subr.mxu0 0.0
    %419 = vmatpush1.msra.mxu0 %v354
    %420 = vmatprep.subr.mxu0 0.0
    %421 = vmatpush1.msra.mxu0 0.0
    %422 = vmatprep.subr.mxu0 0.0
    %423 = vmatpush1.msra.mxu0 0.0
    %424 = vmatprep.subr.mxu0 0.0
    %425 = vmatpush1.msra.mxu0 0.0
    %426 = vmatprep.subr.mxu0 0.0
    %427 = vmatpush1.msra.mxu0 0.0
    %428 = vmatprep.subr.mxu0 0.0
    %429 = vmatpush1.msra.mxu0 0.0
    %430 = vmatprep.subr.mxu0 0.0
    %431 = vmatpush1.msra.mxu0 0.0
    %432 = vmatprep.subr.mxu0 0.0
    %433 = vmatpush1.msra.mxu0 0.0
    %434 = vmatprep.subr.mxu0 0.0
    %435 = vmatpush1.msra.mxu0 0.0
    %436 = vmatprep.subr.mxu0 0.0
    %437 = vmatpush1.msra.mxu0 0.0
    %438 = vmatprep.subr.mxu0 0.0
    %439 = vmatpush1.msra.mxu0 0.0
    %440 = vmatprep.subr.mxu0 0.0
    %441 = vmatpush1.msra.mxu0 0.0
    %442 = vmatprep.subr.mxu0 0.0
    %443 = vmatpush1.msra.mxu0 0.0
    %444 = vmatprep.subr.mxu0 0.0
    %445 = vmatpush1.msra.mxu0 0.0
    %446 = vmatprep.subr.mxu0 0.0
    %447 = vmatpush1.msra.mxu0 0.0
    %448 = vmatprep.subr.mxu0 0.0
    %449 = vmatpush1.msra.mxu0 0.0
    %450 = vmatprep.subr.mxu0 0.0
    %451 = vmatpush1.msra.mxu0 0.0
    %452 = vmatprep.subr.mxu0 0.0
    %453 = vmatpush1.msra.mxu0 0.0
    %454 = vmatprep.subr.mxu0 0.0
    %455 = vmatpush1.msra.mxu0 0.0
    %456 = vmatprep.subr.mxu0 0.0
    %457 = vmatpush1.msra.mxu0 0.0
    %458 = vmatprep.subr.mxu0 0.0
    %459 = vmatpush1.msra.mxu0 0.0
    %460 = vmatprep.subr.mxu0 0.0
    %461 = vmatpush1.msra.mxu0 0.0
    %462 = vmatprep.subr.mxu0 0.0
    %463 = vmatpush1.msra.mxu0 0.0
    %464 = vmatprep.subr.mxu0 0.0
    %465 = vmatpush1.msra.mxu0 0.0
    %466 = vmatprep.subr.mxu0 0.0
    %467 = vmatpush1.msra.mxu0 0.0
    %468 = vmatprep.mubr.f32.mxu0 0.0
    %469 = vmatmul.mubr.f32.gmra.mrb[0].mxu0 %v357
    %v470 = vpop.f32.mrb[0].mxu0
    %v471 = vadd.f32 %v137, %v470
    %v472 = vpop.f32.mrb[0].mxu0
    %473 = vmatprep.mubr.f32.mxu0 0.0
    %474 = vmatmul.mubr.f32.gmra.mrb[0].mxu0 %v360
    %v475 = vpop.f32.mrb[0].mxu0
    %v476 = vadd.f32 %v142, %v475
    %v477 = vpop.f32.mrb[0].mxu0
    %478 = vmatprep.mubr.f32.mxu0 0.0
    %479 = vmatmul.mubr.f32.gmra.mrb[0].mxu0 %v363
    %v480 = vpop.f32.mrb[0].mxu0
    %v481 = vadd.f32 %v147, %v480
    %v482 = vpop.f32.mrb[0].mxu0
    %483 = vmatprep.mubr.f32.mxu0 0.0
    %484 = vmatmul.mubr.f32.gmra.mrb[0].mxu0 %v366
    %v485 = vpop.f32.mrb[0].mxu0
    %v486 = vadd.f32 %v152, %v485
    %v487 = vpop.f32.mrb[0].mxu0
    %488 = vmatprep.mubr.f32.mxu0 0.0
    %489 = vmatmul.mubr.f32.gmra.mrb[0].mxu0 %v369
    %v490 = vpop.f32.mrb[0].mxu0
    %v491 = vadd.f32 %v157, %v490
    %v492 = vpop.f32.mrb[0].mxu0
    %493 = vmatprep.mubr.f32.mxu0 0.0
    %494 = vmatmul.mubr.f32.gmra.mrb[0].mxu0 %v372
    %v495 = vpop.f32.mrb[0].mxu0
    %v496 = vadd.f32 %v162, %v495
    %v497 = vpop.f32.mrb[0].mxu0
    %498 = vmatprep.mubr.f32.mxu0 0.0
    %499 = vmatmul.mubr.f32.gmra.mrb[0].mxu0 %v375
    %v500 = vpop.f32.mrb[0].mxu0
    %v501 = vadd.f32 %v167, %v500
    %v502 = vpop.f32.mrb[0].mxu0
    %503 = vmatprep.mubr.f32.mxu0 0.0
    %504 = vmatmul.mubr.f32.gmra.mrb[0].mxu0 %v378
    %v505 = vpop.f32.mrb[0].mxu0
    %v506 = vadd.f32 %v172, %v505
    %v507 = vpop.f32.mrb[0].mxu0
    %508 = vmatprep.mubr.f32.mxu0 0.0
    %509 = vmatmul.mubr.f32.gmra.mrb[0].mxu0 %v381
    %v510 = vpop.f32.mrb[0].mxu0
    %v511 = vadd.f32 %v177, %v510
    %v512 = vpop.f32.mrb[0].mxu0
    %513 = vmatprep.mubr.f32.mxu0 0.0
    %514 = vmatmul.mubr.f32.gmra.mrb[0].mxu0 %v384
    %v515 = vpop.f32.mrb[0].mxu0
    %v516 = vadd.f32 %v182, %v515
    %v517 = vpop.f32.mrb[0].mxu0
    %518 = vmatprep.mubr.f32.mxu0 0.0
    %519 = vmatmul.mubr.f32.gmra.mrb[0].mxu0 %v387
    %v520 = vpop.f32.mrb[0].mxu0
    %v521 = vadd.f32 %v187, %v520
    %v522 = vpop.f32.mrb[0].mxu0
    %523 = vmatprep.mubr.f32.mxu0 0.0
    %524 = vmatmul.mubr.f32.gmra.mrb[0].mxu0 %v390
    %v525 = vpop.f32.mrb[0].mxu0
    %v526 = vadd.f32 %v192, %v525
    %v527 = vpop.f32.mrb[0].mxu0
    %528 = vmatprep.mubr.f32.mxu0 0.0
    %529 = vmatmul.mubr.f32.gmra.mrb[0].mxu0 %v393
    %v530 = vpop.f32.mrb[0].mxu0
    %v531 = vadd.f32 %v197, %v530
    %v532 = vpop.f32.mrb[0].mxu0
    %533 = vmatprep.mubr.f32.mxu0 0.0
    %534 = vmatmul.mubr.f32.gmra.mrb[0].mxu0 %v396
    %v535 = vpop.f32.mrb[0].mxu0
    %v536 = vadd.f32 %v202, %v535
    %v537 = vpop.f32.mrb[0].mxu0
    %538 = vmatprep.mubr.f32.mxu0 0.0
    %539 = vmatmul.mubr.f32.gmra.mrb[0].mxu0 %v399
    %v540 = vpop.f32.mrb[0].mxu0
    %v541 = vadd.f32 %v207, %v540
    %v542 = vpop.f32.mrb[0].mxu0
    %543 = vmatprep.mubr.f32.mxu0 0.0
    %544 = vmatmul.mubr.f32.gmra.mrb[0].mxu0 %v402
    %v545 = vpop.f32.mrb[0].mxu0
    %v546 = vadd.f32 %v212, %v545
    %v547 = vpop.f32.mrb[0].mxu0
    %548 = vdwg.mxu0
    %vm549 = vcmask 261120
    %v551 = vsel %vm549, %v54, 0
    %v554 = vsel %vm549, %v55, 0
    %v557 = vsel %vm549, %v56, 0
    %v560 = vsel %vm549, %v57, 0
    %v563 = vsel %vm549, %v58, 0
    %v566 = vsel %vm549, %v59, 0
    %v569 = vsel %vm549, %v60, 0
    %v572 = vsel %vm549, %v61, 0
    %v575 = vsel %vm549, %v62, 0
    %v578 = vsel %vm549, %v63, 0
    %v581 = vsel %vm549, %v64, 0
    %v584 = vsel %vm549, %v65, 0
    %v587 = vsel %vm549, %v66, 0
    %v590 = vsel %vm549, %v67, 0
    %v593 = vsel %vm549, %v68, 0
    %v596 = vsel %vm549, %v69, 0
    %598 = vmatprep.subr.mxu0 0.0
    %599 = vmatpush1.msra.mxu0 0.0
    %600 = vmatprep.subr.mxu0 0.0
    %601 = vmatpush1.msra.mxu0 0.0
    %602 = vmatprep.subr.mxu0 0.0
    %603 = vmatpush1.msra.mxu0 0.0
    %604 = vmatprep.subr.mxu0 0.0
    %605 = vmatpush1.msra.mxu0 0.0
    %606 = vmatprep.subr.mxu0 0.0
    %607 = vmatpush1.msra.mxu0 0.0
    %608 = vmatprep.subr.mxu0 0.0
    %609 = vmatpush1.msra.mxu0 0.0
    %610 = vmatprep.subr.mxu0 0.0
    %611 = vmatpush1.msra.mxu0 0.0
    %612 = vmatprep.subr.mxu0 0.0
    %613 = vmatpush1.msra.mxu0 0.0
    %614 = vmatprep.subr.mxu0 0.0
    %615 = vmatpush1.msra.mxu0 0.0
    %616 = vmatprep.subr.mxu0 0.0
    %617 = vmatpush1.msra.mxu0 0.0
    %618 = vmatprep.subr.mxu0 0.0
    %619 = vmatpush1.msra.mxu0 0.0
    %620 = vmatprep.subr.mxu0 0.0
    %621 = vmatpush1.msra.mxu0 0.0
    %622 = vmatprep.subr.mxu0 0.0
    %623 = vmatpush1.msra.mxu0 0.0
    %624 = vmatprep.subr.mxu0 0.0
    %625 = vmatpush1.msra.mxu0 0.0
    %626 = vmatprep.subr.mxu0 0.0
    %627 = vmatpush1.msra.mxu0 0.0
    %628 = vmatprep.subr.mxu0 0.0
    %629 = vmatpush1.msra.mxu0 0.0
    %630 = vmatprep.subr.mxu0 0.0
    %631 = vmatpush1.msra.mxu0 0.0
    %632 = vmatprep.subr.mxu0 0.0
    %633 = vmatpush1.msra.mxu0 0.0
    %634 = vmatprep.subr.mxu0 0.0
    %635 = vmatpush1.msra.mxu0 0.0
    %636 = vmatprep.subr.mxu0 0.0
    %637 = vmatpush1.msra.mxu0 0.0
    %638 = vmatprep.subr.mxu0 0.0
    %639 = vmatpush1.msra.mxu0 0.0
    %640 = vmatprep.subr.mxu0 0.0
    %641 = vmatpush1.msra.mxu0 0.0
    %642 = vmatprep.subr.mxu0 0.0
    %643 = vmatpush1.msra.mxu0 0.0
    %644 = vmatprep.subr.mxu0 0.0
    %645 = vmatpush1.msra.mxu0 0.0
    %646 = vmatprep.subr.mxu0 0.0
    %647 = vmatpush1.msra.mxu0 0.0
    %648 = vmatprep.subr.mxu0 0.0
    %649 = vmatpush1.msra.mxu0 0.0
    %650 = vmatprep.subr.mxu0 0.0
    %651 = vmatpush1.msra.mxu0 0.0
    %652 = vmatprep.subr.mxu0 0.0
    %653 = vmatpush1.msra.mxu0 0.0
    %654 = vmatprep.subr.mxu0 0.0
    %655 = vmatpush1.msra.mxu0 0.0
    %656 = vmatprep.subr.mxu0 0.0
    %657 = vmatpush1.msra.mxu0 0.0
    %658 = vmatprep.subr.mxu0 0.0
    %659 = vmatpush1.msra.mxu0 0.0
    %660 = vmatprep.subr.mxu0 0.0
    %661 = vmatpush1.msra.mxu0 0.0
    %662 = vmatprep.mubr.f32.mxu0 0.0
    %663 = vmatmul.mubr.f32.gmra.mrb[0].mxu0 %v551
    %v664 = vpop.f32.mrb[0].mxu0
    %v665 = vadd.f32 0.0, %v664
    %v666 = vpop.f32.mrb[0].mxu0
    %667 = vmatprep.mubr.f32.mxu0 0.0
    %668 = vmatmul.mubr.f32.gmra.mrb[0].mxu0 %v554
    %v669 = vpop.f32.mrb[0].mxu0
    %v670 = vadd.f32 0.0, %v669
    %v671 = vpop.f32.mrb[0].mxu0
    %672 = vmatprep.mubr.f32.mxu0 0.0
    %673 = vmatmul.mubr.f32.gmra.mrb[0].mxu0 %v557
    %v674 = vpop.f32.mrb[0].mxu0
    %v675 = vadd.f32 0.0, %v674
    %v676 = vpop.f32.mrb[0].mxu0
    %677 = vmatprep.mubr.f32.mxu0 0.0
    %678 = vmatmul.mubr.f32.gmra.mrb[0].mxu0 %v560
    %v679 = vpop.f32.mrb[0].mxu0
    %v680 = vadd.f32 0.0, %v679
    %v681 = vpop.f32.mrb[0].mxu0
    %682 = vmatprep.mubr.f32.mxu0 0.0
    %683 = vmatmul.mubr.f32.gmra.mrb[0].mxu0 %v563
    %v684 = vpop.f32.mrb[0].mxu0
    %v685 = vadd.f32 0.0, %v684
    %v686 = vpop.f32.mrb[0].mxu0
    %687 = vmatprep.mubr.f32.mxu0 0.0
    %688 = vmatmul.mubr.f32.gmra.mrb[0].mxu0 %v566
    %v689 = vpop.f32.mrb[0].mxu0
    %v690 = vadd.f32 0.0, %v689
    %v691 = vpop.f32.mrb[0].mxu0
    %692 = vmatprep.mubr.f32.mxu0 0.0
    %693 = vmatmul.mubr.f32.gmra.mrb[0].mxu0 %v569
    %v694 = vpop.f32.mrb[0].mxu0
    %v695 = vadd.f32 0.0, %v694
    %v696 = vpop.f32.mrb[0].mxu0
    %697 = vmatprep.mubr.f32.mxu0 0.0
    %698 = vmatmul.mubr.f32.gmra.mrb[0].mxu0 %v572
    %v699 = vpop.f32.mrb[0].mxu0
    %v700 = vadd.f32 0.0, %v699
    %v701 = vpop.f32.mrb[0].mxu0
    %702 = vmatprep.mubr.f32.mxu0 0.0
    %703 = vmatmul.mubr.f32.gmra.mrb[0].mxu0 %v575
    %v704 = vpop.f32.mrb[0].mxu0
    %v705 = vadd.f32 0.0, %v704
    %v706 = vpop.f32.mrb[0].mxu0
    %707 = vmatprep.mubr.f32.mxu0 0.0
    %708 = vmatmul.mubr.f32.gmra.mrb[0].mxu0 %v578
    %v709 = vpop.f32.mrb[0].mxu0
    %v710 = vadd.f32 0.0, %v709
    %v711 = vpop.f32.mrb[0].mxu0
    %712 = vmatprep.mubr.f32.mxu0 0.0
    %713 = vmatmul.mubr.f32.gmra.mrb[0].mxu0 %v581
    %v714 = vpop.f32.mrb[0].mxu0
    %v715 = vadd.f32 0.0, %v714
    %v716 = vpop.f32.mrb[0].mxu0
    %717 = vmatprep.mubr.f32.mxu0 0.0
    %718 = vmatmul.mubr.f32.gmra.mrb[0].mxu0 %v584
    %v719 = vpop.f32.mrb[0].mxu0
    %v720 = vadd.f32 0.0, %v719
    %v721 = vpop.f32.mrb[0].mxu0
    %722 = vmatprep.mubr.f32.mxu0 0.0
    %723 = vmatmul.mubr.f32.gmra.mrb[0].mxu0 %v587
    %v724 = vpop.f32.mrb[0].mxu0
    %v725 = vadd.f32 0.0, %v724
    %v726 = vpop.f32.mrb[0].mxu0
    %727 = vmatprep.mubr.f32.mxu0 0.0
    %728 = vmatmul.mubr.f32.gmra.mrb[0].mxu0 %v590
    %v729 = vpop.f32.mrb[0].mxu0
    %v730 = vadd.f32 0.0, %v729
    %v731 = vpop.f32.mrb[0].mxu0
    %732 = vmatprep.mubr.f32.mxu0 0.0
    %733 = vmatmul.mubr.f32.gmra.mrb[0].mxu0 %v593
    %v734 = vpop.f32.mrb[0].mxu0
    %v735 = vadd.f32 0.0, %v734
    %v736 = vpop.f32.mrb[0].mxu0
    %737 = vmatprep.mubr.f32.mxu0 0.0
    %738 = vmatmul.mubr.f32.gmra.mrb[0].mxu0 %v596
    %v739 = vpop.f32.mrb[0].mxu0
    %v740 = vadd.f32 0.0, %v739
    %v741 = vpop.f32.mrb[0].mxu0
    %742 = vdwg.mxu0
    %v743 = vadd.f32 %v471, %v665
    %v744 = vadd.f32 %v476, %v670
    %v745 = vadd.f32 %v481, %v675
    %v746 = vadd.f32 %v486, %v680
    %v747 = vadd.f32 %v491, %v685
    %v748 = vadd.f32 %v496, %v690
    %v749 = vadd.f32 %v501, %v695
    %v750 = vadd.f32 %v506, %v700
    %v751 = vadd.f32 %v511, %v705
    %v752 = vadd.f32 %v516, %v710
    %v753 = vadd.f32 %v521, %v715
    %v754 = vadd.f32 %v526, %v720
    %v755 = vadd.f32 %v531, %v725
    %v756 = vadd.f32 %v536, %v730
    %v757 = vadd.f32 %v541, %v735
    %v758 = vadd.f32 %v546, %v740
    %v759 = vxor.u32 %v743, 2147483648
    %v760 = vxor.u32 %v744, 2147483648
    %v761 = vxor.u32 %v745, 2147483648
    %v762 = vxor.u32 %v746, 2147483648
    %v763 = vmul.f32 %v759, 1.442695
    %v764 = vpow.pop %v763
    %v765 = vmul.f32 %v760, 1.442695
    %v766 = vpow.pop %v765
    %v767 = vmul.f32 %v761, 1.442695
    %v768 = vpow.pop %v767
    %v769 = vmul.f32 %v762, 1.442695
    %v770 = vpow.pop %v769
    %v771 = vadd.f32 %v764, 1.0
    %v772 = vadd.f32 %v766, 1.0
    %v773 = vadd.f32 %v768, 1.0
    %v774 = vadd.f32 %v770, 1.0
    %v775 = vrcp.pop %v771
    %v776 = vmul.f32 1.0, %v775
    %v777 = vrcp.pop %v772
    %v778 = vmul.f32 1.0, %v777
    %v779 = vrcp.pop %v773
    %v780 = vmul.f32 1.0, %v779
    %v781 = vrcp.pop %v774
    %v782 = vmul.f32 1.0, %v781
    %v783 = vxor.u32 %v747, 2147483648
    %v784 = vxor.u32 %v748, 2147483648
    %v785 = vxor.u32 %v749, 2147483648
    %v786 = vxor.u32 %v750, 2147483648
    %v787 = vmul.f32 %v783, 1.442695
    %v788 = vpow.pop %v787
    %v789 = vmul.f32 %v784, 1.442695
    %v790 = vpow.pop %v789
    %v791 = vmul.f32 %v785, 1.442695
    %v792 = vpow.pop %v791
    %v793 = vmul.f32 %v786, 1.442695
    %v794 = vpow.pop %v793
    %v795 = vadd.f32 %v788, 1.0
    %v796 = vadd.f32 %v790, 1.0
    %v797 = vadd.f32 %v792, 1.0
    %v798 = vadd.f32 %v794, 1.0
    %v799 = vrcp.pop %v795
    %v800 = vmul.f32 1.0, %v799
    %v801 = vrcp.pop %v796
    %v802 = vmul.f32 1.0, %v801
    %v803 = vrcp.pop %v797
    %v804 = vmul.f32 1.0, %v803
    %v805 = vrcp.pop %v798
    %v806 = vmul.f32 1.0, %v805
    %v807 = vtanh.pop %v751
    %v808 = vtanh.pop %v752
    %v809 = vtanh.pop %v753
    %v810 = vtanh.pop %v754
    %v811 = vxor.u32 %v755, 2147483648
    %v812 = vxor.u32 %v756, 2147483648
    %v813 = vxor.u32 %v757, 2147483648
    %v814 = vxor.u32 %v758, 2147483648
    %v815 = vmul.f32 %v811, 1.442695
    %v816 = vpow.pop %v815
    %v817 = vmul.f32 %v812, 1.442695
    %v818 = vpow.pop %v817
    %v819 = vmul.f32 %v813, 1.442695
    %v820 = vpow.pop %v819
    %v821 = vmul.f32 %v814, 1.442695
    %v822 = vpow.pop %v821
    %v823 = vadd.f32 %v816, 1.0
    %v824 = vadd.f32 %v818, 1.0
    %v825 = vadd.f32 %v820, 1.0
    %v826 = vadd.f32 %v822, 1.0
    %v827 = vrcp.pop %v823
    %v828 = vmul.f32 1.0, %v827
    %v829 = vrcp.pop %v824
    %v830 = vmul.f32 1.0, %v829
    %v831 = vrcp.pop %v825
    %v832 = vmul.f32 1.0, %v831
    %v833 = vrcp.pop %v826
    %v834 = vmul.f32 1.0, %v833
    %v835 = vmul.f32 %v800, 0.0
    %v836 = vmul.f32 %v802, 0.0
    %v837 = vmul.f32 %v804, 0.0
    %v838 = vmul.f32 %v806, 0.0
    %v839 = vmul.f32 %v776, %v807
    %v840 = vmul.f32 %v778, %v808
    %v841 = vmul.f32 %v780, %v809
    %v842 = vmul.f32 %v782, %v810
    %v843 = vadd.f32 %v835, %v839
    %v844 = vadd.f32 %v836, %v840
    %v845 = vadd.f32 %v837, %v841
    %v846 = vadd.f32 %v838, %v842
    %v847 = vtanh.pop %v843
    %v848 = vtanh.pop %v844
    %v849 = vtanh.pop %v845
    %v850 = vtanh.pop %v846
    %v851 = vmul.f32 %v828, %v847
    %v852 = vmul.f32 %v830, %v848
    %v853 = vmul.f32 %v832, %v849
    %v854 = vmul.f32 %v834, %v850
    %s855 = scalar_lea.vmem %s0, 8
    %v856 = vld [vmem:[%s855] sm:$0xff]
    %v857 = vld [vmem:[%s855 + $0x8] sm:$0xff]
    %v858 = vld [vmem:[%s855 + $0x10] sm:$0xff]
    %859 = vmatprep.subr.mxu0 0.0
    %860 = vmatpush1.msra.mxu0 %v856
    %861 = vmatprep.subr.mxu0 0.0
    %862 = vmatpush1.msra.mxu0 %v857
    %863 = vmatprep.subr.mxu0 0.0
    %864 = vmatpush1.msra.mxu0 %v858
    %865 = vmatprep.subr.mxu0 0.0
    %866 = vmatpush1.msra.mxu0 0.0
    %867 = vmatprep.subr.mxu0 0.0
    %868 = vmatpush1.msra.mxu0 0.0
    %869 = vmatprep.subr.mxu0 0.0
    %870 = vmatpush1.msra.mxu0 0.0
    %871 = vmatprep.subr.mxu0 0.0
    %872 = vmatpush1.msra.mxu0 0.0
    %873 = vmatprep.subr.mxu0 0.0
    %874 = vmatpush1.msra.mxu0 0.0
    %875 = vmatprep.subr.mxu0 0.0
    %876 = vmatpush1.msra.mxu0 0.0
    %877 = vmatprep.subr.mxu0 0.0
    %878 = vmatpush1.msra.mxu0 0.0
    %879 = vmatprep.subr.mxu0 0.0
    %880 = vmatpush1.msra.mxu0 0.0
    %881 = vmatprep.subr.mxu0 0.0
    %882 = vmatpush1.msra.mxu0 0.0
    %883 = vmatprep.subr.mxu0 0.0
    %884 = vmatpush1.msra.mxu0 0.0
    %885 = vmatprep.subr.mxu0 0.0
    %886 = vmatpush1.msra.mxu0 0.0
    %887 = vmatprep.subr.mxu0 0.0
    %888 = vmatpush1.msra.mxu0 0.0
    %889 = vmatprep.subr.mxu0 0.0
    %890 = vmatpush1.msra.mxu0 0.0
    %891 = vmatprep.subr.mxu0 0.0
    %892 = vmatpush1.msra.mxu0 0.0
    %893 = vmatprep.subr.mxu0 0.0
    %894 = vmatpush1.msra.mxu0 0.0
    %895 = vmatprep.subr.mxu0 0.0
    %896 = vmatpush1.msra.mxu0 0.0
    %897 = vmatprep.subr.mxu0 0.0
    %898 = vmatpush1.msra.mxu0 0.0
    %899 = vmatprep.subr.mxu0 0.0
    %900 = vmatpush1.msra.mxu0 0.0
    %901 = vmatprep.subr.mxu0 0.0
    %902 = vmatpush1.msra.mxu0 0.0
    %903 = vmatprep.subr.mxu0 0.0
    %904 = vmatpush1.msra.mxu0 0.0
    %905 = vmatprep.subr.mxu0 0.0
    %906 = vmatpush1.msra.mxu0 0.0
    %907 = vmatprep.subr.mxu0 0.0
    %908 = vmatpush1.msra.mxu0 0.0
    %909 = vmatprep.subr.mxu0 0.0
    %910 = vmatpush1.msra.mxu0 0.0
    %911 = vmatprep.subr.mxu0 0.0
    %912 = vmatpush1.msra.mxu0 0.0
    %913 = vmatprep.subr.mxu0 0.0
    %914 = vmatpush1.msra.mxu0 0.0
    %915 = vmatprep.subr.mxu0 0.0
    %916 = vmatpush1.msra.mxu0 0.0
    %917 = vmatprep.subr.mxu0 0.0
    %918 = vmatpush1.msra.mxu0 0.0
    %919 = vmatprep.subr.mxu0 0.0
    %920 = vmatpush1.msra.mxu0 0.0
    %921 = vmatprep.subr.mxu0 0.0
    %922 = vmatpush1.msra.mxu0 0.0
    %923 = vmatprep.mubr.f32.mxu0 0.0
    %924 = vmatmul.mubr.f32.gmra.mrb[0].mxu0 %v219
    %v925 = vpop.f32.mrb[0].mxu0
    %v926 = vadd.f32 %v81, %v925
    %v927 = vpop.f32.mrb[0].mxu0
    %928 = vmatprep.mubr.f32.mxu0 0.0
    %929 = vmatmul.mubr.f32.gmra.mrb[0].mxu0 %v222
    %v930 = vpop.f32.mrb[0].mxu0
    %v931 = vadd.f32 %v86, %v930
    %v932 = vpop.f32.mrb[0].mxu0
    %933 = vmatprep.mubr.f32.mxu0 0.0
    %934 = vmatmul.mubr.f32.gmra.mrb[0].mxu0 %v225
    %v935 = vpop.f32.mrb[0].mxu0
    %v936 = vadd.f32 %v91, %v935
    %v937 = vpop.f32.mrb[0].mxu0
    %938 = vmatprep.mubr.f32.mxu0 0.0
    %939 = vmatmul.mubr.f32.gmra.mrb[0].mxu0 %v228
    %v940 = vpop.f32.mrb[0].mxu0
    %v941 = vadd.f32 %v96, %v940
    %v942 = vpop.f32.mrb[0].mxu0
    %943 = vmatprep.mubr.f32.mxu0 0.0
    %944 = vmatmul.mubr.f32.gmra.mrb[0].mxu0 %v231
    %v945 = vpop.f32.mrb[0].mxu0
    %v946 = vadd.f32 %v101, %v945
    %v947 = vpop.f32.mrb[0].mxu0
    %948 = vmatprep.mubr.f32.mxu0 0.0
    %949 = vmatmul.mubr.f32.gmra.mrb[0].mxu0 %v234
    %v950 = vpop.f32.mrb[0].mxu0
    %v951 = vadd.f32 %v106, %v950
    %v952 = vpop.f32.mrb[0].mxu0
    %953 = vmatprep.mubr.f32.mxu0 0.0
    %954 = vmatmul.mubr.f32.gmra.mrb[0].mxu0 %v237
    %v955 = vpop.f32.mrb[0].mxu0
    %v956 = vadd.f32 %v111, %v955
    %v957 = vpop.f32.mrb[0].mxu0
    %958 = vmatprep.mubr.f32.mxu0 0.0
    %959 = vmatmul.mubr.f32.gmra.mrb[0].mxu0 %v240
    %v960 = vpop.f32.mrb[0].mxu0
    %v961 = vadd.f32 %v116, %v960
    %v962 = vpop.f32.mrb[0].mxu0
    %963 = vdwg.mxu0
    %v964 = vmax.f32 %v926, 0.0
    %v965 = vmax.f32 %v931, 0.0
    %v966 = vmax.f32 %v936, 0.0
    %v967 = vmax.f32 %v941, 0.0
    %v968 = vmax.f32 %v946, 0.0
    %v969 = vmax.f32 %v951, 0.0
    %v970 = vmax.f32 %v956, 0.0
    %v971 = vmax.f32 %v961, 0.0
    %972 = vmatprep.subr.mxu0 0.0
    %973 = vmatpush1.msra.mxu0 %v964
    %974 = vmatprep.subr.mxu0 0.0
    %975 = vmatpush1.msra.mxu0 %v965
    %976 = vmatprep.subr.mxu0 0.0
    %977 = vmatpush1.msra.mxu0 %v966
    %978 = vmatprep.subr.mxu0 0.0
    %979 = vmatpush1.msra.mxu0 %v967
    %980 = vmatprep.subr.mxu0 0.0
    %981 = vmatpush1.msra.mxu0 %v968
    %982 = vmatprep.subr.mxu0 0.0
    %983 = vmatpush1.msra.mxu0 %v969
    %984 = vmatprep.subr.mxu0 0.0
    %985 = vmatpush1.msra.mxu0 %v970
    %986 = vmatprep.subr.mxu0 0.0
    %987 = vmatpush1.msra.mxu0 %v971
    %988 = vmatprep.subr.mxu0 0.0
    %989 = vmatpush1.msra.mxu0 0.0
    %990 = vmatprep.subr.mxu0 0.0
    %991 = vmatpush1.msra.mxu0 0.0
    %992 = vmatprep.subr.mxu0 0.0
    %993 = vmatpush1.msra.mxu0 0.0
    %994 = vmatprep.subr.mxu0 0.0
    %995 = vmatpush1.msra.mxu0 0.0
    %996 = vmatprep.subr.mxu0 0.0
    %997 = vmatpush1.msra.mxu0 0.0
    %998 = vmatprep.subr.mxu0 0.0
    %999 = vmatpush1.msra.mxu0 0.0
    %1000 = vmatprep.subr.mxu0 0.0
    %1001 = vmatpush1.msra.mxu0 0.0
    %1002 = vmatprep.subr.mxu0 0.0
    %1003 = vmatpush1.msra.mxu0 0.0
    %1004 = vmatprep.subr.mxu0 0.0
    %1005 = vmatpush1.msra.mxu0 0.0
    %1006 = vmatprep.subr.mxu0 0.0
    %1007 = vmatpush1.msra.mxu0 0.0
    %1008 = vmatprep.subr.mxu0 0.0
    %1009 = vmatpush1.msra.mxu0 0.0
    %1010 = vmatprep.subr.mxu0 0.0
    %1011 = vmatpush1.msra.mxu0 0.0
    %1012 = vmatprep.subr.mxu0 0.0
    %1013 = vmatpush1.msra.mxu0 0.0
    %1014 = vmatprep.subr.mxu0 0.0
    %1015 = vmatpush1.msra.mxu0 0.0
    %1016 = vmatprep.subr.mxu0 0.0
    %1017 = vmatpush1.msra.mxu0 0.0
    %1018 = vmatprep.subr.mxu0 0.0
    %1019 = vmatpush1.msra.mxu0 0.0
    %1020 = vmatprep.subr.mxu0 0.0
    %1021 = vmatpush1.msra.mxu0 0.0
    %1022 = vmatprep.subr.mxu0 0.0
    %1023 = vmatpush1.msra.mxu0 0.0
    %1024 = vmatprep.subr.mxu0 0.0
    %1025 = vmatpush1.msra.mxu0 0.0
    %1026 = vmatprep.subr.mxu0 0.0
    %1027 = vmatpush1.msra.mxu0 0.0
    %1028 = vmatprep.subr.mxu0 0.0
    %1029 = vmatpush1.msra.mxu0 0.0
    %1030 = vmatprep.subr.mxu0 0.0
    %1031 = vmatpush1.msra.mxu0 0.0
    %1032 = vmatprep.subr.mxu0 0.0
    %1033 = vmatpush1.msra.mxu0 0.0
    %1034 = vmatprep.subr.mxu0 0.0
    %1035 = vmatpush1.msra.mxu0 0.0
    %1036 = vmatprep.mubr.f32.mxu0 0.0
    %1037 = vmatmul.mubr.f32.gmra.mrb[0].mxu0 %v357
    %v1038 = vpop.f32.mrb[0].mxu0
    %v1039 = vadd.f32 %v137, %v1038
    %v1040 = vpop.f32.mrb[0].mxu0
    %1041 = vmatprep.mubr.f32.mxu0 0.0
    %1042 = vmatmul.mubr.f32.gmra.mrb[0].mxu0 %v360
    %v1043 = vpop.f32.mrb[0].mxu0
    %v1044 = vadd.f32 %v142, %v1043
    %v1045 = vpop.f32.mrb[0].mxu0
    %1046 = vmatprep.mubr.f32.mxu0 0.0
    %1047 = vmatmul.mubr.f32.gmra.mrb[0].mxu0 %v363
    %v1048 = vpop.f32.mrb[0].mxu0
    %v1049 = vadd.f32 %v147, %v1048
    %v1050 = vpop.f32.mrb[0].mxu0
    %1051 = vmatprep.mubr.f32.mxu0 0.0
    %1052 = vmatmul.mubr.f32.gmra.mrb[0].mxu0 %v366
    %v1053 = vpop.f32.mrb[0].mxu0
    %v1054 = vadd.f32 %v152, %v1053
    %v1055 = vpop.f32.mrb[0].mxu0
    %1056 = vmatprep.mubr.f32.mxu0 0.0
    %1057 = vmatmul.mubr.f32.gmra.mrb[0].mxu0 %v369
    %v1058 = vpop.f32.mrb[0].mxu0
    %v1059 = vadd.f32 %v157, %v1058
    %v1060 = vpop.f32.mrb[0].mxu0
    %1061 = vmatprep.mubr.f32.mxu0 0.0
    %1062 = vmatmul.mubr.f32.gmra.mrb[0].mxu0 %v372
    %v1063 = vpop.f32.mrb[0].mxu0
    %v1064 = vadd.f32 %v162, %v1063
    %v1065 = vpop.f32.mrb[0].mxu0
    %1066 = vmatprep.mubr.f32.mxu0 0.0
    %1067 = vmatmul.mubr.f32.gmra.mrb[0].mxu0 %v375
    %v1068 = vpop.f32.mrb[0].mxu0
    %v1069 = vadd.f32 %v167, %v1068
    %v1070 = vpop.f32.mrb[0].mxu0
    %1071 = vmatprep.mubr.f32.mxu0 0.0
    %1072 = vmatmul.mubr.f32.gmra.mrb[0].mxu0 %v378
    %v1073 = vpop.f32.mrb[0].mxu0
    %v1074 = vadd.f32 %v172, %v1073
    %v1075 = vpop.f32.mrb[0].mxu0
    %1076 = vmatprep.mubr.f32.mxu0 0.0
    %1077 = vmatmul.mubr.f32.gmra.mrb[0].mxu0 %v381
    %v1078 = vpop.f32.mrb[0].mxu0
    %v1079 = vadd.f32 %v177, %v1078
    %v1080 = vpop.f32.mrb[0].mxu0
    %1081 = vmatprep.mubr.f32.mxu0 0.0
    %1082 = vmatmul.mubr.f32.gmra.mrb[0].mxu0 %v384
    %v1083 = vpop.f32.mrb[0].mxu0
    %v1084 = vadd.f32 %v182, %v1083
    %v1085 = vpop.f32.mrb[0].mxu0
    %1086 = vmatprep.mubr.f32.mxu0 0.0
    %1087 = vmatmul.mubr.f32.gmra.mrb[0].mxu0 %v387
    %v1088 = vpop.f32.mrb[0].mxu0
    %v1089 = vadd.f32 %v187, %v1088
    %v1090 = vpop.f32.mrb[0].mxu0
    %1091 = vmatprep.mubr.f32.mxu0 0.0
    %1092 = vmatmul.mubr.f32.gmra.mrb[0].mxu0 %v390
    %v1093 = vpop.f32.mrb[0].mxu0
    %v1094 = vadd.f32 %v192, %v1093
    %v1095 = vpop.f32.mrb[0].mxu0
    %1096 = vmatprep.mubr.f32.mxu0 0.0
    %1097 = vmatmul.mubr.f32.gmra.mrb[0].mxu0 %v393
    %v1098 = vpop.f32.mrb[0].mxu0
    %v1099 = vadd.f32 %v197, %v1098
    %v1100 = vpop.f32.mrb[0].mxu0
    %1101 = vmatprep.mubr.f32.mxu0 0.0
    %1102 = vmatmul.mubr.f32.gmra.mrb[0].mxu0 %v396
    %v1103 = vpop.f32.mrb[0].mxu0
    %v1104 = vadd.f32 %v202, %v1103
    %v1105 = vpop.f32.mrb[0].mxu0
    %1106 = vmatprep.mubr.f32.mxu0 0.0
    %1107 = vmatmul.mubr.f32.gmra.mrb[0].mxu0 %v399
    %v1108 = vpop.f32.mrb[0].mxu0
    %v1109 = vadd.f32 %v207, %v1108
    %v1110 = vpop.f32.mrb[0].mxu0
    %1111 = vmatprep.mubr.f32.mxu0 0.0
    %1112 = vmatmul.mubr.f32.gmra.mrb[0].mxu0 %v402
    %v1113 = vpop.f32.mrb[0].mxu0
    %v1114 = vadd.f32 %v212, %v1113
    %v1115 = vpop.f32.mrb[0].mxu0
    %1116 = vdwg.mxu0
    %1117 = vmatprep.subr.mxu0 0.0
    %1118 = vmatpush1.msra.mxu0 %v851
    %1119 = vmatprep.subr.mxu0 0.0
    %1120 = vmatpush1.msra.mxu0 %v852
    %1121 = vmatprep.subr.mxu0 0.0
    %1122 = vmatpush1.msra.mxu0 %v853
    %1123 = vmatprep.subr.mxu0 0.0
    %1124 = vmatpush1.msra.mxu0 %v854
    %1125 = vmatprep.subr.mxu0 0.0
    %1126 = vmatpush1.msra.mxu0 0.0
    %1127 = vmatprep.subr.mxu0 0.0
    %1128 = vmatpush1.msra.mxu0 0.0
    %1129 = vmatprep.subr.mxu0 0.0
    %1130 = vmatpush1.msra.mxu0 0.0
    %1131 = vmatprep.subr.mxu0 0.0
    %1132 = vmatpush1.msra.mxu0 0.0
    %1133 = vmatprep.subr.mxu0 0.0
    %1134 = vmatpush1.msra.mxu0 0.0
    %1135 = vmatprep.subr.mxu0 0.0
    %1136 = vmatpush1.msra.mxu0 0.0
    %1137 = vmatprep.subr.mxu0 0.0
    %1138 = vmatpush1.msra.mxu0 0.0
    %1139 = vmatprep.subr.mxu0 0.0
    %1140 = vmatpush1.msra.mxu0 0.0
    %1141 = vmatprep.subr.mxu0 0.0
    %1142 = vmatpush1.msra.mxu0 0.0
    %1143 = vmatprep.subr.mxu0 0.0
    %1144 = vmatpush1.msra.mxu0 0.0
    %1145 = vmatprep.subr.mxu0 0.0
    %1146 = vmatpush1.msra.mxu0 0.0
    %1147 = vmatprep.subr.mxu0 0.0
    %1148 = vmatpush1.msra.mxu0 0.0
    %1149 = vmatprep.subr.mxu0 0.0
    %1150 = vmatpush1.msra.mxu0 0.0
    %1151 = vmatprep.subr.mxu0 0.0
    %1152 = vmatpush1.msra.mxu0 0.0
    %1153 = vmatprep.subr.mxu0 0.0
    %1154 = vmatpush1.msra.mxu0 0.0
    %1155 = vmatprep.subr.mxu0 0.0
    %1156 = vmatpush1.msra.mxu0 0.0
    %1157 = vmatprep.subr.mxu0 0.0
    %1158 = vmatpush1.msra.mxu0 0.0
    %1159 = vmatprep.subr.mxu0 0.0
    %1160 = vmatpush1.msra.mxu0 0.0
    %1161 = vmatprep.subr.mxu0 0.0
    %1162 = vmatpush1.msra.mxu0 0.0
    %1163 = vmatprep.subr.mxu0 0.0
    %1164 = vmatpush1.msra.mxu0 0.0
    %1165 = vmatprep.subr.mxu0 0.0
    %1166 = vmatpush1.msra.mxu0 0.0
    %1167 = vmatprep.subr.mxu0 0.0
    %1168 = vmatpush1.msra.mxu0 0.0
    %1169 = vmatprep.subr.mxu0 0.0
    %1170 = vmatpush1.msra.mxu0 0.0
    %1171 = vmatprep.subr.mxu0 0.0
    %1172 = vmatpush1.msra.mxu0 0.0
    %1173 = vmatprep.subr.mxu0 0.0
    %1174 = vmatpush1.msra.mxu0 0.0
    %1175 = vmatprep.subr.mxu0 0.0
    %1176 = vmatpush1.msra.mxu0 0.0
    %1177 = vmatprep.subr.mxu0 0.0
    %1178 = vmatpush1.msra.mxu0 0.0
    %1179 = vmatprep.subr.mxu0 0.0
    %1180 = vmatpush1.msra.mxu0 0.0
    %1181 = vmatprep.mubr.f32.mxu0 0.0
    %1182 = vmatmul.mubr.f32.gmra.mrb[0].mxu0 %v551
    %v1183 = vpop.f32.mrb[0].mxu0
    %v1184 = vadd.f32 0.0, %v1183
    %v1185 = vpop.f32.mrb[0].mxu0
    %1186 = vmatprep.mubr.f32.mxu0 0.0
    %1187 = vmatmul.mubr.f32.gmra.mrb[0].mxu0 %v554
    %v1188 = vpop.f32.mrb[0].mxu0
    %v1189 = vadd.f32 0.0, %v1188
    %v1190 = vpop.f32.mrb[0].mxu0
    %1191 = vmatprep.mubr.f32.mxu0 0.0
    %1192 = vmatmul.mubr.f32.gmra.mrb[0].mxu0 %v557
    %v1193 = vpop.f32.mrb[0].mxu0
    %v1194 = vadd.f32 0.0, %v1193
    %v1195 = vpop.f32.mrb[0].mxu0
    %1196 = vmatprep.mubr.f32.mxu0 0.0
    %1197 = vmatmul.mubr.f32.gmra.mrb[0].mxu0 %v560
    %v1198 = vpop.f32.mrb[0].mxu0
    %v1199 = vadd.f32 0.0, %v1198
    %v1200 = vpop.f32.mrb[0].mxu0
    %1201 = vmatprep.mubr.f32.mxu0 0.0
    %1202 = vmatmul.mubr.f32.gmra.mrb[0].mxu0 %v563
    %v1203 = vpop.f32.mrb[0].mxu0
    %v1204 = vadd.f32 0.0, %v1203
    %v1205 = vpop.f32.mrb[0].mxu0
    %1206 = vmatprep.mubr.f32.mxu0 0.0
    %1207 = vmatmul.mubr.f32.gmra.mrb[0].mxu0 %v566
    %v1208 = vpop.f32.mrb[0].mxu0
    %v1209 = vadd.f32 0.0, %v1208
    %v1210 = vpop.f32.mrb[0].mxu0
    %1211 = vmatprep.mubr.f32.mxu0 0.0
    %1212 = vmatmul.mubr.f32.gmra.mrb[0].mxu0 %v569
    %v1213 = vpop.f32.mrb[0].mxu0
    %v1214 = vadd.f32 0.0, %v1213
    %v1215 = vpop.f32.mrb[0].mxu0
    %1216 = vmatprep.mubr.f32.mxu0 0.0
    %1217 = vmatmul.mubr.f32.gmra.mrb[0].mxu0 %v572
    %v1218 = vpop.f32.mrb[0].mxu0
    %v1219 = vadd.f32 0.0, %v1218
    %v1220 = vpop.f32.mrb[0].mxu0
    %1221 = vmatprep.mubr.f32.mxu0 0.0
    %1222 = vmatmul.mubr.f32.gmra.mrb[0].mxu0 %v575
    %v1223 = vpop.f32.mrb[0].mxu0
    %v1224 = vadd.f32 0.0, %v1223
    %v1225 = vpop.f32.mrb[0].mxu0
    %1226 = vmatprep.mubr.f32.mxu0 0.0
    %1227 = vmatmul.mubr.f32.gmra.mrb[0].mxu0 %v578
    %v1228 = vpop.f32.mrb[0].mxu0
    %v1229 = vadd.f32 0.0, %v1228
    %v1230 = vpop.f32.mrb[0].mxu0
    %1231 = vmatprep.mubr.f32.mxu0 0.0
    %1232 = vmatmul.mubr.f32.gmra.mrb[0].mxu0 %v581
    %v1233 = vpop.f32.mrb[0].mxu0
    %v1234 = vadd.f32 0.0, %v1233
    %v1235 = vpop.f32.mrb[0].mxu0
    %1236 = vmatprep.mubr.f32.mxu0 0.0
    %1237 = vmatmul.mubr.f32.gmra.mrb[0].mxu0 %v584
    %v1238 = vpop.f32.mrb[0].mxu0
    %v1239 = vadd.f32 0.0, %v1238
    %v1240 = vpop.f32.mrb[0].mxu0
    %1241 = vmatprep.mubr.f32.mxu0 0.0
    %1242 = vmatmul.mubr.f32.gmra.mrb[0].mxu0 %v587
    %v1243 = vpop.f32.mrb[0].mxu0
    %v1244 = vadd.f32 0.0, %v1243
    %v1245 = vpop.f32.mrb[0].mxu0
    %1246 = vmatprep.mubr.f32.mxu0 0.0
    %1247 = vmatmul.mubr.f32.gmra.mrb[0].mxu0 %v590
    %v1248 = vpop.f32.mrb[0].mxu0
    %v1249 = vadd.f32 0.0, %v1248
    %v1250 = vpop.f32.mrb[0].mxu0
    %1251 = vmatprep.mubr.f32.mxu0 0.0
    %1252 = vmatmul.mubr.f32.gmra.mrb[0].mxu0 %v593
    %v1253 = vpop.f32.mrb[0].mxu0
    %v1254 = vadd.f32 0.0, %v1253
    %v1255 = vpop.f32.mrb[0].mxu0
    %1256 = vmatprep.mubr.f32.mxu0 0.0
    %1257 = vmatmul.mubr.f32.gmra.mrb[0].mxu0 %v596
    %v1258 = vpop.f32.mrb[0].mxu0
    %v1259 = vadd.f32 0.0, %v1258
    %v1260 = vpop.f32.mrb[0].mxu0
    %1261 = vdwg.mxu0
    %v1262 = vadd.f32 %v1039, %v1184
    %v1263 = vadd.f32 %v1044, %v1189
    %v1264 = vadd.f32 %v1049, %v1194
    %v1265 = vadd.f32 %v1054, %v1199
    %v1266 = vadd.f32 %v1059, %v1204
    %v1267 = vadd.f32 %v1064, %v1209
    %v1268 = vadd.f32 %v1069, %v1214
    %v1269 = vadd.f32 %v1074, %v1219
    %v1270 = vadd.f32 %v1079, %v1224
    %v1271 = vadd.f32 %v1084, %v1229
    %v1272 = vadd.f32 %v1089, %v1234
    %v1273 = vadd.f32 %v1094, %v1239
    %v1274 = vadd.f32 %v1099, %v1244
    %v1275 = vadd.f32 %v1104, %v1249
    %v1276 = vadd.f32 %v1109, %v1254
    %v1277 = vadd.f32 %v1114, %v1259
    %v1278 = vxor.u32 %v1262, 2147483648
    %v1279 = vxor.u32 %v1263, 2147483648
    %v1280 = vxor.u32 %v1264, 2147483648
    %v1281 = vxor.u32 %v1265, 2147483648
    %v1282 = vmul.f32 %v1278, 1.442695
    %v1283 = vpow.pop %v1282
    %v1284 = vmul.f32 %v1279, 1.442695
    %v1285 = vpow.pop %v1284
    %v1286 = vmul.f32 %v1280, 1.442695
    %v1287 = vpow.pop %v1286
    %v1288 = vmul.f32 %v1281, 1.442695
    %v1289 = vpow.pop %v1288
    %v1290 = vadd.f32 %v1283, 1.0
    %v1291 = vadd.f32 %v1285, 1.0
    %v1292 = vadd.f32 %v1287, 1.0
    %v1293 = vadd.f32 %v1289, 1.0
    %v1294 = vrcp.pop %v1290
    %v1295 = vmul.f32 1.0, %v1294
    %v1296 = vrcp.pop %v1291
    %v1297 = vmul.f32 1.0, %v1296
    %v1298 = vrcp.pop %v1292
    %v1299 = vmul.f32 1.0, %v1298
    %v1300 = vrcp.pop %v1293
    %v1301 = vmul.f32 1.0, %v1300
    %v1302 = vxor.u32 %v1266, 2147483648
    %v1303 = vxor.u32 %v1267, 2147483648
    %v1304 = vxor.u32 %v1268, 2147483648
    %v1305 = vxor.u32 %v1269, 2147483648
    %v1306 = vmul.f32 %v1302, 1.442695
    %v1307 = vpow.pop %v1306
    %v1308 = vmul.f32 %v1303, 1.442695
    %v1309 = vpow.pop %v1308
    %v1310 = vmul.f32 %v1304, 1.442695
    %v1311 = vpow.pop %v1310
    %v1312 = vmul.f32 %v1305, 1.442695
    %v1313 = vpow.pop %v1312
    %v1314 = vadd.f32 %v1307, 1.0
    %v1315 = vadd.f32 %v1309, 1.0
    %v1316 = vadd.f32 %v1311, 1.0
    %v1317 = vadd.f32 %v1313, 1.0
    %v1318 = vrcp.pop %v1314
    %v1319 = vmul.f32 1.0, %v1318
    %v1320 = vrcp.pop %v1315
    %v1321 = vmul.f32 1.0, %v1320
    %v1322 = vrcp.pop %v1316
    %v1323 = vmul.f32 1.0, %v1322
    %v1324 = vrcp.pop %v1317
    %v1325 = vmul.f32 1.0, %v1324
    %v1326 = vtanh.pop %v1270
    %v1327 = vtanh.pop %v1271
    %v1328 = vtanh.pop %v1272
    %v1329 = vtanh.pop %v1273
    %v1330 = vxor.u32 %v1274, 2147483648
    %v1331 = vxor.u32 %v1275, 2147483648
    %v1332 = vxor.u32 %v1276, 2147483648
    %v1333 = vxor.u32 %v1277, 2147483648
    %v1334 = vmul.f32 %v1330, 1.442695
    %v1335 = vpow.pop %v1334
    %v1336 = vmul.f32 %v1331, 1.442695
    %v1337 = vpow.pop %v1336
    %v1338 = vmul.f32 %v1332, 1.442695
    %v1339 = vpow.pop %v1338
    %v1340 = vmul.f32 %v1333, 1.442695
    %v1341 = vpow.pop %v1340
    %v1342 = vadd.f32 %v1335, 1.0
    %v1343 = vadd.f32 %v1337, 1.0
    %v1344 = vadd.f32 %v1339, 1.0
    %v1345 = vadd.f32 %v1341, 1.0
    %v1346 = vrcp.pop %v1342
    %v1347 = vmul.f32 1.0, %v1346
    %v1348 = vrcp.pop %v1343
    %v1349 = vmul.f32 1.0, %v1348
    %v1350 = vrcp.pop %v1344
    %v1351 = vmul.f32 1.0, %v1350
    %v1352 = vrcp.pop %v1345
    %v1353 = vmul.f32 1.0, %v1352
    %v1354 = vmul.f32 %v1319, %v843
    %v1355 = vmul.f32 %v1321, %v844
    %v1356 = vmul.f32 %v1323, %v845
    %v1357 = vmul.f32 %v1325, %v846
    %v1358 = vmul.f32 %v1295, %v1326
    %v1359 = vmul.f32 %v1297, %v1327
    %v1360 = vmul.f32 %v1299, %v1328
    %v1361 = vmul.f32 %v1301, %v1329
    %v1362 = vadd.f32 %v1354, %v1358
    %v1363 = vadd.f32 %v1355, %v1359
    %v1364 = vadd.f32 %v1356, %v1360
    %v1365 = vadd.f32 %v1357, %v1361
    %v1366 = vtanh.pop %v1362
    %v1367 = vtanh.pop %v1363
    %v1368 = vtanh.pop %v1364
    %v1369 = vtanh.pop %v1365
    %v1370 = vmul.f32 %v1347, %v1366
    %v1371 = vmul.f32 %v1349, %v1367
    %v1372 = vmul.f32 %v1351, %v1368
    %v1373 = vmul.f32 %v1353, %v1369
    %s1374 = scalar_lea.vmem %s0, 16
    %v1375 = vld [vmem:[%s1374] sm:$0xff]
    %v1376 = vld [vmem:[%s1374 + $0x8] sm:$0xff]
    %v1377 = vld [vmem:[%s1374 + $0x10] sm:$0xff]
    %1378 = vmatprep.subr.mxu0 0.0
    %1379 = vmatpush1.msra.mxu0 %v1375
    %1380 = vmatprep.subr.mxu0 0.0
    %1381 = vmatpush1.msra.mxu0 %v1376
    %1382 = vmatprep.subr.mxu0 0.0
    %1383 = vmatpush1.msra.mxu0 %v1377
    %1384 = vmatprep.subr.mxu0 0.0
    %1385 = vmatpush1.msra.mxu0 0.0
    %1386 = vmatprep.subr.mxu0 0.0
    %1387 = vmatpush1.msra.mxu0 0.0
    %1388 = vmatprep.subr.mxu0 0.0
    %1389 = vmatpush1.msra.mxu0 0.0
    %1390 = vmatprep.subr.mxu0 0.0
    %1391 = vmatpush1.msra.mxu0 0.0
    %1392 = vmatprep.subr.mxu0 0.0
    %1393 = vmatpush1.msra.mxu0 0.0
    %1394 = vmatprep.subr.mxu0 0.0
    %1395 = vmatpush1.msra.mxu0 0.0
    %1396 = vmatprep.subr.mxu0 0.0
    %1397 = vmatpush1.msra.mxu0 0.0
    %1398 = vmatprep.subr.mxu0 0.0
    %1399 = vmatpush1.msra.mxu0 0.0
    %1400 = vmatprep.subr.mxu0 0.0
    %1401 = vmatpush1.msra.mxu0 0.0
    %1402 = vmatprep.subr.mxu0 0.0
    %1403 = vmatpush1.msra.mxu0 0.0
    %1404 = vmatprep.subr.mxu0 0.0
    %1405 = vmatpush1.msra.mxu0 0.0
    %1406 = vmatprep.subr.mxu0 0.0
    %1407 = vmatpush1.msra.mxu0 0.0
    %1408 = vmatprep.subr.mxu0 0.0
    %1409 = vmatpush1.msra.mxu0 0.0
    %1410 = vmatprep.subr.mxu0 0.0
    %1411 = vmatpush1.msra.mxu0 0.0
    %1412 = vmatprep.subr.mxu0 0.0
    %1413 = vmatpush1.msra.mxu0 0.0
    %1414 = vmatprep.subr.mxu0 0.0
    %1415 = vmatpush1.msra.mxu0 0.0
    %1416 = vmatprep.subr.mxu0 0.0
    %1417 = vmatpush1.msra.mxu0 0.0
    %1418 = vmatprep.subr.mxu0 0.0
    %1419 = vmatpush1.msra.mxu0 0.0
    %1420 = vmatprep.subr.mxu0 0.0
    %1421 = vmatpush1.msra.mxu0 0.0
    %1422 = vmatprep.subr.mxu0 0.0
    %1423 = vmatpush1.msra.mxu0 0.0
    %1424 = vmatprep.subr.mxu0 0.0
    %1425 = vmatpush1.msra.mxu0 0.0
    %1426 = vmatprep.subr.mxu0 0.0
    %1427 = vmatpush1.msra.mxu0 0.0
    %1428 = vmatprep.subr.mxu0 0.0
    %1429 = vmatpush1.msra.mxu0 0.0
    %1430 = vmatprep.subr.mxu0 0.0
    %1431 = vmatpush1.msra.mxu0 0.0
    %1432 = vmatprep.subr.mxu0 0.0
    %1433 = vmatpush1.msra.mxu0 0.0
    %1434 = vmatprep.subr.mxu0 0.0
    %1435 = vmatpush1.msra.mxu0 0.0
    %1436 = vmatprep.subr.mxu0 0.0
    %1437 = vmatpush1.msra.mxu0 0.0
    %1438 = vmatprep.subr.mxu0 0.0
    %1439 = vmatpush1.msra.mxu0 0.0
    %1440 = vmatprep.subr.mxu0 0.0
    %1441 = vmatpush1.msra.mxu0 0.0
    %1442 = vmatprep.mubr.f32.mxu0 0.0
    %1443 = vmatmul.mubr.f32.gmra.mrb[0].mxu0 %v219
    %v1444 = vpop.f32.mrb[0].mxu0
    %v1445 = vadd.f32 %v81, %v1444
    %v1446 = vpop.f32.mrb[0].mxu0
    %1447 = vmatprep.mubr.f32.mxu0 0.0
    %1448 = vmatmul.mubr.f32.gmra.mrb[0].mxu0 %v222
    %v1449 = vpop.f32.mrb[0].mxu0
    %v1450 = vadd.f32 %v86, %v1449
    %v1451 = vpop.f32.mrb[0].mxu0
    %1452 = vmatprep.mubr.f32.mxu0 0.0
    %1453 = vmatmul.mubr.f32.gmra.mrb[0].mxu0 %v225
    %v1454 = vpop.f32.mrb[0].mxu0
    %v1455 = vadd.f32 %v91, %v1454
    %v1456 = vpop.f32.mrb[0].mxu0
    %1457 = vmatprep.mubr.f32.mxu0 0.0
    %1458 = vmatmul.mubr.f32.gmra.mrb[0].mxu0 %v228
    %v1459 = vpop.f32.mrb[0].mxu0
    %v1460 = vadd.f32 %v96, %v1459
    %v1461 = vpop.f32.mrb[0].mxu0
    %1462 = vmatprep.mubr.f32.mxu0 0.0
    %1463 = vmatmul.mubr.f32.gmra.mrb[0].mxu0 %v231
    %v1464 = vpop.f32.mrb[0].mxu0
    %v1465 = vadd.f32 %v101, %v1464
    %v1466 = vpop.f32.mrb[0].mxu0
    %1467 = vmatprep.mubr.f32.mxu0 0.0
    %1468 = vmatmul.mubr.f32.gmra.mrb[0].mxu0 %v234
    %v1469 = vpop.f32.mrb[0].mxu0
    %v1470 = vadd.f32 %v106, %v1469
    %v1471 = vpop.f32.mrb[0].mxu0
    %1472 = vmatprep.mubr.f32.mxu0 0.0
    %1473 = vmatmul.mubr.f32.gmra.mrb[0].mxu0 %v237
    %v1474 = vpop.f32.mrb[0].mxu0
    %v1475 = vadd.f32 %v111, %v1474
    %v1476 = vpop.f32.mrb[0].mxu0
    %1477 = vmatprep.mubr.f32.mxu0 0.0
    %1478 = vmatmul.mubr.f32.gmra.mrb[0].mxu0 %v240
    %v1479 = vpop.f32.mrb[0].mxu0
    %v1480 = vadd.f32 %v116, %v1479
    %v1481 = vpop.f32.mrb[0].mxu0
    %1482 = vdwg.mxu0
    %v1483 = vmax.f32 %v1445, 0.0
    %v1484 = vmax.f32 %v1450, 0.0
    %v1485 = vmax.f32 %v1455, 0.0
    %v1486 = vmax.f32 %v1460, 0.0
    %v1487 = vmax.f32 %v1465, 0.0
    %v1488 = vmax.f32 %v1470, 0.0
    %v1489 = vmax.f32 %v1475, 0.0
    %v1490 = vmax.f32 %v1480, 0.0
    %1491 = vmatprep.subr.mxu0 0.0
    %1492 = vmatpush1.msra.mxu0 %v1483
    %1493 = vmatprep.subr.mxu0 0.0
    %1494 = vmatpush1.msra.mxu0 %v1484
    %1495 = vmatprep.subr.mxu0 0.0
    %1496 = vmatpush1.msra.mxu0 %v1485
    %1497 = vmatprep.subr.mxu0 0.0
    %1498 = vmatpush1.msra.mxu0 %v1486
    %1499 = vmatprep.subr.mxu0 0.0
    %1500 = vmatpush1.msra.mxu0 %v1487
    %1501 = vmatprep.subr.mxu0 0.0
    %1502 = vmatpush1.msra.mxu0 %v1488
    %1503 = vmatprep.subr.mxu0 0.0
    %1504 = vmatpush1.msra.mxu0 %v1489
    %1505 = vmatprep.subr.mxu0 0.0
    %1506 = vmatpush1.msra.mxu0 %v1490
    %1507 = vmatprep.subr.mxu0 0.0
    %1508 = vmatpush1.msra.mxu0 0.0
    %1509 = vmatprep.subr.mxu0 0.0
    %1510 = vmatpush1.msra.mxu0 0.0
    %1511 = vmatprep.subr.mxu0 0.0
    %1512 = vmatpush1.msra.mxu0 0.0
    %1513 = vmatprep.subr.mxu0 0.0
    %1514 = vmatpush1.msra.mxu0 0.0
    %1515 = vmatprep.subr.mxu0 0.0
    %1516 = vmatpush1.msra.mxu0 0.0
    %1517 = vmatprep.subr.mxu0 0.0
    %1518 = vmatpush1.msra.mxu0 0.0
    %1519 = vmatprep.subr.mxu0 0.0
    %1520 = vmatpush1.msra.mxu0 0.0
    %1521 = vmatprep.subr.mxu0 0.0
    %1522 = vmatpush1.msra.mxu0 0.0
    %1523 = vmatprep.subr.mxu0 0.0
    %1524 = vmatpush1.msra.mxu0 0.0
    %1525 = vmatprep.subr.mxu0 0.0
    %1526 = vmatpush1.msra.mxu0 0.0
    %1527 = vmatprep.subr.mxu0 0.0
    %1528 = vmatpush1.msra.mxu0 0.0
    %1529 = vmatprep.subr.mxu0 0.0
    %1530 = vmatpush1.msra.mxu0 0.0
    %1531 = vmatprep.subr.mxu0 0.0
    %1532 = vmatpush1.msra.mxu0 0.0
    %1533 = vmatprep.subr.mxu0 0.0
    %1534 = vmatpush1.msra.mxu0 0.0
    %1535 = vmatprep.subr.mxu0 0.0
    %1536 = vmatpush1.msra.mxu0 0.0
    %1537 = vmatprep.subr.mxu0 0.0
    %1538 = vmatpush1.msra.mxu0 0.0
    %1539 = vmatprep.subr.mxu0 0.0
    %1540 = vmatpush1.msra.mxu0 0.0
    %1541 = vmatprep.subr.mxu0 0.0
    %1542 = vmatpush1.msra.mxu0 0.0
    %1543 = vmatprep.subr.mxu0 0.0
    %1544 = vmatpush1.msra.mxu0 0.0
    %1545 = vmatprep.subr.mxu0 0.0
    %1546 = vmatpush1.msra.mxu0 0.0
    %1547 = vmatprep.subr.mxu0 0.0
    %1548 = vmatpush1.msra.mxu0 0.0
    %1549 = vmatprep.subr.mxu0 0.0
    %1550 = vmatpush1.msra.mxu0 0.0
    %1551 = vmatprep.subr.mxu0 0.0
    %1552 = vmatpush1.msra.mxu0 0.0
    %1553 = vmatprep.subr.mxu0 0.0
    %1554 = vmatpush1.msra.mxu0 0.0
    %1555 = vmatprep.mubr.f32.mxu0 0.0
    %1556 = vmatmul.mubr.f32.gmra.mrb[0].mxu0 %v357
    %v1557 = vpop.f32.mrb[0].mxu0
    %v1558 = vadd.f32 %v137, %v1557
    %v1559 = vpop.f32.mrb[0].mxu0
    %1560 = vmatprep.mubr.f32.mxu0 0.0
    %1561 = vmatmul.mubr.f32.gmra.mrb[0].mxu0 %v360
    %v1562 = vpop.f32.mrb[0].mxu0
    %v1563 = vadd.f32 %v142, %v1562
    %v1564 = vpop.f32.mrb[0].mxu0
    %1565 = vmatprep.mubr.f32.mxu0 0.0
    %1566 = vmatmul.mubr.f32.gmra.mrb[0].mxu0 %v363
    %v1567 = vpop.f32.mrb[0].mxu0
    %v1568 = vadd.f32 %v147, %v1567
    %v1569 = vpop.f32.mrb[0].mxu0
    %1570 = vmatprep.mubr.f32.mxu0 0.0
    %1571 = vmatmul.mubr.f32.gmra.mrb[0].mxu0 %v366
    %v1572 = vpop.f32.mrb[0].mxu0
    %v1573 = vadd.f32 %v152, %v1572
    %v1574 = vpop.f32.mrb[0].mxu0
    %1575 = vmatprep.mubr.f32.mxu0 0.0
    %1576 = vmatmul.mubr.f32.gmra.mrb[0].mxu0 %v369
    %v1577 = vpop.f32.mrb[0].mxu0
    %v1578 = vadd.f32 %v157, %v1577
    %v1579 = vpop.f32.mrb[0].mxu0
    %1580 = vmatprep.mubr.f32.mxu0 0.0
    %1581 = vmatmul.mubr.f32.gmra.mrb[0].mxu0 %v372
    %v1582 = vpop.f32.mrb[0].mxu0
    %v1583 = vadd.f32 %v162, %v1582
    %v1584 = vpop.f32.mrb[0].mxu0
    %1585 = vmatprep.mubr.f32.mxu0 0.0
    %1586 = vmatmul.mubr.f32.gmra.mrb[0].mxu0 %v375
    %v1587 = vpop.f32.mrb[0].mxu0
    %v1588 = vadd.f32 %v167, %v1587
    %v1589 = vpop.f32.mrb[0].mxu0
    %1590 = vmatprep.mubr.f32.mxu0 0.0
    %1591 = vmatmul.mubr.f32.gmra.mrb[0].mxu0 %v378
    %v1592 = vpop.f32.mrb[0].mxu0
    %v1593 = vadd.f32 %v172, %v1592
    %v1594 = vpop.f32.mrb[0].mxu0
    %1595 = vmatprep.mubr.f32.mxu0 0.0
    %1596 = vmatmul.mubr.f32.gmra.mrb[0].mxu0 %v381
    %v1597 = vpop.f32.mrb[0].mxu0
    %v1598 = vadd.f32 %v177, %v1597
    %v1599 = vpop.f32.mrb[0].mxu0
    %1600 = vmatprep.mubr.f32.mxu0 0.0
    %1601 = vmatmul.mubr.f32.gmra.mrb[0].mxu0 %v384
    %v1602 = vpop.f32.mrb[0].mxu0
    %v1603 = vadd.f32 %v182, %v1602
    %v1604 = vpop.f32.mrb[0].mxu0
    %1605 = vmatprep.mubr.f32.mxu0 0.0
    %1606 = vmatmul.mubr.f32.gmra.mrb[0].mxu0 %v387
    %v1607 = vpop.f32.mrb[0].mxu0
    %v1608 = vadd.f32 %v187, %v1607
    %v1609 = vpop.f32.mrb[0].mxu0
    %1610 = vmatprep.mubr.f32.mxu0 0.0
    %1611 = vmatmul.mubr.f32.gmra.mrb[0].mxu0 %v390
    %v1612 = vpop.f32.mrb[0].mxu0
    %v1613 = vadd.f32 %v192, %v1612
    %v1614 = vpop.f32.mrb[0].mxu0
    %1615 = vmatprep.mubr.f32.mxu0 0.0
    %1616 = vmatmul.mubr.f32.gmra.mrb[0].mxu0 %v393
    %v1617 = vpop.f32.mrb[0].mxu0
    %v1618 = vadd.f32 %v197, %v1617
    %v1619 = vpop.f32.mrb[0].mxu0
    %1620 = vmatprep.mubr.f32.mxu0 0.0
    %1621 = vmatmul.mubr.f32.gmra.mrb[0].mxu0 %v396
    %v1622 = vpop.f32.mrb[0].mxu0
    %v1623 = vadd.f32 %v202, %v1622
    %v1624 = vpop.f32.mrb[0].mxu0
    %1625 = vmatprep.mubr.f32.mxu0 0.0
    %1626 = vmatmul.mubr.f32.gmra.mrb[0].mxu0 %v399
    %v1627 = vpop.f32.mrb[0].mxu0
    %v1628 = vadd.f32 %v207, %v1627
    %v1629 = vpop.f32.mrb[0].mxu0
    %1630 = vmatprep.mubr.f32.mxu0 0.0
    %1631 = vmatmul.mubr.f32.gmra.mrb[0].mxu0 %v402
    %v1632 = vpop.f32.mrb[0].mxu0
    %v1633 = vadd.f32 %v212, %v1632
    %v1634 = vpop.f32.mrb[0].mxu0
    %1635 = vdwg.mxu0
    %1636 = vmatprep.subr.mxu0 0.0
    %1637 = vmatpush1.msra.mxu0 %v1370
    %1638 = vmatprep.subr.mxu0 0.0
    %1639 = vmatpush1.msra.mxu0 %v1371
    %1640 = vmatprep.subr.mxu0 0.0
    %1641 = vmatpush1.msra.mxu0 %v1372
    %1642 = vmatprep.subr.mxu0 0.0
    %1643 = vmatpush1.msra.mxu0 %v1373
    %1644 = vmatprep.subr.mxu0 0.0
    %1645 = vmatpush1.msra.mxu0 0.0
    %1646 = vmatprep.subr.mxu0 0.0
    %1647 = vmatpush1.msra.mxu0 0.0
    %1648 = vmatprep.subr.mxu0 0.0
    %1649 = vmatpush1.msra.mxu0 0.0
    %1650 = vmatprep.subr.mxu0 0.0
    %1651 = vmatpush1.msra.mxu0 0.0
    %1652 = vmatprep.subr.mxu0 0.0
    %1653 = vmatpush1.msra.mxu0 0.0
    %1654 = vmatprep.subr.mxu0 0.0
    %1655 = vmatpush1.msra.mxu0 0.0
    %1656 = vmatprep.subr.mxu0 0.0
    %1657 = vmatpush1.msra.mxu0 0.0
    %1658 = vmatprep.subr.mxu0 0.0
    %1659 = vmatpush1.msra.mxu0 0.0
    %1660 = vmatprep.subr.mxu0 0.0
    %1661 = vmatpush1.msra.mxu0 0.0
    %1662 = vmatprep.subr.mxu0 0.0
    %1663 = vmatpush1.msra.mxu0 0.0
    %1664 = vmatprep.subr.mxu0 0.0
    %1665 = vmatpush1.msra.mxu0 0.0
    %1666 = vmatprep.subr.mxu0 0.0
    %1667 = vmatpush1.msra.mxu0 0.0
    %1668 = vmatprep.subr.mxu0 0.0
    %1669 = vmatpush1.msra.mxu0 0.0
    %1670 = vmatprep.subr.mxu0 0.0
    %1671 = vmatpush1.msra.mxu0 0.0
    %1672 = vmatprep.subr.mxu0 0.0
    %1673 = vmatpush1.msra.mxu0 0.0
    %1674 = vmatprep.subr.mxu0 0.0
    %1675 = vmatpush1.msra.mxu0 0.0
    %1676 = vmatprep.subr.mxu0 0.0
    %1677 = vmatpush1.msra.mxu0 0.0
    %1678 = vmatprep.subr.mxu0 0.0
    %1679 = vmatpush1.msra.mxu0 0.0
    %1680 = vmatprep.subr.mxu0 0.0
    %1681 = vmatpush1.msra.mxu0 0.0
    %1682 = vmatprep.subr.mxu0 0.0
    %1683 = vmatpush1.msra.mxu0 0.0
    %1684 = vmatprep.subr.mxu0 0.0
    %1685 = vmatpush1.msra.mxu0 0.0
    %1686 = vmatprep.subr.mxu0 0.0
    %1687 = vmatpush1.msra.mxu0 0.0
    %1688 = vmatprep.subr.mxu0 0.0
    %1689 = vmatpush1.msra.mxu0 0.0
    %1690 = vmatprep.subr.mxu0 0.0
    %1691 = vmatpush1.msra.mxu0 0.0
    %1692 = vmatprep.subr.mxu0 0.0
    %1693 = vmatpush1.msra.mxu0 0.0
    %1694 = vmatprep.subr.mxu0 0.0
    %1695 = vmatpush1.msra.mxu0 0.0
    %1696 = vmatprep.subr.mxu0 0.0
    %1697 = vmatpush1.msra.mxu0 0.0
    %1698 = vmatprep.subr.mxu0 0.0
    %1699 = vmatpush1.msra.mxu0 0.0
    %1700 = vmatprep.mubr.f32.mxu0 0.0
    %1701 = vmatmul.mubr.f32.gmra.mrb[0].mxu0 %v551
    %v1702 = vpop.f32.mrb[0].mxu0
    %v1703 = vadd.f32 0.0, %v1702
    %v1704 = vpop.f32.mrb[0].mxu0
    %1705 = vmatprep.mubr.f32.mxu0 0.0
    %1706 = vmatmul.mubr.f32.gmra.mrb[0].mxu0 %v554
    %v1707 = vpop.f32.mrb[0].mxu0
    %v1708 = vadd.f32 0.0, %v1707
    %v1709 = vpop.f32.mrb[0].mxu0
    %1710 = vmatprep.mubr.f32.mxu0 0.0
    %1711 = vmatmul.mubr.f32.gmra.mrb[0].mxu0 %v557
    %v1712 = vpop.f32.mrb[0].mxu0
    %v1713 = vadd.f32 0.0, %v1712
    %v1714 = vpop.f32.mrb[0].mxu0
    %1715 = vmatprep.mubr.f32.mxu0 0.0
    %1716 = vmatmul.mubr.f32.gmra.mrb[0].mxu0 %v560
    %v1717 = vpop.f32.mrb[0].mxu0
    %v1718 = vadd.f32 0.0, %v1717
    %v1719 = vpop.f32.mrb[0].mxu0
    %1720 = vmatprep.mubr.f32.mxu0 0.0
    %1721 = vmatmul.mubr.f32.gmra.mrb[0].mxu0 %v563
    %v1722 = vpop.f32.mrb[0].mxu0
    %v1723 = vadd.f32 0.0, %v1722
    %v1724 = vpop.f32.mrb[0].mxu0
    %1725 = vmatprep.mubr.f32.mxu0 0.0
    %1726 = vmatmul.mubr.f32.gmra.mrb[0].mxu0 %v566
    %v1727 = vpop.f32.mrb[0].mxu0
    %v1728 = vadd.f32 0.0, %v1727
    %v1729 = vpop.f32.mrb[0].mxu0
    %1730 = vmatprep.mubr.f32.mxu0 0.0
    %1731 = vmatmul.mubr.f32.gmra.mrb[0].mxu0 %v569
    %v1732 = vpop.f32.mrb[0].mxu0
    %v1733 = vadd.f32 0.0, %v1732
    %v1734 = vpop.f32.mrb[0].mxu0
    %1735 = vmatprep.mubr.f32.mxu0 0.0
    %1736 = vmatmul.mubr.f32.gmra.mrb[0].mxu0 %v572
    %v1737 = vpop.f32.mrb[0].mxu0
    %v1738 = vadd.f32 0.0, %v1737
    %v1739 = vpop.f32.mrb[0].mxu0
    %1740 = vmatprep.mubr.f32.mxu0 0.0
    %1741 = vmatmul.mubr.f32.gmra.mrb[0].mxu0 %v575
    %v1742 = vpop.f32.mrb[0].mxu0
    %v1743 = vadd.f32 0.0, %v1742
    %v1744 = vpop.f32.mrb[0].mxu0
    %1745 = vmatprep.mubr.f32.mxu0 0.0
    %1746 = vmatmul.mubr.f32.gmra.mrb[0].mxu0 %v578
    %v1747 = vpop.f32.mrb[0].mxu0
    %v1748 = vadd.f32 0.0, %v1747
    %v1749 = vpop.f32.mrb[0].mxu0
    %1750 = vmatprep.mubr.f32.mxu0 0.0
    %1751 = vmatmul.mubr.f32.gmra.mrb[0].mxu0 %v581
    %v1752 = vpop.f32.mrb[0].mxu0
    %v1753 = vadd.f32 0.0, %v1752
    %v1754 = vpop.f32.mrb[0].mxu0
    %1755 = vmatprep.mubr.f32.mxu0 0.0
    %1756 = vmatmul.mubr.f32.gmra.mrb[0].mxu0 %v584
    %v1757 = vpop.f32.mrb[0].mxu0
    %v1758 = vadd.f32 0.0, %v1757
    %v1759 = vpop.f32.mrb[0].mxu0
    %1760 = vmatprep.mubr.f32.mxu0 0.0
    %1761 = vmatmul.mubr.f32.gmra.mrb[0].mxu0 %v587
    %v1762 = vpop.f32.mrb[0].mxu0
    %v1763 = vadd.f32 0.0, %v1762
    %v1764 = vpop.f32.mrb[0].mxu0
    %1765 = vmatprep.mubr.f32.mxu0 0.0
    %1766 = vmatmul.mubr.f32.gmra.mrb[0].mxu0 %v590
    %v1767 = vpop.f32.mrb[0].mxu0
    %v1768 = vadd.f32 0.0, %v1767
    %v1769 = vpop.f32.mrb[0].mxu0
    %1770 = vmatprep.mubr.f32.mxu0 0.0
    %1771 = vmatmul.mubr.f32.gmra.mrb[0].mxu0 %v593
    %v1772 = vpop.f32.mrb[0].mxu0
    %v1773 = vadd.f32 0.0, %v1772
    %v1774 = vpop.f32.mrb[0].mxu0
    %1775 = vmatprep.mubr.f32.mxu0 0.0
    %1776 = vmatmul.mubr.f32.gmra.mrb[0].mxu0 %v596
    %v1777 = vpop.f32.mrb[0].mxu0
    %v1778 = vadd.f32 0.0, %v1777
    %v1779 = vpop.f32.mrb[0].mxu0
    %1780 = vdwg.mxu0
    %v1781 = vadd.f32 %v1558, %v1703
    %v1782 = vadd.f32 %v1563, %v1708
    %v1783 = vadd.f32 %v1568, %v1713
    %v1784 = vadd.f32 %v1573, %v1718
    %v1785 = vadd.f32 %v1578, %v1723
    %v1786 = vadd.f32 %v1583, %v1728
    %v1787 = vadd.f32 %v1588, %v1733
    %v1788 = vadd.f32 %v1593, %v1738
    %v1789 = vadd.f32 %v1598, %v1743
    %v1790 = vadd.f32 %v1603, %v1748
    %v1791 = vadd.f32 %v1608, %v1753
    %v1792 = vadd.f32 %v1613, %v1758
    %v1793 = vadd.f32 %v1618, %v1763
    %v1794 = vadd.f32 %v1623, %v1768
    %v1795 = vadd.f32 %v1628, %v1773
    %v1796 = vadd.f32 %v1633, %v1778
    %v1797 = vxor.u32 %v1781, 2147483648
    %v1798 = vxor.u32 %v1782, 2147483648
    %v1799 = vxor.u32 %v1783, 2147483648
    %v1800 = vxor.u32 %v1784, 2147483648
    %v1801 = vmul.f32 %v1797, 1.442695
    %v1802 = vpow.pop %v1801
    %v1803 = vmul.f32 %v1798, 1.442695
    %v1804 = vpow.pop %v1803
    %v1805 = vmul.f32 %v1799, 1.442695
    %v1806 = vpow.pop %v1805
    %v1807 = vmul.f32 %v1800, 1.442695
    %v1808 = vpow.pop %v1807
    %v1809 = vadd.f32 %v1802, 1.0
    %v1810 = vadd.f32 %v1804, 1.0
    %v1811 = vadd.f32 %v1806, 1.0
    %v1812 = vadd.f32 %v1808, 1.0
    %v1813 = vrcp.pop %v1809
    %v1814 = vmul.f32 1.0, %v1813
    %v1815 = vrcp.pop %v1810
    %v1816 = vmul.f32 1.0, %v1815
    %v1817 = vrcp.pop %v1811
    %v1818 = vmul.f32 1.0, %v1817
    %v1819 = vrcp.pop %v1812
    %v1820 = vmul.f32 1.0, %v1819
    %v1821 = vxor.u32 %v1785, 2147483648
    %v1822 = vxor.u32 %v1786, 2147483648
    %v1823 = vxor.u32 %v1787, 2147483648
    %v1824 = vxor.u32 %v1788, 2147483648
    %v1825 = vmul.f32 %v1821, 1.442695
    %v1826 = vpow.pop %v1825
    %v1827 = vmul.f32 %v1822, 1.442695
    %v1828 = vpow.pop %v1827
    %v1829 = vmul.f32 %v1823, 1.442695
    %v1830 = vpow.pop %v1829
    %v1831 = vmul.f32 %v1824, 1.442695
    %v1832 = vpow.pop %v1831
    %v1833 = vadd.f32 %v1826, 1.0
    %v1834 = vadd.f32 %v1828, 1.0
    %v1835 = vadd.f32 %v1830, 1.0
    %v1836 = vadd.f32 %v1832, 1.0
    %v1837 = vrcp.pop %v1833
    %v1838 = vmul.f32 1.0, %v1837
    %v1839 = vrcp.pop %v1834
    %v1840 = vmul.f32 1.0, %v1839
    %v1841 = vrcp.pop %v1835
    %v1842 = vmul.f32 1.0, %v1841
    %v1843 = vrcp.pop %v1836
    %v1844 = vmul.f32 1.0, %v1843
    %v1845 = vtanh.pop %v1789
    %v1846 = vtanh.pop %v1790
    %v1847 = vtanh.pop %v1791
    %v1848 = vtanh.pop %v1792
    %v1849 = vxor.u32 %v1793, 2147483648
    %v1850 = vxor.u32 %v1794, 2147483648
    %v1851 = vxor.u32 %v1795, 2147483648
    %v1852 = vxor.u32 %v1796, 2147483648
    %v1853 = vmul.f32 %v1849, 1.442695
    %v1854 = vpow.pop %v1853
    %v1855 = vmul.f32 %v1850, 1.442695
    %v1856 = vpow.pop %v1855
    %v1857 = vmul.f32 %v1851, 1.442695
    %v1858 = vpow.pop %v1857
    %v1859 = vmul.f32 %v1852, 1.442695
    %v1860 = vpow.pop %v1859
    %v1861 = vadd.f32 %v1854, 1.0
    %v1862 = vadd.f32 %v1856, 1.0
    %v1863 = vadd.f32 %v1858, 1.0
    %v1864 = vadd.f32 %v1860, 1.0
    %v1865 = vrcp.pop %v1861
    %v1866 = vmul.f32 1.0, %v1865
    %v1867 = vrcp.pop %v1862
    %v1868 = vmul.f32 1.0, %v1867
    %v1869 = vrcp.pop %v1863
    %v1870 = vmul.f32 1.0, %v1869
    %v1871 = vrcp.pop %v1864
    %v1872 = vmul.f32 1.0, %v1871
    %v1873 = vmul.f32 %v1838, %v1362
    %v1874 = vmul.f32 %v1840, %v1363
    %v1875 = vmul.f32 %v1842, %v1364
    %v1876 = vmul.f32 %v1844, %v1365
    %v1877 = vmul.f32 %v1814, %v1845
    %v1878 = vmul.f32 %v1816, %v1846
    %v1879 = vmul.f32 %v1818, %v1847
    %v1880 = vmul.f32 %v1820, %v1848
    %v1881 = vadd.f32 %v1873, %v1877
    %v1882 = vadd.f32 %v1874, %v1878
    %v1883 = vadd.f32 %v1875, %v1879
    %v1884 = vadd.f32 %v1876, %v1880
    %v1885 = vtanh.pop %v1881
    %v1886 = vtanh.pop %v1882
    %v1887 = vtanh.pop %v1883
    %v1888 = vtanh.pop %v1884
    %v1889 = vmul.f32 %v1866, %v1885
    %v1890 = vmul.f32 %v1868, %v1886
    %v1891 = vmul.f32 %v1870, %v1887
    %v1892 = vmul.f32 %v1872, %v1888
    %s1893 = scalar_lea.vmem %s0, 24
    %v1894 = vld [vmem:[%s1893] sm:$0xff]
    %v1895 = vld [vmem:[%s1893 + $0x8] sm:$0xff]
    %v1896 = vld [vmem:[%s1893 + $0x10] sm:$0xff]
    %1897 = vmatprep.subr.mxu0 0.0
    %1898 = vmatpush1.msra.mxu0 %v1894
    %1899 = vmatprep.subr.mxu0 0.0
    %1900 = vmatpush1.msra.mxu0 %v1895
    %1901 = vmatprep.subr.mxu0 0.0
    %1902 = vmatpush1.msra.mxu0 %v1896
    %1903 = vmatprep.subr.mxu0 0.0
    %1904 = vmatpush1.msra.mxu0 0.0
    %1905 = vmatprep.subr.mxu0 0.0
    %1906 = vmatpush1.msra.mxu0 0.0
    %1907 = vmatprep.subr.mxu0 0.0
    %1908 = vmatpush1.msra.mxu0 0.0
    %1909 = vmatprep.subr.mxu0 0.0
    %1910 = vmatpush1.msra.mxu0 0.0
    %1911 = vmatprep.subr.mxu0 0.0
    %1912 = vmatpush1.msra.mxu0 0.0
    %1913 = vmatprep.subr.mxu0 0.0
    %1914 = vmatpush1.msra.mxu0 0.0
    %1915 = vmatprep.subr.mxu0 0.0
    %1916 = vmatpush1.msra.mxu0 0.0
    %1917 = vmatprep.subr.mxu0 0.0
    %1918 = vmatpush1.msra.mxu0 0.0
    %1919 = vmatprep.subr.mxu0 0.0
    %1920 = vmatpush1.msra.mxu0 0.0
    %1921 = vmatprep.subr.mxu0 0.0
    %1922 = vmatpush1.msra.mxu0 0.0
    %1923 = vmatprep.subr.mxu0 0.0
    %1924 = vmatpush1.msra.mxu0 0.0
    %1925 = vmatprep.subr.mxu0 0.0
    %1926 = vmatpush1.msra.mxu0 0.0
    %1927 = vmatprep.subr.mxu0 0.0
    %1928 = vmatpush1.msra.mxu0 0.0
    %1929 = vmatprep.subr.mxu0 0.0
    %1930 = vmatpush1.msra.mxu0 0.0
    %1931 = vmatprep.subr.mxu0 0.0
    %1932 = vmatpush1.msra.mxu0 0.0
    %1933 = vmatprep.subr.mxu0 0.0
    %1934 = vmatpush1.msra.mxu0 0.0
    %1935 = vmatprep.subr.mxu0 0.0
    %1936 = vmatpush1.msra.mxu0 0.0
    %1937 = vmatprep.subr.mxu0 0.0
    %1938 = vmatpush1.msra.mxu0 0.0
    %1939 = vmatprep.subr.mxu0 0.0
    %1940 = vmatpush1.msra.mxu0 0.0
    %1941 = vmatprep.subr.mxu0 0.0
    %1942 = vmatpush1.msra.mxu0 0.0
    %1943 = vmatprep.subr.mxu0 0.0
    %1944 = vmatpush1.msra.mxu0 0.0
    %1945 = vmatprep.subr.mxu0 0.0
    %1946 = vmatpush1.msra.mxu0 0.0
    %1947 = vmatprep.subr.mxu0 0.0
    %1948 = vmatpush1.msra.mxu0 0.0
    %1949 = vmatprep.subr.mxu0 0.0
    %1950 = vmatpush1.msra.mxu0 0.0
    %1951 = vmatprep.subr.mxu0 0.0
    %1952 = vmatpush1.msra.mxu0 0.0
    %1953 = vmatprep.subr.mxu0 0.0
    %1954 = vmatpush1.msra.mxu0 0.0
    %1955 = vmatprep.subr.mxu0 0.0
    %1956 = vmatpush1.msra.mxu0 0.0
    %1957 = vmatprep.subr.mxu0 0.0
    %1958 = vmatpush1.msra.mxu0 0.0
    %1959 = vmatprep.subr.mxu0 0.0
    %1960 = vmatpush1.msra.mxu0 0.0
    %1961 = vmatprep.mubr.f32.mxu0 0.0
    %1962 = vmatmul.mubr.f32.gmra.mrb[0].mxu0 %v219
    %v1963 = vpop.f32.mrb[0].mxu0
    %v1964 = vadd.f32 %v81, %v1963
    %v1965 = vpop.f32.mrb[0].mxu0
    %1966 = vmatprep.mubr.f32.mxu0 0.0
    %1967 = vmatmul.mubr.f32.gmra.mrb[0].mxu0 %v222
    %v1968 = vpop.f32.mrb[0].mxu0
    %v1969 = vadd.f32 %v86, %v1968
    %v1970 = vpop.f32.mrb[0].mxu0
    %1971 = vmatprep.mubr.f32.mxu0 0.0
    %1972 = vmatmul.mubr.f32.gmra.mrb[0].mxu0 %v225
    %v1973 = vpop.f32.mrb[0].mxu0
    %v1974 = vadd.f32 %v91, %v1973
    %v1975 = vpop.f32.mrb[0].mxu0
    %1976 = vmatprep.mubr.f32.mxu0 0.0
    %1977 = vmatmul.mubr.f32.gmra.mrb[0].mxu0 %v228
    %v1978 = vpop.f32.mrb[0].mxu0
    %v1979 = vadd.f32 %v96, %v1978
    %v1980 = vpop.f32.mrb[0].mxu0
    %1981 = vmatprep.mubr.f32.mxu0 0.0
    %1982 = vmatmul.mubr.f32.gmra.mrb[0].mxu0 %v231
    %v1983 = vpop.f32.mrb[0].mxu0
    %v1984 = vadd.f32 %v101, %v1983
    %v1985 = vpop.f32.mrb[0].mxu0
    %1986 = vmatprep.mubr.f32.mxu0 0.0
    %1987 = vmatmul.mubr.f32.gmra.mrb[0].mxu0 %v234
    %v1988 = vpop.f32.mrb[0].mxu0
    %v1989 = vadd.f32 %v106, %v1988
    %v1990 = vpop.f32.mrb[0].mxu0
    %1991 = vmatprep.mubr.f32.mxu0 0.0
    %1992 = vmatmul.mubr.f32.gmra.mrb[0].mxu0 %v237
    %v1993 = vpop.f32.mrb[0].mxu0
    %v1994 = vadd.f32 %v111, %v1993
    %v1995 = vpop.f32.mrb[0].mxu0
    %1996 = vmatprep.mubr.f32.mxu0 0.0
    %1997 = vmatmul.mubr.f32.gmra.mrb[0].mxu0 %v240
    %v1998 = vpop.f32.mrb[0].mxu0
    %v1999 = vadd.f32 %v116, %v1998
    %v2000 = vpop.f32.mrb[0].mxu0
    %2001 = vdwg.mxu0
    %v2002 = vmax.f32 %v1964, 0.0
    %v2003 = vmax.f32 %v1969, 0.0
    %v2004 = vmax.f32 %v1974, 0.0
    %v2005 = vmax.f32 %v1979, 0.0
    %v2006 = vmax.f32 %v1984, 0.0
    %v2007 = vmax.f32 %v1989, 0.0
    %v2008 = vmax.f32 %v1994, 0.0
    %v2009 = vmax.f32 %v1999, 0.0
    %2010 = vmatprep.subr.mxu0 0.0
    %2011 = vmatpush1.msra.mxu0 %v2002
    %2012 = vmatprep.subr.mxu0 0.0
    %2013 = vmatpush1.msra.mxu0 %v2003
    %2014 = vmatprep.subr.mxu0 0.0
    %2015 = vmatpush1.msra.mxu0 %v2004
    %2016 = vmatprep.subr.mxu0 0.0
    %2017 = vmatpush1.msra.mxu0 %v2005
    %2018 = vmatprep.subr.mxu0 0.0
    %2019 = vmatpush1.msra.mxu0 %v2006
    %2020 = vmatprep.subr.mxu0 0.0
    %2021 = vmatpush1.msra.mxu0 %v2007
    %2022 = vmatprep.subr.mxu0 0.0
    %2023 = vmatpush1.msra.mxu0 %v2008
    %2024 = vmatprep.subr.mxu0 0.0
    %2025 = vmatpush1.msra.mxu0 %v2009
    %2026 = vmatprep.subr.mxu0 0.0
    %2027 = vmatpush1.msra.mxu0 0.0
    %2028 = vmatprep.subr.mxu0 0.0
    %2029 = vmatpush1.msra.mxu0 0.0
    %2030 = vmatprep.subr.mxu0 0.0
    %2031 = vmatpush1.msra.mxu0 0.0
    %2032 = vmatprep.subr.mxu0 0.0
    %2033 = vmatpush1.msra.mxu0 0.0
    %2034 = vmatprep.subr.mxu0 0.0
    %2035 = vmatpush1.msra.mxu0 0.0
    %2036 = vmatprep.subr.mxu0 0.0
    %2037 = vmatpush1.msra.mxu0 0.0
    %2038 = vmatprep.subr.mxu0 0.0
    %2039 = vmatpush1.msra.mxu0 0.0
    %2040 = vmatprep.subr.mxu0 0.0
    %2041 = vmatpush1.msra.mxu0 0.0
    %2042 = vmatprep.subr.mxu0 0.0
    %2043 = vmatpush1.msra.mxu0 0.0
    %2044 = vmatprep.subr.mxu0 0.0
    %2045 = vmatpush1.msra.mxu0 0.0
    %2046 = vmatprep.subr.mxu0 0.0
    %2047 = vmatpush1.msra.mxu0 0.0
    %2048 = vmatprep.subr.mxu0 0.0
    %2049 = vmatpush1.msra.mxu0 0.0
    %2050 = vmatprep.subr.mxu0 0.0
    %2051 = vmatpush1.msra.mxu0 0.0
    %2052 = vmatprep.subr.mxu0 0.0
    %2053 = vmatpush1.msra.mxu0 0.0
    %2054 = vmatprep.subr.mxu0 0.0
    %2055 = vmatpush1.msra.mxu0 0.0
    %2056 = vmatprep.subr.mxu0 0.0
    %2057 = vmatpush1.msra.mxu0 0.0
    %2058 = vmatprep.subr.mxu0 0.0
    %2059 = vmatpush1.msra.mxu0 0.0
    %2060 = vmatprep.subr.mxu0 0.0
    %2061 = vmatpush1.msra.mxu0 0.0
    %2062 = vmatprep.subr.mxu0 0.0
    %2063 = vmatpush1.msra.mxu0 0.0
    %2064 = vmatprep.subr.mxu0 0.0
    %2065 = vmatpush1.msra.mxu0 0.0
    %2066 = vmatprep.subr.mxu0 0.0
    %2067 = vmatpush1.msra.mxu0 0.0
    %2068 = vmatprep.subr.mxu0 0.0
    %2069 = vmatpush1.msra.mxu0 0.0
    %2070 = vmatprep.subr.mxu0 0.0
    %2071 = vmatpush1.msra.mxu0 0.0
    %2072 = vmatprep.subr.mxu0 0.0
    %2073 = vmatpush1.msra.mxu0 0.0
    %2074 = vmatprep.mubr.f32.mxu0 0.0
    %2075 = vmatmul.mubr.f32.gmra.mrb[0].mxu0 %v357
    %v2076 = vpop.f32.mrb[0].mxu0
    %v2077 = vadd.f32 %v137, %v2076
    %v2078 = vpop.f32.mrb[0].mxu0
    %2079 = vmatprep.mubr.f32.mxu0 0.0
    %2080 = vmatmul.mubr.f32.gmra.mrb[0].mxu0 %v360
    %v2081 = vpop.f32.mrb[0].mxu0
    %v2082 = vadd.f32 %v142, %v2081
    %v2083 = vpop.f32.mrb[0].mxu0
    %2084 = vmatprep.mubr.f32.mxu0 0.0
    %2085 = vmatmul.mubr.f32.gmra.mrb[0].mxu0 %v363
    %v2086 = vpop.f32.mrb[0].mxu0
    %v2087 = vadd.f32 %v147, %v2086
    %v2088 = vpop.f32.mrb[0].mxu0
    %2089 = vmatprep.mubr.f32.mxu0 0.0
    %2090 = vmatmul.mubr.f32.gmra.mrb[0].mxu0 %v366
    %v2091 = vpop.f32.mrb[0].mxu0
    %v2092 = vadd.f32 %v152, %v2091
    %v2093 = vpop.f32.mrb[0].mxu0
    %2094 = vmatprep.mubr.f32.mxu0 0.0
    %2095 = vmatmul.mubr.f32.gmra.mrb[0].mxu0 %v369
    %v2096 = vpop.f32.mrb[0].mxu0
    %v2097 = vadd.f32 %v157, %v2096
    %v2098 = vpop.f32.mrb[0].mxu0
    %2099 = vmatprep.mubr.f32.mxu0 0.0
    %2100 = vmatmul.mubr.f32.gmra.mrb[0].mxu0 %v372
    %v2101 = vpop.f32.mrb[0].mxu0
    %v2102 = vadd.f32 %v162, %v2101
    %v2103 = vpop.f32.mrb[0].mxu0
    %2104 = vmatprep.mubr.f32.mxu0 0.0
    %2105 = vmatmul.mubr.f32.gmra.mrb[0].mxu0 %v375
    %v2106 = vpop.f32.mrb[0].mxu0
    %v2107 = vadd.f32 %v167, %v2106
    %v2108 = vpop.f32.mrb[0].mxu0
    %2109 = vmatprep.mubr.f32.mxu0 0.0
    %2110 = vmatmul.mubr.f32.gmra.mrb[0].mxu0 %v378
    %v2111 = vpop.f32.mrb[0].mxu0
    %v2112 = vadd.f32 %v172, %v2111
    %v2113 = vpop.f32.mrb[0].mxu0
    %2114 = vmatprep.mubr.f32.mxu0 0.0
    %2115 = vmatmul.mubr.f32.gmra.mrb[0].mxu0 %v381
    %v2116 = vpop.f32.mrb[0].mxu0
    %v2117 = vadd.f32 %v177, %v2116
    %v2118 = vpop.f32.mrb[0].mxu0
    %2119 = vmatprep.mubr.f32.mxu0 0.0
    %2120 = vmatmul.mubr.f32.gmra.mrb[0].mxu0 %v384
    %v2121 = vpop.f32.mrb[0].mxu0
    %v2122 = vadd.f32 %v182, %v2121
    %v2123 = vpop.f32.mrb[0].mxu0
    %2124 = vmatprep.mubr.f32.mxu0 0.0
    %2125 = vmatmul.mubr.f32.gmra.mrb[0].mxu0 %v387
    %v2126 = vpop.f32.mrb[0].mxu0
    %v2127 = vadd.f32 %v187, %v2126
    %v2128 = vpop.f32.mrb[0].mxu0
    %2129 = vmatprep.mubr.f32.mxu0 0.0
    %2130 = vmatmul.mubr.f32.gmra.mrb[0].mxu0 %v390
    %v2131 = vpop.f32.mrb[0].mxu0
    %v2132 = vadd.f32 %v192, %v2131
    %v2133 = vpop.f32.mrb[0].mxu0
    %2134 = vmatprep.mubr.f32.mxu0 0.0
    %2135 = vmatmul.mubr.f32.gmra.mrb[0].mxu0 %v393
    %v2136 = vpop.f32.mrb[0].mxu0
    %v2137 = vadd.f32 %v197, %v2136
    %v2138 = vpop.f32.mrb[0].mxu0
    %2139 = vmatprep.mubr.f32.mxu0 0.0
    %2140 = vmatmul.mubr.f32.gmra.mrb[0].mxu0 %v396
    %v2141 = vpop.f32.mrb[0].mxu0
    %v2142 = vadd.f32 %v202, %v2141
    %v2143 = vpop.f32.mrb[0].mxu0
    %2144 = vmatprep.mubr.f32.mxu0 0.0
    %2145 = vmatmul.mubr.f32.gmra.mrb[0].mxu0 %v399
    %v2146 = vpop.f32.mrb[0].mxu0
    %v2147 = vadd.f32 %v207, %v2146
    %v2148 = vpop.f32.mrb[0].mxu0
    %2149 = vmatprep.mubr.f32.mxu0 0.0
    %2150 = vmatmul.mubr.f32.gmra.mrb[0].mxu0 %v402
    %v2151 = vpop.f32.mrb[0].mxu0
    %v2152 = vadd.f32 %v212, %v2151
    %v2153 = vpop.f32.mrb[0].mxu0
    %2154 = vdwg.mxu0
    %2155 = vmatprep.subr.mxu0 0.0
    %2156 = vmatpush1.msra.mxu0 %v1889
    %2157 = vmatprep.subr.mxu0 0.0
    %2158 = vmatpush1.msra.mxu0 %v1890
    %2159 = vmatprep.subr.mxu0 0.0
    %2160 = vmatpush1.msra.mxu0 %v1891
    %2161 = vmatprep.subr.mxu0 0.0
    %2162 = vmatpush1.msra.mxu0 %v1892
    %2163 = vmatprep.subr.mxu0 0.0
    %2164 = vmatpush1.msra.mxu0 0.0
    %2165 = vmatprep.subr.mxu0 0.0
    %2166 = vmatpush1.msra.mxu0 0.0
    %2167 = vmatprep.subr.mxu0 0.0
    %2168 = vmatpush1.msra.mxu0 0.0
    %2169 = vmatprep.subr.mxu0 0.0
    %2170 = vmatpush1.msra.mxu0 0.0
    %2171 = vmatprep.subr.mxu0 0.0
    %2172 = vmatpush1.msra.mxu0 0.0
    %2173 = vmatprep.subr.mxu0 0.0
    %2174 = vmatpush1.msra.mxu0 0.0
    %2175 = vmatprep.subr.mxu0 0.0
    %2176 = vmatpush1.msra.mxu0 0.0
    %2177 = vmatprep.subr.mxu0 0.0
    %2178 = vmatpush1.msra.mxu0 0.0
    %2179 = vmatprep.subr.mxu0 0.0
    %2180 = vmatpush1.msra.mxu0 0.0
    %2181 = vmatprep.subr.mxu0 0.0
    %2182 = vmatpush1.msra.mxu0 0.0
    %2183 = vmatprep.subr.mxu0 0.0
    %2184 = vmatpush1.msra.mxu0 0.0
    %2185 = vmatprep.subr.mxu0 0.0
    %2186 = vmatpush1.msra.mxu0 0.0
    %2187 = vmatprep.subr.mxu0 0.0
    %2188 = vmatpush1.msra.mxu0 0.0
    %2189 = vmatprep.subr.mxu0 0.0
    %2190 = vmatpush1.msra.mxu0 0.0
    %2191 = vmatprep.subr.mxu0 0.0
    %2192 = vmatpush1.msra.mxu0 0.0
    %2193 = vmatprep.subr.mxu0 0.0
    %2194 = vmatpush1.msra.mxu0 0.0
    %2195 = vmatprep.subr.mxu0 0.0
    %2196 = vmatpush1.msra.mxu0 0.0
    %2197 = vmatprep.subr.mxu0 0.0
    %2198 = vmatpush1.msra.mxu0 0.0
    %2199 = vmatprep.subr.mxu0 0.0
    %2200 = vmatpush1.msra.mxu0 0.0
    %2201 = vmatprep.subr.mxu0 0.0
    %2202 = vmatpush1.msra.mxu0 0.0
    %2203 = vmatprep.subr.mxu0 0.0
    %2204 = vmatpush1.msra.mxu0 0.0
    %2205 = vmatprep.subr.mxu0 0.0
    %2206 = vmatpush1.msra.mxu0 0.0
    %2207 = vmatprep.subr.mxu0 0.0
    %2208 = vmatpush1.msra.mxu0 0.0
    %2209 = vmatprep.subr.mxu0 0.0
    %2210 = vmatpush1.msra.mxu0 0.0
    %2211 = vmatprep.subr.mxu0 0.0
    %2212 = vmatpush1.msra.mxu0 0.0
    %2213 = vmatprep.subr.mxu0 0.0
    %2214 = vmatpush1.msra.mxu0 0.0
    %2215 = vmatprep.subr.mxu0 0.0
    %2216 = vmatpush1.msra.mxu0 0.0
    %2217 = vmatprep.subr.mxu0 0.0
    %2218 = vmatpush1.msra.mxu0 0.0
    %2219 = vmatprep.mubr.f32.mxu0 0.0
    %2220 = vmatmul.mubr.f32.gmra.mrb[0].mxu0 %v551
    %v2221 = vpop.f32.mrb[0].mxu0
    %v2222 = vadd.f32 0.0, %v2221
    %v2223 = vpop.f32.mrb[0].mxu0
    %2224 = vmatprep.mubr.f32.mxu0 0.0
    %2225 = vmatmul.mubr.f32.gmra.mrb[0].mxu0 %v554
    %v2226 = vpop.f32.mrb[0].mxu0
    %v2227 = vadd.f32 0.0, %v2226
    %v2228 = vpop.f32.mrb[0].mxu0
    %2229 = vmatprep.mubr.f32.mxu0 0.0
    %2230 = vmatmul.mubr.f32.gmra.mrb[0].mxu0 %v557
    %v2231 = vpop.f32.mrb[0].mxu0
    %v2232 = vadd.f32 0.0, %v2231
    %v2233 = vpop.f32.mrb[0].mxu0
    %2234 = vmatprep.mubr.f32.mxu0 0.0
    %2235 = vmatmul.mubr.f32.gmra.mrb[0].mxu0 %v560
    %v2236 = vpop.f32.mrb[0].mxu0
    %v2237 = vadd.f32 0.0, %v2236
    %v2238 = vpop.f32.mrb[0].mxu0
    %2239 = vmatprep.mubr.f32.mxu0 0.0
    %2240 = vmatmul.mubr.f32.gmra.mrb[0].mxu0 %v563
    %v2241 = vpop.f32.mrb[0].mxu0
    %v2242 = vadd.f32 0.0, %v2241
    %v2243 = vpop.f32.mrb[0].mxu0
    %2244 = vmatprep.mubr.f32.mxu0 0.0
    %2245 = vmatmul.mubr.f32.gmra.mrb[0].mxu0 %v566
    %v2246 = vpop.f32.mrb[0].mxu0
    %v2247 = vadd.f32 0.0, %v2246
    %v2248 = vpop.f32.mrb[0].mxu0
    %2249 = vmatprep.mubr.f32.mxu0 0.0
    %2250 = vmatmul.mubr.f32.gmra.mrb[0].mxu0 %v569
    %v2251 = vpop.f32.mrb[0].mxu0
    %v2252 = vadd.f32 0.0, %v2251
    %v2253 = vpop.f32.mrb[0].mxu0
    %2254 = vmatprep.mubr.f32.mxu0 0.0
    %2255 = vmatmul.mubr.f32.gmra.mrb[0].mxu0 %v572
    %v2256 = vpop.f32.mrb[0].mxu0
    %v2257 = vadd.f32 0.0, %v2256
    %v2258 = vpop.f32.mrb[0].mxu0
    %2259 = vmatprep.mubr.f32.mxu0 0.0
    %2260 = vmatmul.mubr.f32.gmra.mrb[0].mxu0 %v575
    %v2261 = vpop.f32.mrb[0].mxu0
    %v2262 = vadd.f32 0.0, %v2261
    %v2263 = vpop.f32.mrb[0].mxu0
    %2264 = vmatprep.mubr.f32.mxu0 0.0
    %2265 = vmatmul.mubr.f32.gmra.mrb[0].mxu0 %v578
    %v2266 = vpop.f32.mrb[0].mxu0
    %v2267 = vadd.f32 0.0, %v2266
    %v2268 = vpop.f32.mrb[0].mxu0
    %2269 = vmatprep.mubr.f32.mxu0 0.0
    %2270 = vmatmul.mubr.f32.gmra.mrb[0].mxu0 %v581
    %v2271 = vpop.f32.mrb[0].mxu0
    %v2272 = vadd.f32 0.0, %v2271
    %v2273 = vpop.f32.mrb[0].mxu0
    %2274 = vmatprep.mubr.f32.mxu0 0.0
    %2275 = vmatmul.mubr.f32.gmra.mrb[0].mxu0 %v584
    %v2276 = vpop.f32.mrb[0].mxu0
    %v2277 = vadd.f32 0.0, %v2276
    %v2278 = vpop.f32.mrb[0].mxu0
    %2279 = vmatprep.mubr.f32.mxu0 0.0
    %2280 = vmatmul.mubr.f32.gmra.mrb[0].mxu0 %v587
    %v2281 = vpop.f32.mrb[0].mxu0
    %v2282 = vadd.f32 0.0, %v2281
    %v2283 = vpop.f32.mrb[0].mxu0
    %2284 = vmatprep.mubr.f32.mxu0 0.0
    %2285 = vmatmul.mubr.f32.gmra.mrb[0].mxu0 %v590
    %v2286 = vpop.f32.mrb[0].mxu0
    %v2287 = vadd.f32 0.0, %v2286
    %v2288 = vpop.f32.mrb[0].mxu0
    %2289 = vmatprep.mubr.f32.mxu0 0.0
    %2290 = vmatmul.mubr.f32.gmra.mrb[0].mxu0 %v593
    %v2291 = vpop.f32.mrb[0].mxu0
    %v2292 = vadd.f32 0.0, %v2291
    %v2293 = vpop.f32.mrb[0].mxu0
    %2294 = vmatprep.mubr.f32.mxu0 0.0
    %2295 = vmatmul.mubr.f32.gmra.mrb[0].mxu0 %v596
    %v2296 = vpop.f32.mrb[0].mxu0
    %v2297 = vadd.f32 0.0, %v2296
    %v2298 = vpop.f32.mrb[0].mxu0
    %2299 = vdwg.mxu0
    %v2300 = vadd.f32 %v2077, %v2222
    %v2301 = vadd.f32 %v2082, %v2227
    %v2302 = vadd.f32 %v2087, %v2232
    %v2303 = vadd.f32 %v2092, %v2237
    %v2304 = vadd.f32 %v2097, %v2242
    %v2305 = vadd.f32 %v2102, %v2247
    %v2306 = vadd.f32 %v2107, %v2252
    %v2307 = vadd.f32 %v2112, %v2257
    %v2308 = vadd.f32 %v2117, %v2262
    %v2309 = vadd.f32 %v2122, %v2267
    %v2310 = vadd.f32 %v2127, %v2272
    %v2311 = vadd.f32 %v2132, %v2277
    %v2312 = vadd.f32 %v2137, %v2282
    %v2313 = vadd.f32 %v2142, %v2287
    %v2314 = vadd.f32 %v2147, %v2292
    %v2315 = vadd.f32 %v2152, %v2297
    %v2316 = vxor.u32 %v2300, 2147483648
    %v2317 = vxor.u32 %v2301, 2147483648
    %v2318 = vxor.u32 %v2302, 2147483648
    %v2319 = vxor.u32 %v2303, 2147483648
    %v2320 = vmul.f32 %v2316, 1.442695
    %v2321 = vpow.pop %v2320
    %v2322 = vmul.f32 %v2317, 1.442695
    %v2323 = vpow.pop %v2322
    %v2324 = vmul.f32 %v2318, 1.442695
    %v2325 = vpow.pop %v2324
    %v2326 = vmul.f32 %v2319, 1.442695
    %v2327 = vpow.pop %v2326
    %v2328 = vadd.f32 %v2321, 1.0
    %v2329 = vadd.f32 %v2323, 1.0
    %v2330 = vadd.f32 %v2325, 1.0
    %v2331 = vadd.f32 %v2327, 1.0
    %v2332 = vrcp.pop %v2328
    %v2333 = vmul.f32 1.0, %v2332
    %v2334 = vrcp.pop %v2329
    %v2335 = vmul.f32 1.0, %v2334
    %v2336 = vrcp.pop %v2330
    %v2337 = vmul.f32 1.0, %v2336
    %v2338 = vrcp.pop %v2331
    %v2339 = vmul.f32 1.0, %v2338
    %v2340 = vxor.u32 %v2304, 2147483648
    %v2341 = vxor.u32 %v2305, 2147483648
    %v2342 = vxor.u32 %v2306, 2147483648
    %v2343 = vxor.u32 %v2307, 2147483648
    %v2344 = vmul.f32 %v2340, 1.442695
    %v2345 = vpow.pop %v2344
    %v2346 = vmul.f32 %v2341, 1.442695
    %v2347 = vpow.pop %v2346
    %v2348 = vmul.f32 %v2342, 1.442695
    %v2349 = vpow.pop %v2348
    %v2350 = vmul.f32 %v2343, 1.442695
    %v2351 = vpow.pop %v2350
    %v2352 = vadd.f32 %v2345, 1.0
    %v2353 = vadd.f32 %v2347, 1.0
    %v2354 = vadd.f32 %v2349, 1.0
    %v2355 = vadd.f32 %v2351, 1.0
    %v2356 = vrcp.pop %v2352
    %v2357 = vmul.f32 1.0, %v2356
    %v2358 = vrcp.pop %v2353
    %v2359 = vmul.f32 1.0, %v2358
    %v2360 = vrcp.pop %v2354
    %v2361 = vmul.f32 1.0, %v2360
    %v2362 = vrcp.pop %v2355
    %v2363 = vmul.f32 1.0, %v2362
    %v2364 = vtanh.pop %v2308
    %v2365 = vtanh.pop %v2309
    %v2366 = vtanh.pop %v2310
    %v2367 = vtanh.pop %v2311
    %v2368 = vxor.u32 %v2312, 2147483648
    %v2369 = vxor.u32 %v2313, 2147483648
    %v2370 = vxor.u32 %v2314, 2147483648
    %v2371 = vxor.u32 %v2315, 2147483648
    %v2372 = vmul.f32 %v2368, 1.442695
    %v2373 = vpow.pop %v2372
    %v2374 = vmul.f32 %v2369, 1.442695
    %v2375 = vpow.pop %v2374
    %v2376 = vmul.f32 %v2370, 1.442695
    %v2377 = vpow.pop %v2376
    %v2378 = vmul.f32 %v2371, 1.442695
    %v2379 = vpow.pop %v2378
    %v2380 = vadd.f32 %v2373, 1.0
    %v2381 = vadd.f32 %v2375, 1.0
    %v2382 = vadd.f32 %v2377, 1.0
    %v2383 = vadd.f32 %v2379, 1.0
    %v2384 = vrcp.pop %v2380
    %v2385 = vmul.f32 1.0, %v2384
    %v2386 = vrcp.pop %v2381
    %v2387 = vmul.f32 1.0, %v2386
    %v2388 = vrcp.pop %v2382
    %v2389 = vmul.f32 1.0, %v2388
    %v2390 = vrcp.pop %v2383
    %v2391 = vmul.f32 1.0, %v2390
    %v2392 = vmul.f32 %v2357, %v1881
    %v2393 = vmul.f32 %v2359, %v1882
    %v2394 = vmul.f32 %v2361, %v1883
    %v2395 = vmul.f32 %v2363, %v1884
    %v2396 = vmul.f32 %v2333, %v2364
    %v2397 = vmul.f32 %v2335, %v2365
    %v2398 = vmul.f32 %v2337, %v2366
    %v2399 = vmul.f32 %v2339, %v2367
    %v2400 = vadd.f32 %v2392, %v2396
    %v2401 = vadd.f32 %v2393, %v2397
    %v2402 = vadd.f32 %v2394, %v2398
    %v2403 = vadd.f32 %v2395, %v2399
    %v2404 = vtanh.pop %v2400
    %v2405 = vtanh.pop %v2401
    %v2406 = vtanh.pop %v2402
    %v2407 = vtanh.pop %v2403
    %v2408 = vmul.f32 %v2385, %v2404
    %v2409 = vmul.f32 %v2387, %v2405
    %v2410 = vmul.f32 %v2389, %v2406
    %v2411 = vmul.f32 %v2391, %v2407
    %s2412 = scalar_lea.vmem %s0, 32
    %v2413 = vld [vmem:[%s2412] sm:$0xff]
    %v2414 = vld [vmem:[%s2412 + $0x8] sm:$0xff]
    %v2415 = vld [vmem:[%s2412 + $0x10] sm:$0xff]
    %2416 = vmatprep.subr.mxu0 0.0
    %2417 = vmatpush1.msra.mxu0 %v2413
    %2418 = vmatprep.subr.mxu0 0.0
    %2419 = vmatpush1.msra.mxu0 %v2414
    %2420 = vmatprep.subr.mxu0 0.0
    %2421 = vmatpush1.msra.mxu0 %v2415
    %2422 = vmatprep.subr.mxu0 0.0
    %2423 = vmatpush1.msra.mxu0 0.0
    %2424 = vmatprep.subr.mxu0 0.0
    %2425 = vmatpush1.msra.mxu0 0.0
    %2426 = vmatprep.subr.mxu0 0.0
    %2427 = vmatpush1.msra.mxu0 0.0
    %2428 = vmatprep.subr.mxu0 0.0
    %2429 = vmatpush1.msra.mxu0 0.0
    %2430 = vmatprep.subr.mxu0 0.0
    %2431 = vmatpush1.msra.mxu0 0.0
    %2432 = vmatprep.subr.mxu0 0.0
    %2433 = vmatpush1.msra.mxu0 0.0
    %2434 = vmatprep.subr.mxu0 0.0
    %2435 = vmatpush1.msra.mxu0 0.0
    %2436 = vmatprep.subr.mxu0 0.0
    %2437 = vmatpush1.msra.mxu0 0.0
    %2438 = vmatprep.subr.mxu0 0.0
    %2439 = vmatpush1.msra.mxu0 0.0
    %2440 = vmatprep.subr.mxu0 0.0
    %2441 = vmatpush1.msra.mxu0 0.0
    %2442 = vmatprep.subr.mxu0 0.0
    %2443 = vmatpush1.msra.mxu0 0.0
    %2444 = vmatprep.subr.mxu0 0.0
    %2445 = vmatpush1.msra.mxu0 0.0
    %2446 = vmatprep.subr.mxu0 0.0
    %2447 = vmatpush1.msra.mxu0 0.0
    %2448 = vmatprep.subr.mxu0 0.0
    %2449 = vmatpush1.msra.mxu0 0.0
    %2450 = vmatprep.subr.mxu0 0.0
    %2451 = vmatpush1.msra.mxu0 0.0
    %2452 = vmatprep.subr.mxu0 0.0
    %2453 = vmatpush1.msra.mxu0 0.0
    %2454 = vmatprep.subr.mxu0 0.0
    %2455 = vmatpush1.msra.mxu0 0.0
    %2456 = vmatprep.subr.mxu0 0.0
    %2457 = vmatpush1.msra.mxu0 0.0
    %2458 = vmatprep.subr.mxu0 0.0
    %2459 = vmatpush1.msra.mxu0 0.0
    %2460 = vmatprep.subr.mxu0 0.0
    %2461 = vmatpush1.msra.mxu0 0.0
    %2462 = vmatprep.subr.mxu0 0.0
    %2463 = vmatpush1.msra.mxu0 0.0
    %2464 = vmatprep.subr.mxu0 0.0
    %2465 = vmatpush1.msra.mxu0 0.0
    %2466 = vmatprep.subr.mxu0 0.0
    %2467 = vmatpush1.msra.mxu0 0.0
    %2468 = vmatprep.subr.mxu0 0.0
    %2469 = vmatpush1.msra.mxu0 0.0
    %2470 = vmatprep.subr.mxu0 0.0
    %2471 = vmatpush1.msra.mxu0 0.0
    %2472 = vmatprep.subr.mxu0 0.0
    %2473 = vmatpush1.msra.mxu0 0.0
    %2474 = vmatprep.subr.mxu0 0.0
    %2475 = vmatpush1.msra.mxu0 0.0
    %2476 = vmatprep.subr.mxu0 0.0
    %2477 = vmatpush1.msra.mxu0 0.0
    %2478 = vmatprep.subr.mxu0 0.0
    %2479 = vmatpush1.msra.mxu0 0.0
    %2480 = vmatprep.mubr.f32.mxu0 0.0
    %2481 = vmatmul.mubr.f32.gmra.mrb[0].mxu0 %v219
    %v2482 = vpop.f32.mrb[0].mxu0
    %v2483 = vadd.f32 %v81, %v2482
    %v2484 = vpop.f32.mrb[0].mxu0
    %2485 = vmatprep.mubr.f32.mxu0 0.0
    %2486 = vmatmul.mubr.f32.gmra.mrb[0].mxu0 %v222
    %v2487 = vpop.f32.mrb[0].mxu0
    %v2488 = vadd.f32 %v86, %v2487
    %v2489 = vpop.f32.mrb[0].mxu0
    %2490 = vmatprep.mubr.f32.mxu0 0.0
    %2491 = vmatmul.mubr.f32.gmra.mrb[0].mxu0 %v225
    %v2492 = vpop.f32.mrb[0].mxu0
    %v2493 = vadd.f32 %v91, %v2492
    %v2494 = vpop.f32.mrb[0].mxu0
    %2495 = vmatprep.mubr.f32.mxu0 0.0
    %2496 = vmatmul.mubr.f32.gmra.mrb[0].mxu0 %v228
    %v2497 = vpop.f32.mrb[0].mxu0
    %v2498 = vadd.f32 %v96, %v2497
    %v2499 = vpop.f32.mrb[0].mxu0
    %2500 = vmatprep.mubr.f32.mxu0 0.0
    %2501 = vmatmul.mubr.f32.gmra.mrb[0].mxu0 %v231
    %v2502 = vpop.f32.mrb[0].mxu0
    %v2503 = vadd.f32 %v101, %v2502
    %v2504 = vpop.f32.mrb[0].mxu0
    %2505 = vmatprep.mubr.f32.mxu0 0.0
    %2506 = vmatmul.mubr.f32.gmra.mrb[0].mxu0 %v234
    %v2507 = vpop.f32.mrb[0].mxu0
    %v2508 = vadd.f32 %v106, %v2507
    %v2509 = vpop.f32.mrb[0].mxu0
    %2510 = vmatprep.mubr.f32.mxu0 0.0
    %2511 = vmatmul.mubr.f32.gmra.mrb[0].mxu0 %v237
    %v2512 = vpop.f32.mrb[0].mxu0
    %v2513 = vadd.f32 %v111, %v2512
    %v2514 = vpop.f32.mrb[0].mxu0
    %2515 = vmatprep.mubr.f32.mxu0 0.0
    %2516 = vmatmul.mubr.f32.gmra.mrb[0].mxu0 %v240
    %v2517 = vpop.f32.mrb[0].mxu0
    %v2518 = vadd.f32 %v116, %v2517
    %v2519 = vpop.f32.mrb[0].mxu0
    %2520 = vdwg.mxu0
    %v2521 = vmax.f32 %v2483, 0.0
    %v2522 = vmax.f32 %v2488, 0.0
    %v2523 = vmax.f32 %v2493, 0.0
    %v2524 = vmax.f32 %v2498, 0.0
    %v2525 = vmax.f32 %v2503, 0.0
    %v2526 = vmax.f32 %v2508, 0.0
    %v2527 = vmax.f32 %v2513, 0.0
    %v2528 = vmax.f32 %v2518, 0.0
    %2529 = vmatprep.subr.mxu0 0.0
    %2530 = vmatpush1.msra.mxu0 %v2521
    %2531 = vmatprep.subr.mxu0 0.0
    %2532 = vmatpush1.msra.mxu0 %v2522
    %2533 = vmatprep.subr.mxu0 0.0
    %2534 = vmatpush1.msra.mxu0 %v2523
    %2535 = vmatprep.subr.mxu0 0.0
    %2536 = vmatpush1.msra.mxu0 %v2524
    %2537 = vmatprep.subr.mxu0 0.0
    %2538 = vmatpush1.msra.mxu0 %v2525
    %2539 = vmatprep.subr.mxu0 0.0
    %2540 = vmatpush1.msra.mxu0 %v2526
    %2541 = vmatprep.subr.mxu0 0.0
    %2542 = vmatpush1.msra.mxu0 %v2527
    %2543 = vmatprep.subr.mxu0 0.0
    %2544 = vmatpush1.msra.mxu0 %v2528
    %2545 = vmatprep.subr.mxu0 0.0
    %2546 = vmatpush1.msra.mxu0 0.0
    %2547 = vmatprep.subr.mxu0 0.0
    %2548 = vmatpush1.msra.mxu0 0.0
    %2549 = vmatprep.subr.mxu0 0.0
    %2550 = vmatpush1.msra.mxu0 0.0
    %2551 = vmatprep.subr.mxu0 0.0
    %2552 = vmatpush1.msra.mxu0 0.0
    %2553 = vmatprep.subr.mxu0 0.0
    %2554 = vmatpush1.msra.mxu0 0.0
    %2555 = vmatprep.subr.mxu0 0.0
    %2556 = vmatpush1.msra.mxu0 0.0
    %2557 = vmatprep.subr.mxu0 0.0
    %2558 = vmatpush1.msra.mxu0 0.0
    %2559 = vmatprep.subr.mxu0 0.0
    %2560 = vmatpush1.msra.mxu0 0.0
    %2561 = vmatprep.subr.mxu0 0.0
    %2562 = vmatpush1.msra.mxu0 0.0
    %2563 = vmatprep.subr.mxu0 0.0
    %2564 = vmatpush1.msra.mxu0 0.0
    %2565 = vmatprep.subr.mxu0 0.0
    %2566 = vmatpush1.msra.mxu0 0.0
    %2567 = vmatprep.subr.mxu0 0.0
    %2568 = vmatpush1.msra.mxu0 0.0
    %2569 = vmatprep.subr.mxu0 0.0
    %2570 = vmatpush1.msra.mxu0 0.0
    %2571 = vmatprep.subr.mxu0 0.0
    %2572 = vmatpush1.msra.mxu0 0.0
    %2573 = vmatprep.subr.mxu0 0.0
    %2574 = vmatpush1.msra.mxu0 0.0
    %2575 = vmatprep.subr.mxu0 0.0
    %2576 = vmatpush1.msra.mxu0 0.0
    %2577 = vmatprep.subr.mxu0 0.0
    %2578 = vmatpush1.msra.mxu0 0.0
    %2579 = vmatprep.subr.mxu0 0.0
    %2580 = vmatpush1.msra.mxu0 0.0
    %2581 = vmatprep.subr.mxu0 0.0
    %2582 = vmatpush1.msra.mxu0 0.0
    %2583 = vmatprep.subr.mxu0 0.0
    %2584 = vmatpush1.msra.mxu0 0.0
    %2585 = vmatprep.subr.mxu0 0.0
    %2586 = vmatpush1.msra.mxu0 0.0
    %2587 = vmatprep.subr.mxu0 0.0
    %2588 = vmatpush1.msra.mxu0 0.0
    %2589 = vmatprep.subr.mxu0 0.0
    %2590 = vmatpush1.msra.mxu0 0.0
    %2591 = vmatprep.subr.mxu0 0.0
    %2592 = vmatpush1.msra.mxu0 0.0
    %2593 = vmatprep.mubr.f32.mxu0 0.0
    %2594 = vmatmul.mubr.f32.gmra.mrb[0].mxu0 %v357
    %v2595 = vpop.f32.mrb[0].mxu0
    %v2596 = vadd.f32 %v137, %v2595
    %v2597 = vpop.f32.mrb[0].mxu0
    %2598 = vmatprep.mubr.f32.mxu0 0.0
    %2599 = vmatmul.mubr.f32.gmra.mrb[0].mxu0 %v360
    %v2600 = vpop.f32.mrb[0].mxu0
    %v2601 = vadd.f32 %v142, %v2600
    %v2602 = vpop.f32.mrb[0].mxu0
    %2603 = vmatprep.mubr.f32.mxu0 0.0
    %2604 = vmatmul.mubr.f32.gmra.mrb[0].mxu0 %v363
    %v2605 = vpop.f32.mrb[0].mxu0
    %v2606 = vadd.f32 %v147, %v2605
    %v2607 = vpop.f32.mrb[0].mxu0
    %2608 = vmatprep.mubr.f32.mxu0 0.0
    %2609 = vmatmul.mubr.f32.gmra.mrb[0].mxu0 %v366
    %v2610 = vpop.f32.mrb[0].mxu0
    %v2611 = vadd.f32 %v152, %v2610
    %v2612 = vpop.f32.mrb[0].mxu0
    %2613 = vmatprep.mubr.f32.mxu0 0.0
    %2614 = vmatmul.mubr.f32.gmra.mrb[0].mxu0 %v369
    %v2615 = vpop.f32.mrb[0].mxu0
    %v2616 = vadd.f32 %v157, %v2615
    %v2617 = vpop.f32.mrb[0].mxu0
    %2618 = vmatprep.mubr.f32.mxu0 0.0
    %2619 = vmatmul.mubr.f32.gmra.mrb[0].mxu0 %v372
    %v2620 = vpop.f32.mrb[0].mxu0
    %v2621 = vadd.f32 %v162, %v2620
    %v2622 = vpop.f32.mrb[0].mxu0
    %2623 = vmatprep.mubr.f32.mxu0 0.0
    %2624 = vmatmul.mubr.f32.gmra.mrb[0].mxu0 %v375
    %v2625 = vpop.f32.mrb[0].mxu0
    %v2626 = vadd.f32 %v167, %v2625
    %v2627 = vpop.f32.mrb[0].mxu0
    %2628 = vmatprep.mubr.f32.mxu0 0.0
    %2629 = vmatmul.mubr.f32.gmra.mrb[0].mxu0 %v378
    %v2630 = vpop.f32.mrb[0].mxu0
    %v2631 = vadd.f32 %v172, %v2630
    %v2632 = vpop.f32.mrb[0].mxu0
    %2633 = vmatprep.mubr.f32.mxu0 0.0
    %2634 = vmatmul.mubr.f32.gmra.mrb[0].mxu0 %v381
    %v2635 = vpop.f32.mrb[0].mxu0
    %v2636 = vadd.f32 %v177, %v2635
    %v2637 = vpop.f32.mrb[0].mxu0
    %2638 = vmatprep.mubr.f32.mxu0 0.0
    %2639 = vmatmul.mubr.f32.gmra.mrb[0].mxu0 %v384
    %v2640 = vpop.f32.mrb[0].mxu0
    %v2641 = vadd.f32 %v182, %v2640
    %v2642 = vpop.f32.mrb[0].mxu0
    %2643 = vmatprep.mubr.f32.mxu0 0.0
    %2644 = vmatmul.mubr.f32.gmra.mrb[0].mxu0 %v387
    %v2645 = vpop.f32.mrb[0].mxu0
    %v2646 = vadd.f32 %v187, %v2645
    %v2647 = vpop.f32.mrb[0].mxu0
    %2648 = vmatprep.mubr.f32.mxu0 0.0
    %2649 = vmatmul.mubr.f32.gmra.mrb[0].mxu0 %v390
    %v2650 = vpop.f32.mrb[0].mxu0
    %v2651 = vadd.f32 %v192, %v2650
    %v2652 = vpop.f32.mrb[0].mxu0
    %2653 = vmatprep.mubr.f32.mxu0 0.0
    %2654 = vmatmul.mubr.f32.gmra.mrb[0].mxu0 %v393
    %v2655 = vpop.f32.mrb[0].mxu0
    %v2656 = vadd.f32 %v197, %v2655
    %v2657 = vpop.f32.mrb[0].mxu0
    %2658 = vmatprep.mubr.f32.mxu0 0.0
    %2659 = vmatmul.mubr.f32.gmra.mrb[0].mxu0 %v396
    %v2660 = vpop.f32.mrb[0].mxu0
    %v2661 = vadd.f32 %v202, %v2660
    %v2662 = vpop.f32.mrb[0].mxu0
    %2663 = vmatprep.mubr.f32.mxu0 0.0
    %2664 = vmatmul.mubr.f32.gmra.mrb[0].mxu0 %v399
    %v2665 = vpop.f32.mrb[0].mxu0
    %v2666 = vadd.f32 %v207, %v2665
    %v2667 = vpop.f32.mrb[0].mxu0
    %2668 = vmatprep.mubr.f32.mxu0 0.0
    %2669 = vmatmul.mubr.f32.gmra.mrb[0].mxu0 %v402
    %v2670 = vpop.f32.mrb[0].mxu0
    %v2671 = vadd.f32 %v212, %v2670
    %v2672 = vpop.f32.mrb[0].mxu0
    %2673 = vdwg.mxu0
    %2674 = vmatprep.subr.mxu0 0.0
    %2675 = vmatpush1.msra.mxu0 %v2408
    %2676 = vmatprep.subr.mxu0 0.0
    %2677 = vmatpush1.msra.mxu0 %v2409
    %2678 = vmatprep.subr.mxu0 0.0
    %2679 = vmatpush1.msra.mxu0 %v2410
    %2680 = vmatprep.subr.mxu0 0.0
    %2681 = vmatpush1.msra.mxu0 %v2411
    %2682 = vmatprep.subr.mxu0 0.0
    %2683 = vmatpush1.msra.mxu0 0.0
    %2684 = vmatprep.subr.mxu0 0.0
    %2685 = vmatpush1.msra.mxu0 0.0
    %2686 = vmatprep.subr.mxu0 0.0
    %2687 = vmatpush1.msra.mxu0 0.0
    %2688 = vmatprep.subr.mxu0 0.0
    %2689 = vmatpush1.msra.mxu0 0.0
    %2690 = vmatprep.subr.mxu0 0.0
    %2691 = vmatpush1.msra.mxu0 0.0
    %2692 = vmatprep.subr.mxu0 0.0
    %2693 = vmatpush1.msra.mxu0 0.0
    %2694 = vmatprep.subr.mxu0 0.0
    %2695 = vmatpush1.msra.mxu0 0.0
    %2696 = vmatprep.subr.mxu0 0.0
    %2697 = vmatpush1.msra.mxu0 0.0
    %2698 = vmatprep.subr.mxu0 0.0
    %2699 = vmatpush1.msra.mxu0 0.0
    %2700 = vmatprep.subr.mxu0 0.0
    %2701 = vmatpush1.msra.mxu0 0.0
    %2702 = vmatprep.subr.mxu0 0.0
    %2703 = vmatpush1.msra.mxu0 0.0
    %2704 = vmatprep.subr.mxu0 0.0
    %2705 = vmatpush1.msra.mxu0 0.0
    %2706 = vmatprep.subr.mxu0 0.0
    %2707 = vmatpush1.msra.mxu0 0.0
    %2708 = vmatprep.subr.mxu0 0.0
    %2709 = vmatpush1.msra.mxu0 0.0
    %2710 = vmatprep.subr.mxu0 0.0
    %2711 = vmatpush1.msra.mxu0 0.0
    %2712 = vmatprep.subr.mxu0 0.0
    %2713 = vmatpush1.msra.mxu0 0.0
    %2714 = vmatprep.subr.mxu0 0.0
    %2715 = vmatpush1.msra.mxu0 0.0
    %2716 = vmatprep.subr.mxu0 0.0
    %2717 = vmatpush1.msra.mxu0 0.0
    %2718 = vmatprep.subr.mxu0 0.0
    %2719 = vmatpush1.msra.mxu0 0.0
    %2720 = vmatprep.subr.mxu0 0.0
    %2721 = vmatpush1.msra.mxu0 0.0
    %2722 = vmatprep.subr.mxu0 0.0
    %2723 = vmatpush1.msra.mxu0 0.0
    %2724 = vmatprep.subr.mxu0 0.0
    %2725 = vmatpush1.msra.mxu0 0.0
    %2726 = vmatprep.subr.mxu0 0.0
    %2727 = vmatpush1.msra.mxu0 0.0
    %2728 = vmatprep.subr.mxu0 0.0
    %2729 = vmatpush1.msra.mxu0 0.0
    %2730 = vmatprep.subr.mxu0 0.0
    %2731 = vmatpush1.msra.mxu0 0.0
    %2732 = vmatprep.subr.mxu0 0.0
    %2733 = vmatpush1.msra.mxu0 0.0
    %2734 = vmatprep.subr.mxu0 0.0
    %2735 = vmatpush1.msra.mxu0 0.0
    %2736 = vmatprep.subr.mxu0 0.0
    %2737 = vmatpush1.msra.mxu0 0.0
    %2738 = vmatprep.mubr.f32.mxu0 0.0
    %2739 = vmatmul.mubr.f32.gmra.mrb[0].mxu0 %v551
    %v2740 = vpop.f32.mrb[0].mxu0
    %v2741 = vadd.f32 0.0, %v2740
    %v2742 = vpop.f32.mrb[0].mxu0
    %2743 = vmatprep.mubr.f32.mxu0 0.0
    %2744 = vmatmul.mubr.f32.gmra.mrb[0].mxu0 %v554
    %v2745 = vpop.f32.mrb[0].mxu0
    %v2746 = vadd.f32 0.0, %v2745
    %v2747 = vpop.f32.mrb[0].mxu0
    %2748 = vmatprep.mubr.f32.mxu0 0.0
    %2749 = vmatmul.mubr.f32.gmra.mrb[0].mxu0 %v557
    %v2750 = vpop.f32.mrb[0].mxu0
    %v2751 = vadd.f32 0.0, %v2750
    %v2752 = vpop.f32.mrb[0].mxu0
    %2753 = vmatprep.mubr.f32.mxu0 0.0
    %2754 = vmatmul.mubr.f32.gmra.mrb[0].mxu0 %v560
    %v2755 = vpop.f32.mrb[0].mxu0
    %v2756 = vadd.f32 0.0, %v2755
    %v2757 = vpop.f32.mrb[0].mxu0
    %2758 = vmatprep.mubr.f32.mxu0 0.0
    %2759 = vmatmul.mubr.f32.gmra.mrb[0].mxu0 %v563
    %v2760 = vpop.f32.mrb[0].mxu0
    %v2761 = vadd.f32 0.0, %v2760
    %v2762 = vpop.f32.mrb[0].mxu0
    %2763 = vmatprep.mubr.f32.mxu0 0.0
    %2764 = vmatmul.mubr.f32.gmra.mrb[0].mxu0 %v566
    %v2765 = vpop.f32.mrb[0].mxu0
    %v2766 = vadd.f32 0.0, %v2765
    %v2767 = vpop.f32.mrb[0].mxu0
    %2768 = vmatprep.mubr.f32.mxu0 0.0
    %2769 = vmatmul.mubr.f32.gmra.mrb[0].mxu0 %v569
    %v2770 = vpop.f32.mrb[0].mxu0
    %v2771 = vadd.f32 0.0, %v2770
    %v2772 = vpop.f32.mrb[0].mxu0
    %2773 = vmatprep.mubr.f32.mxu0 0.0
    %2774 = vmatmul.mubr.f32.gmra.mrb[0].mxu0 %v572
    %v2775 = vpop.f32.mrb[0].mxu0
    %v2776 = vadd.f32 0.0, %v2775
    %v2777 = vpop.f32.mrb[0].mxu0
    %2778 = vmatprep.mubr.f32.mxu0 0.0
    %2779 = vmatmul.mubr.f32.gmra.mrb[0].mxu0 %v575
    %v2780 = vpop.f32.mrb[0].mxu0
    %v2781 = vadd.f32 0.0, %v2780
    %v2782 = vpop.f32.mrb[0].mxu0
    %2783 = vmatprep.mubr.f32.mxu0 0.0
    %2784 = vmatmul.mubr.f32.gmra.mrb[0].mxu0 %v578
    %v2785 = vpop.f32.mrb[0].mxu0
    %v2786 = vadd.f32 0.0, %v2785
    %v2787 = vpop.f32.mrb[0].mxu0
    %2788 = vmatprep.mubr.f32.mxu0 0.0
    %2789 = vmatmul.mubr.f32.gmra.mrb[0].mxu0 %v581
    %v2790 = vpop.f32.mrb[0].mxu0
    %v2791 = vadd.f32 0.0, %v2790
    %v2792 = vpop.f32.mrb[0].mxu0
    %2793 = vmatprep.mubr.f32.mxu0 0.0
    %2794 = vmatmul.mubr.f32.gmra.mrb[0].mxu0 %v584
    %v2795 = vpop.f32.mrb[0].mxu0
    %v2796 = vadd.f32 0.0, %v2795
    %v2797 = vpop.f32.mrb[0].mxu0
    %2798 = vmatprep.mubr.f32.mxu0 0.0
    %2799 = vmatmul.mubr.f32.gmra.mrb[0].mxu0 %v587
    %v2800 = vpop.f32.mrb[0].mxu0
    %v2801 = vadd.f32 0.0, %v2800
    %v2802 = vpop.f32.mrb[0].mxu0
    %2803 = vmatprep.mubr.f32.mxu0 0.0
    %2804 = vmatmul.mubr.f32.gmra.mrb[0].mxu0 %v590
    %v2805 = vpop.f32.mrb[0].mxu0
    %v2806 = vadd.f32 0.0, %v2805
    %v2807 = vpop.f32.mrb[0].mxu0
    %2808 = vmatprep.mubr.f32.mxu0 0.0
    %2809 = vmatmul.mubr.f32.gmra.mrb[0].mxu0 %v593
    %v2810 = vpop.f32.mrb[0].mxu0
    %v2811 = vadd.f32 0.0, %v2810
    %v2812 = vpop.f32.mrb[0].mxu0
    %2813 = vmatprep.mubr.f32.mxu0 0.0
    %2814 = vmatmul.mubr.f32.gmra.mrb[0].mxu0 %v596
    %v2815 = vpop.f32.mrb[0].mxu0
    %v2816 = vadd.f32 0.0, %v2815
    %v2817 = vpop.f32.mrb[0].mxu0
    %2818 = vdwg.mxu0
    %v2819 = vadd.f32 %v2596, %v2741
    %v2820 = vadd.f32 %v2601, %v2746
    %v2821 = vadd.f32 %v2606, %v2751
    %v2822 = vadd.f32 %v2611, %v2756
    %v2823 = vadd.f32 %v2616, %v2761
    %v2824 = vadd.f32 %v2621, %v2766
    %v2825 = vadd.f32 %v2626, %v2771
    %v2826 = vadd.f32 %v2631, %v2776
    %v2827 = vadd.f32 %v2636, %v2781
    %v2828 = vadd.f32 %v2641, %v2786
    %v2829 = vadd.f32 %v2646, %v2791
    %v2830 = vadd.f32 %v2651, %v2796
    %v2831 = vadd.f32 %v2656, %v2801
    %v2832 = vadd.f32 %v2661, %v2806
    %v2833 = vadd.f32 %v2666, %v2811
    %v2834 = vadd.f32 %v2671, %v2816
    %v2835 = vxor.u32 %v2819, 2147483648
    %v2836 = vxor.u32 %v2820, 2147483648
    %v2837 = vxor.u32 %v2821, 2147483648
    %v2838 = vxor.u32 %v2822, 2147483648
    %v2839 = vmul.f32 %v2835, 1.442695
    %v2840 = vpow.pop %v2839
    %v2841 = vmul.f32 %v2836, 1.442695
    %v2842 = vpow.pop %v2841
    %v2843 = vmul.f32 %v2837, 1.442695
    %v2844 = vpow.pop %v2843
    %v2845 = vmul.f32 %v2838, 1.442695
    %v2846 = vpow.pop %v2845
    %v2847 = vadd.f32 %v2840, 1.0
    %v2848 = vadd.f32 %v2842, 1.0
    %v2849 = vadd.f32 %v2844, 1.0
    %v2850 = vadd.f32 %v2846, 1.0
    %v2851 = vrcp.pop %v2847
    %v2852 = vmul.f32 1.0, %v2851
    %v2853 = vrcp.pop %v2848
    %v2854 = vmul.f32 1.0, %v2853
    %v2855 = vrcp.pop %v2849
    %v2856 = vmul.f32 1.0, %v2855
    %v2857 = vrcp.pop %v2850
    %v2858 = vmul.f32 1.0, %v2857
    %v2859 = vxor.u32 %v2823, 2147483648
    %v2860 = vxor.u32 %v2824, 2147483648
    %v2861 = vxor.u32 %v2825, 2147483648
    %v2862 = vxor.u32 %v2826, 2147483648
    %v2863 = vmul.f32 %v2859, 1.442695
    %v2864 = vpow.pop %v2863
    %v2865 = vmul.f32 %v2860, 1.442695
    %v2866 = vpow.pop %v2865
    %v2867 = vmul.f32 %v2861, 1.442695
    %v2868 = vpow.pop %v2867
    %v2869 = vmul.f32 %v2862, 1.442695
    %v2870 = vpow.pop %v2869
    %v2871 = vadd.f32 %v2864, 1.0
    %v2872 = vadd.f32 %v2866, 1.0
    %v2873 = vadd.f32 %v2868, 1.0
    %v2874 = vadd.f32 %v2870, 1.0
    %v2875 = vrcp.pop %v2871
    %v2876 = vmul.f32 1.0, %v2875
    %v2877 = vrcp.pop %v2872
    %v2878 = vmul.f32 1.0, %v2877
    %v2879 = vrcp.pop %v2873
    %v2880 = vmul.f32 1.0, %v2879
    %v2881 = vrcp.pop %v2874
    %v2882 = vmul.f32 1.0, %v2881
    %v2883 = vtanh.pop %v2827
    %v2884 = vtanh.pop %v2828
    %v2885 = vtanh.pop %v2829
    %v2886 = vtanh.pop %v2830
    %v2887 = vxor.u32 %v2831, 2147483648
    %v2888 = vxor.u32 %v2832, 2147483648
    %v2889 = vxor.u32 %v2833, 2147483648
    %v2890 = vxor.u32 %v2834, 2147483648
    %v2891 = vmul.f32 %v2887, 1.442695
    %v2892 = vpow.pop %v2891
    %v2893 = vmul.f32 %v2888, 1.442695
    %v2894 = vpow.pop %v2893
    %v2895 = vmul.f32 %v2889, 1.442695
    %v2896 = vpow.pop %v2895
    %v2897 = vmul.f32 %v2890, 1.442695
    %v2898 = vpow.pop %v2897
    %v2899 = vadd.f32 %v2892, 1.0
    %v2900 = vadd.f32 %v2894, 1.0
    %v2901 = vadd.f32 %v2896, 1.0
    %v2902 = vadd.f32 %v2898, 1.0
    %v2903 = vrcp.pop %v2899
    %v2904 = vmul.f32 1.0, %v2903
    %v2905 = vrcp.pop %v2900
    %v2906 = vmul.f32 1.0, %v2905
    %v2907 = vrcp.pop %v2901
    %v2908 = vmul.f32 1.0, %v2907
    %v2909 = vrcp.pop %v2902
    %v2910 = vmul.f32 1.0, %v2909
    %v2911 = vmul.f32 %v2876, %v2400
    %v2912 = vmul.f32 %v2878, %v2401
    %v2913 = vmul.f32 %v2880, %v2402
    %v2914 = vmul.f32 %v2882, %v2403
    %v2915 = vmul.f32 %v2852, %v2883
    %v2916 = vmul.f32 %v2854, %v2884
    %v2917 = vmul.f32 %v2856, %v2885
    %v2918 = vmul.f32 %v2858, %v2886
    %v2919 = vadd.f32 %v2911, %v2915
    %v2920 = vadd.f32 %v2912, %v2916
    %v2921 = vadd.f32 %v2913, %v2917
    %v2922 = vadd.f32 %v2914, %v2918
    %v2923 = vtanh.pop %v2919
    %v2924 = vtanh.pop %v2920
    %v2925 = vtanh.pop %v2921
    %v2926 = vtanh.pop %v2922
    %v2927 = vmul.f32 %v2904, %v2923
    %v2928 = vmul.f32 %v2906, %v2924
    %v2929 = vmul.f32 %v2908, %v2925
    %v2930 = vmul.f32 %v2910, %v2926
    %s2931 = scalar_lea.vmem %s0, 40
    %v2932 = vld [vmem:[%s2931] sm:$0xff]
    %v2933 = vld [vmem:[%s2931 + $0x8] sm:$0xff]
    %v2934 = vld [vmem:[%s2931 + $0x10] sm:$0xff]
    %2935 = vmatprep.subr.mxu0 0.0
    %2936 = vmatpush1.msra.mxu0 %v2932
    %2937 = vmatprep.subr.mxu0 0.0
    %2938 = vmatpush1.msra.mxu0 %v2933
    %2939 = vmatprep.subr.mxu0 0.0
    %2940 = vmatpush1.msra.mxu0 %v2934
    %2941 = vmatprep.subr.mxu0 0.0
    %2942 = vmatpush1.msra.mxu0 0.0
    %2943 = vmatprep.subr.mxu0 0.0
    %2944 = vmatpush1.msra.mxu0 0.0
    %2945 = vmatprep.subr.mxu0 0.0
    %2946 = vmatpush1.msra.mxu0 0.0
    %2947 = vmatprep.subr.mxu0 0.0
    %2948 = vmatpush1.msra.mxu0 0.0
    %2949 = vmatprep.subr.mxu0 0.0
    %2950 = vmatpush1.msra.mxu0 0.0
    %2951 = vmatprep.subr.mxu0 0.0
    %2952 = vmatpush1.msra.mxu0 0.0
    %2953 = vmatprep.subr.mxu0 0.0
    %2954 = vmatpush1.msra.mxu0 0.0
    %2955 = vmatprep.subr.mxu0 0.0
    %2956 = vmatpush1.msra.mxu0 0.0
    %2957 = vmatprep.subr.mxu0 0.0
    %2958 = vmatpush1.msra.mxu0 0.0
    %2959 = vmatprep.subr.mxu0 0.0
    %2960 = vmatpush1.msra.mxu0 0.0
    %2961 = vmatprep.subr.mxu0 0.0
    %2962 = vmatpush1.msra.mxu0 0.0
    %2963 = vmatprep.subr.mxu0 0.0
    %2964 = vmatpush1.msra.mxu0 0.0
    %2965 = vmatprep.subr.mxu0 0.0
    %2966 = vmatpush1.msra.mxu0 0.0
    %2967 = vmatprep.subr.mxu0 0.0
    %2968 = vmatpush1.msra.mxu0 0.0
    %2969 = vmatprep.subr.mxu0 0.0
    %2970 = vmatpush1.msra.mxu0 0.0
    %2971 = vmatprep.subr.mxu0 0.0
    %2972 = vmatpush1.msra.mxu0 0.0
    %2973 = vmatprep.subr.mxu0 0.0
    %2974 = vmatpush1.msra.mxu0 0.0
    %2975 = vmatprep.subr.mxu0 0.0
    %2976 = vmatpush1.msra.mxu0 0.0
    %2977 = vmatprep.subr.mxu0 0.0
    %2978 = vmatpush1.msra.mxu0 0.0
    %2979 = vmatprep.subr.mxu0 0.0
    %2980 = vmatpush1.msra.mxu0 0.0
    %2981 = vmatprep.subr.mxu0 0.0
    %2982 = vmatpush1.msra.mxu0 0.0
    %2983 = vmatprep.subr.mxu0 0.0
    %2984 = vmatpush1.msra.mxu0 0.0
    %2985 = vmatprep.subr.mxu0 0.0
    %2986 = vmatpush1.msra.mxu0 0.0
    %2987 = vmatprep.subr.mxu0 0.0
    %2988 = vmatpush1.msra.mxu0 0.0
    %2989 = vmatprep.subr.mxu0 0.0
    %2990 = vmatpush1.msra.mxu0 0.0
    %2991 = vmatprep.subr.mxu0 0.0
    %2992 = vmatpush1.msra.mxu0 0.0
    %2993 = vmatprep.subr.mxu0 0.0
    %2994 = vmatpush1.msra.mxu0 0.0
    %2995 = vmatprep.subr.mxu0 0.0
    %2996 = vmatpush1.msra.mxu0 0.0
    %2997 = vmatprep.subr.mxu0 0.0
    %2998 = vmatpush1.msra.mxu0 0.0
    %2999 = vmatprep.mubr.f32.mxu0 0.0
    %3000 = vmatmul.mubr.f32.gmra.mrb[0].mxu0 %v219
    %v3001 = vpop.f32.mrb[0].mxu0
    %v3002 = vadd.f32 %v81, %v3001
    %v3003 = vpop.f32.mrb[0].mxu0
    %3004 = vmatprep.mubr.f32.mxu0 0.0
    %3005 = vmatmul.mubr.f32.gmra.mrb[0].mxu0 %v222
    %v3006 = vpop.f32.mrb[0].mxu0
    %v3007 = vadd.f32 %v86, %v3006
    %v3008 = vpop.f32.mrb[0].mxu0
    %3009 = vmatprep.mubr.f32.mxu0 0.0
    %3010 = vmatmul.mubr.f32.gmra.mrb[0].mxu0 %v225
    %v3011 = vpop.f32.mrb[0].mxu0
    %v3012 = vadd.f32 %v91, %v3011
    %v3013 = vpop.f32.mrb[0].mxu0
    %3014 = vmatprep.mubr.f32.mxu0 0.0
    %3015 = vmatmul.mubr.f32.gmra.mrb[0].mxu0 %v228
    %v3016 = vpop.f32.mrb[0].mxu0
    %v3017 = vadd.f32 %v96, %v3016
    %v3018 = vpop.f32.mrb[0].mxu0
    %3019 = vmatprep.mubr.f32.mxu0 0.0
    %3020 = vmatmul.mubr.f32.gmra.mrb[0].mxu0 %v231
    %v3021 = vpop.f32.mrb[0].mxu0
    %v3022 = vadd.f32 %v101, %v3021
    %v3023 = vpop.f32.mrb[0].mxu0
    %3024 = vmatprep.mubr.f32.mxu0 0.0
    %3025 = vmatmul.mubr.f32.gmra.mrb[0].mxu0 %v234
    %v3026 = vpop.f32.mrb[0].mxu0
    %v3027 = vadd.f32 %v106, %v3026
    %v3028 = vpop.f32.mrb[0].mxu0
    %3029 = vmatprep.mubr.f32.mxu0 0.0
    %3030 = vmatmul.mubr.f32.gmra.mrb[0].mxu0 %v237
    %v3031 = vpop.f32.mrb[0].mxu0
    %v3032 = vadd.f32 %v111, %v3031
    %v3033 = vpop.f32.mrb[0].mxu0
    %3034 = vmatprep.mubr.f32.mxu0 0.0
    %3035 = vmatmul.mubr.f32.gmra.mrb[0].mxu0 %v240
    %v3036 = vpop.f32.mrb[0].mxu0
    %v3037 = vadd.f32 %v116, %v3036
    %v3038 = vpop.f32.mrb[0].mxu0
    %3039 = vdwg.mxu0
    %v3040 = vmax.f32 %v3002, 0.0
    %v3041 = vmax.f32 %v3007, 0.0
    %v3042 = vmax.f32 %v3012, 0.0
    %v3043 = vmax.f32 %v3017, 0.0
    %v3044 = vmax.f32 %v3022, 0.0
    %v3045 = vmax.f32 %v3027, 0.0
    %v3046 = vmax.f32 %v3032, 0.0
    %v3047 = vmax.f32 %v3037, 0.0
    %3048 = vmatprep.subr.mxu0 0.0
    %3049 = vmatpush1.msra.mxu0 %v3040
    %3050 = vmatprep.subr.mxu0 0.0
    %3051 = vmatpush1.msra.mxu0 %v3041
    %3052 = vmatprep.subr.mxu0 0.0
    %3053 = vmatpush1.msra.mxu0 %v3042
    %3054 = vmatprep.subr.mxu0 0.0
    %3055 = vmatpush1.msra.mxu0 %v3043
    %3056 = vmatprep.subr.mxu0 0.0
    %3057 = vmatpush1.msra.mxu0 %v3044
    %3058 = vmatprep.subr.mxu0 0.0
    %3059 = vmatpush1.msra.mxu0 %v3045
    %3060 = vmatprep.subr.mxu0 0.0
    %3061 = vmatpush1.msra.mxu0 %v3046
    %3062 = vmatprep.subr.mxu0 0.0
    %3063 = vmatpush1.msra.mxu0 %v3047
    %3064 = vmatprep.subr.mxu0 0.0
    %3065 = vmatpush1.msra.mxu0 0.0
    %3066 = vmatprep.subr.mxu0 0.0
    %3067 = vmatpush1.msra.mxu0 0.0
    %3068 = vmatprep.subr.mxu0 0.0
    %3069 = vmatpush1.msra.mxu0 0.0
    %3070 = vmatprep.subr.mxu0 0.0
    %3071 = vmatpush1.msra.mxu0 0.0
    %3072 = vmatprep.subr.mxu0 0.0
    %3073 = vmatpush1.msra.mxu0 0.0
    %3074 = vmatprep.subr.mxu0 0.0
    %3075 = vmatpush1.msra.mxu0 0.0
    %3076 = vmatprep.subr.mxu0 0.0
    %3077 = vmatpush1.msra.mxu0 0.0
    %3078 = vmatprep.subr.mxu0 0.0
    %3079 = vmatpush1.msra.mxu0 0.0
    %3080 = vmatprep.subr.mxu0 0.0
    %3081 = vmatpush1.msra.mxu0 0.0
    %3082 = vmatprep.subr.mxu0 0.0
    %3083 = vmatpush1.msra.mxu0 0.0
    %3084 = vmatprep.subr.mxu0 0.0
    %3085 = vmatpush1.msra.mxu0 0.0
    %3086 = vmatprep.subr.mxu0 0.0
    %3087 = vmatpush1.msra.mxu0 0.0
    %3088 = vmatprep.subr.mxu0 0.0
    %3089 = vmatpush1.msra.mxu0 0.0
    %3090 = vmatprep.subr.mxu0 0.0
    %3091 = vmatpush1.msra.mxu0 0.0
    %3092 = vmatprep.subr.mxu0 0.0
    %3093 = vmatpush1.msra.mxu0 0.0
    %3094 = vmatprep.subr.mxu0 0.0
    %3095 = vmatpush1.msra.mxu0 0.0
    %3096 = vmatprep.subr.mxu0 0.0
    %3097 = vmatpush1.msra.mxu0 0.0
    %3098 = vmatprep.subr.mxu0 0.0
    %3099 = vmatpush1.msra.mxu0 0.0
    %3100 = vmatprep.subr.mxu0 0.0
    %3101 = vmatpush1.msra.mxu0 0.0
    %3102 = vmatprep.subr.mxu0 0.0
    %3103 = vmatpush1.msra.mxu0 0.0
    %3104 = vmatprep.subr.mxu0 0.0
    %3105 = vmatpush1.msra.mxu0 0.0
    %3106 = vmatprep.subr.mxu0 0.0
    %3107 = vmatpush1.msra.mxu0 0.0
    %3108 = vmatprep.subr.mxu0 0.0
    %3109 = vmatpush1.msra.mxu0 0.0
    %3110 = vmatprep.subr.mxu0 0.0
    %3111 = vmatpush1.msra.mxu0 0.0
    %3112 = vmatprep.mubr.f32.mxu0 0.0
    %3113 = vmatmul.mubr.f32.gmra.mrb[0].mxu0 %v357
    %v3114 = vpop.f32.mrb[0].mxu0
    %v3115 = vadd.f32 %v137, %v3114
    %v3116 = vpop.f32.mrb[0].mxu0
    %3117 = vmatprep.mubr.f32.mxu0 0.0
    %3118 = vmatmul.mubr.f32.gmra.mrb[0].mxu0 %v360
    %v3119 = vpop.f32.mrb[0].mxu0
    %v3120 = vadd.f32 %v142, %v3119
    %v3121 = vpop.f32.mrb[0].mxu0
    %3122 = vmatprep.mubr.f32.mxu0 0.0
    %3123 = vmatmul.mubr.f32.gmra.mrb[0].mxu0 %v363
    %v3124 = vpop.f32.mrb[0].mxu0
    %v3125 = vadd.f32 %v147, %v3124
    %v3126 = vpop.f32.mrb[0].mxu0
    %3127 = vmatprep.mubr.f32.mxu0 0.0
    %3128 = vmatmul.mubr.f32.gmra.mrb[0].mxu0 %v366
    %v3129 = vpop.f32.mrb[0].mxu0
    %v3130 = vadd.f32 %v152, %v3129
    %v3131 = vpop.f32.mrb[0].mxu0
    %3132 = vmatprep.mubr.f32.mxu0 0.0
    %3133 = vmatmul.mubr.f32.gmra.mrb[0].mxu0 %v369
    %v3134 = vpop.f32.mrb[0].mxu0
    %v3135 = vadd.f32 %v157, %v3134
    %v3136 = vpop.f32.mrb[0].mxu0
    %3137 = vmatprep.mubr.f32.mxu0 0.0
    %3138 = vmatmul.mubr.f32.gmra.mrb[0].mxu0 %v372
    %v3139 = vpop.f32.mrb[0].mxu0
    %v3140 = vadd.f32 %v162, %v3139
    %v3141 = vpop.f32.mrb[0].mxu0
    %3142 = vmatprep.mubr.f32.mxu0 0.0
    %3143 = vmatmul.mubr.f32.gmra.mrb[0].mxu0 %v375
    %v3144 = vpop.f32.mrb[0].mxu0
    %v3145 = vadd.f32 %v167, %v3144
    %v3146 = vpop.f32.mrb[0].mxu0
    %3147 = vmatprep.mubr.f32.mxu0 0.0
    %3148 = vmatmul.mubr.f32.gmra.mrb[0].mxu0 %v378
    %v3149 = vpop.f32.mrb[0].mxu0
    %v3150 = vadd.f32 %v172, %v3149
    %v3151 = vpop.f32.mrb[0].mxu0
    %3152 = vmatprep.mubr.f32.mxu0 0.0
    %3153 = vmatmul.mubr.f32.gmra.mrb[0].mxu0 %v381
    %v3154 = vpop.f32.mrb[0].mxu0
    %v3155 = vadd.f32 %v177, %v3154
    %v3156 = vpop.f32.mrb[0].mxu0
    %3157 = vmatprep.mubr.f32.mxu0 0.0
    %3158 = vmatmul.mubr.f32.gmra.mrb[0].mxu0 %v384
    %v3159 = vpop.f32.mrb[0].mxu0
    %v3160 = vadd.f32 %v182, %v3159
    %v3161 = vpop.f32.mrb[0].mxu0
    %3162 = vmatprep.mubr.f32.mxu0 0.0
    %3163 = vmatmul.mubr.f32.gmra.mrb[0].mxu0 %v387
    %v3164 = vpop.f32.mrb[0].mxu0
    %v3165 = vadd.f32 %v187, %v3164
    %v3166 = vpop.f32.mrb[0].mxu0
    %3167 = vmatprep.mubr.f32.mxu0 0.0
    %3168 = vmatmul.mubr.f32.gmra.mrb[0].mxu0 %v390
    %v3169 = vpop.f32.mrb[0].mxu0
    %v3170 = vadd.f32 %v192, %v3169
    %v3171 = vpop.f32.mrb[0].mxu0
    %3172 = vmatprep.mubr.f32.mxu0 0.0
    %3173 = vmatmul.mubr.f32.gmra.mrb[0].mxu0 %v393
    %v3174 = vpop.f32.mrb[0].mxu0
    %v3175 = vadd.f32 %v197, %v3174
    %v3176 = vpop.f32.mrb[0].mxu0
    %3177 = vmatprep.mubr.f32.mxu0 0.0
    %3178 = vmatmul.mubr.f32.gmra.mrb[0].mxu0 %v396
    %v3179 = vpop.f32.mrb[0].mxu0
    %v3180 = vadd.f32 %v202, %v3179
    %v3181 = vpop.f32.mrb[0].mxu0
    %3182 = vmatprep.mubr.f32.mxu0 0.0
    %3183 = vmatmul.mubr.f32.gmra.mrb[0].mxu0 %v399
    %v3184 = vpop.f32.mrb[0].mxu0
    %v3185 = vadd.f32 %v207, %v3184
    %v3186 = vpop.f32.mrb[0].mxu0
    %3187 = vmatprep.mubr.f32.mxu0 0.0
    %3188 = vmatmul.mubr.f32.gmra.mrb[0].mxu0 %v402
    %v3189 = vpop.f32.mrb[0].mxu0
    %v3190 = vadd.f32 %v212, %v3189
    %v3191 = vpop.f32.mrb[0].mxu0
    %3192 = vdwg.mxu0
    %3193 = vmatprep.subr.mxu0 0.0
    %3194 = vmatpush1.msra.mxu0 %v2927
    %3195 = vmatprep.subr.mxu0 0.0
    %3196 = vmatpush1.msra.mxu0 %v2928
    %3197 = vmatprep.subr.mxu0 0.0
    %3198 = vmatpush1.msra.mxu0 %v2929
    %3199 = vmatprep.subr.mxu0 0.0
    %3200 = vmatpush1.msra.mxu0 %v2930
    %3201 = vmatprep.subr.mxu0 0.0
    %3202 = vmatpush1.msra.mxu0 0.0
    %3203 = vmatprep.subr.mxu0 0.0
    %3204 = vmatpush1.msra.mxu0 0.0
    %3205 = vmatprep.subr.mxu0 0.0
    %3206 = vmatpush1.msra.mxu0 0.0
    %3207 = vmatprep.subr.mxu0 0.0
    %3208 = vmatpush1.msra.mxu0 0.0
    %3209 = vmatprep.subr.mxu0 0.0
    %3210 = vmatpush1.msra.mxu0 0.0
    %3211 = vmatprep.subr.mxu0 0.0
    %3212 = vmatpush1.msra.mxu0 0.0
    %3213 = vmatprep.subr.mxu0 0.0
    %3214 = vmatpush1.msra.mxu0 0.0
    %3215 = vmatprep.subr.mxu0 0.0
    %3216 = vmatpush1.msra.mxu0 0.0
    %3217 = vmatprep.subr.mxu0 0.0
    %3218 = vmatpush1.msra.mxu0 0.0
    %3219 = vmatprep.subr.mxu0 0.0
    %3220 = vmatpush1.msra.mxu0 0.0
    %3221 = vmatprep.subr.mxu0 0.0
    %3222 = vmatpush1.msra.mxu0 0.0
    %3223 = vmatprep.subr.mxu0 0.0
    %3224 = vmatpush1.msra.mxu0 0.0
    %3225 = vmatprep.subr.mxu0 0.0
    %3226 = vmatpush1.msra.mxu0 0.0
    %3227 = vmatprep.subr.mxu0 0.0
    %3228 = vmatpush1.msra.mxu0 0.0
    %3229 = vmatprep.subr.mxu0 0.0
    %3230 = vmatpush1.msra.mxu0 0.0
    %3231 = vmatprep.subr.mxu0 0.0
    %3232 = vmatpush1.msra.mxu0 0.0
    %3233 = vmatprep.subr.mxu0 0.0
    %3234 = vmatpush1.msra.mxu0 0.0
    %3235 = vmatprep.subr.mxu0 0.0
    %3236 = vmatpush1.msra.mxu0 0.0
    %3237 = vmatprep.subr.mxu0 0.0
    %3238 = vmatpush1.msra.mxu0 0.0
    %3239 = vmatprep.subr.mxu0 0.0
    %3240 = vmatpush1.msra.mxu0 0.0
    %3241 = vmatprep.subr.mxu0 0.0
    %3242 = vmatpush1.msra.mxu0 0.0
    %3243 = vmatprep.subr.mxu0 0.0
    %3244 = vmatpush1.msra.mxu0 0.0
    %3245 = vmatprep.subr.mxu0 0.0
    %3246 = vmatpush1.msra.mxu0 0.0
    %3247 = vmatprep.subr.mxu0 0.0
    %3248 = vmatpush1.msra.mxu0 0.0
    %3249 = vmatprep.subr.mxu0 0.0
    %3250 = vmatpush1.msra.mxu0 0.0
    %3251 = vmatprep.subr.mxu0 0.0
    %3252 = vmatpush1.msra.mxu0 0.0
    %3253 = vmatprep.subr.mxu0 0.0
    %3254 = vmatpush1.msra.mxu0 0.0
    %3255 = vmatprep.subr.mxu0 0.0
    %3256 = vmatpush1.msra.mxu0 0.0
    %3257 = vmatprep.mubr.f32.mxu0 0.0
    %3258 = vmatmul.mubr.f32.gmra.mrb[0].mxu0 %v551
    %v3259 = vpop.f32.mrb[0].mxu0
    %v3260 = vadd.f32 0.0, %v3259
    %v3261 = vpop.f32.mrb[0].mxu0
    %3262 = vmatprep.mubr.f32.mxu0 0.0
    %3263 = vmatmul.mubr.f32.gmra.mrb[0].mxu0 %v554
    %v3264 = vpop.f32.mrb[0].mxu0
    %v3265 = vadd.f32 0.0, %v3264
    %v3266 = vpop.f32.mrb[0].mxu0
    %3267 = vmatprep.mubr.f32.mxu0 0.0
    %3268 = vmatmul.mubr.f32.gmra.mrb[0].mxu0 %v557
    %v3269 = vpop.f32.mrb[0].mxu0
    %v3270 = vadd.f32 0.0, %v3269
    %v3271 = vpop.f32.mrb[0].mxu0
    %3272 = vmatprep.mubr.f32.mxu0 0.0
    %3273 = vmatmul.mubr.f32.gmra.mrb[0].mxu0 %v560
    %v3274 = vpop.f32.mrb[0].mxu0
    %v3275 = vadd.f32 0.0, %v3274
    %v3276 = vpop.f32.mrb[0].mxu0
    %3277 = vmatprep.mubr.f32.mxu0 0.0
    %3278 = vmatmul.mubr.f32.gmra.mrb[0].mxu0 %v563
    %v3279 = vpop.f32.mrb[0].mxu0
    %v3280 = vadd.f32 0.0, %v3279
    %v3281 = vpop.f32.mrb[0].mxu0
    %3282 = vmatprep.mubr.f32.mxu0 0.0
    %3283 = vmatmul.mubr.f32.gmra.mrb[0].mxu0 %v566
    %v3284 = vpop.f32.mrb[0].mxu0
    %v3285 = vadd.f32 0.0, %v3284
    %v3286 = vpop.f32.mrb[0].mxu0
    %3287 = vmatprep.mubr.f32.mxu0 0.0
    %3288 = vmatmul.mubr.f32.gmra.mrb[0].mxu0 %v569
    %v3289 = vpop.f32.mrb[0].mxu0
    %v3290 = vadd.f32 0.0, %v3289
    %v3291 = vpop.f32.mrb[0].mxu0
    %3292 = vmatprep.mubr.f32.mxu0 0.0
    %3293 = vmatmul.mubr.f32.gmra.mrb[0].mxu0 %v572
    %v3294 = vpop.f32.mrb[0].mxu0
    %v3295 = vadd.f32 0.0, %v3294
    %v3296 = vpop.f32.mrb[0].mxu0
    %3297 = vmatprep.mubr.f32.mxu0 0.0
    %3298 = vmatmul.mubr.f32.gmra.mrb[0].mxu0 %v575
    %v3299 = vpop.f32.mrb[0].mxu0
    %v3300 = vadd.f32 0.0, %v3299
    %v3301 = vpop.f32.mrb[0].mxu0
    %3302 = vmatprep.mubr.f32.mxu0 0.0
    %3303 = vmatmul.mubr.f32.gmra.mrb[0].mxu0 %v578
    %v3304 = vpop.f32.mrb[0].mxu0
    %v3305 = vadd.f32 0.0, %v3304
    %v3306 = vpop.f32.mrb[0].mxu0
    %3307 = vmatprep.mubr.f32.mxu0 0.0
    %3308 = vmatmul.mubr.f32.gmra.mrb[0].mxu0 %v581
    %v3309 = vpop.f32.mrb[0].mxu0
    %v3310 = vadd.f32 0.0, %v3309
    %v3311 = vpop.f32.mrb[0].mxu0
    %3312 = vmatprep.mubr.f32.mxu0 0.0
    %3313 = vmatmul.mubr.f32.gmra.mrb[0].mxu0 %v584
    %v3314 = vpop.f32.mrb[0].mxu0
    %v3315 = vadd.f32 0.0, %v3314
    %v3316 = vpop.f32.mrb[0].mxu0
    %3317 = vmatprep.mubr.f32.mxu0 0.0
    %3318 = vmatmul.mubr.f32.gmra.mrb[0].mxu0 %v587
    %v3319 = vpop.f32.mrb[0].mxu0
    %v3320 = vadd.f32 0.0, %v3319
    %v3321 = vpop.f32.mrb[0].mxu0
    %3322 = vmatprep.mubr.f32.mxu0 0.0
    %3323 = vmatmul.mubr.f32.gmra.mrb[0].mxu0 %v590
    %v3324 = vpop.f32.mrb[0].mxu0
    %v3325 = vadd.f32 0.0, %v3324
    %v3326 = vpop.f32.mrb[0].mxu0
    %3327 = vmatprep.mubr.f32.mxu0 0.0
    %3328 = vmatmul.mubr.f32.gmra.mrb[0].mxu0 %v593
    %v3329 = vpop.f32.mrb[0].mxu0
    %v3330 = vadd.f32 0.0, %v3329
    %v3331 = vpop.f32.mrb[0].mxu0
    %3332 = vmatprep.mubr.f32.mxu0 0.0
    %3333 = vmatmul.mubr.f32.gmra.mrb[0].mxu0 %v596
    %v3334 = vpop.f32.mrb[0].mxu0
    %v3335 = vadd.f32 0.0, %v3334
    %v3336 = vpop.f32.mrb[0].mxu0
    %3337 = vdwg.mxu0
    %v3338 = vadd.f32 %v3115, %v3260
    %v3339 = vadd.f32 %v3120, %v3265
    %v3340 = vadd.f32 %v3125, %v3270
    %v3341 = vadd.f32 %v3130, %v3275
    %v3342 = vadd.f32 %v3135, %v3280
    %v3343 = vadd.f32 %v3140, %v3285
    %v3344 = vadd.f32 %v3145, %v3290
    %v3345 = vadd.f32 %v3150, %v3295
    %v3346 = vadd.f32 %v3155, %v3300
    %v3347 = vadd.f32 %v3160, %v3305
    %v3348 = vadd.f32 %v3165, %v3310
    %v3349 = vadd.f32 %v3170, %v3315
    %v3350 = vadd.f32 %v3175, %v3320
    %v3351 = vadd.f32 %v3180, %v3325
    %v3352 = vadd.f32 %v3185, %v3330
    %v3353 = vadd.f32 %v3190, %v3335
    %v3354 = vxor.u32 %v3338, 2147483648
    %v3355 = vxor.u32 %v3339, 2147483648
    %v3356 = vxor.u32 %v3340, 2147483648
    %v3357 = vxor.u32 %v3341, 2147483648
    %v3358 = vmul.f32 %v3354, 1.442695
    %v3359 = vpow.pop %v3358
    %v3360 = vmul.f32 %v3355, 1.442695
    %v3361 = vpow.pop %v3360
    %v3362 = vmul.f32 %v3356, 1.442695
    %v3363 = vpow.pop %v3362
    %v3364 = vmul.f32 %v3357, 1.442695
    %v3365 = vpow.pop %v3364
    %v3366 = vadd.f32 %v3359, 1.0
    %v3367 = vadd.f32 %v3361, 1.0
    %v3368 = vadd.f32 %v3363, 1.0
    %v3369 = vadd.f32 %v3365, 1.0
    %v3370 = vrcp.pop %v3366
    %v3371 = vmul.f32 1.0, %v3370
    %v3372 = vrcp.pop %v3367
    %v3373 = vmul.f32 1.0, %v3372
    %v3374 = vrcp.pop %v3368
    %v3375 = vmul.f32 1.0, %v3374
    %v3376 = vrcp.pop %v3369
    %v3377 = vmul.f32 1.0, %v3376
    %v3378 = vxor.u32 %v3342, 2147483648
    %v3379 = vxor.u32 %v3343, 2147483648
    %v3380 = vxor.u32 %v3344, 2147483648
    %v3381 = vxor.u32 %v3345, 2147483648
    %v3382 = vmul.f32 %v3378, 1.442695
    %v3383 = vpow.pop %v3382
    %v3384 = vmul.f32 %v3379, 1.442695
    %v3385 = vpow.pop %v3384
    %v3386 = vmul.f32 %v3380, 1.442695
    %v3387 = vpow.pop %v3386
    %v3388 = vmul.f32 %v3381, 1.442695
    %v3389 = vpow.pop %v3388
    %v3390 = vadd.f32 %v3383, 1.0
    %v3391 = vadd.f32 %v3385, 1.0
    %v3392 = vadd.f32 %v3387, 1.0
    %v3393 = vadd.f32 %v3389, 1.0
    %v3394 = vrcp.pop %v3390
    %v3395 = vmul.f32 1.0, %v3394
    %v3396 = vrcp.pop %v3391
    %v3397 = vmul.f32 1.0, %v3396
    %v3398 = vrcp.pop %v3392
    %v3399 = vmul.f32 1.0, %v3398
    %v3400 = vrcp.pop %v3393
    %v3401 = vmul.f32 1.0, %v3400
    %v3402 = vtanh.pop %v3346
    %v3403 = vtanh.pop %v3347
    %v3404 = vtanh.pop %v3348
    %v3405 = vtanh.pop %v3349
    %v3406 = vxor.u32 %v3350, 2147483648
    %v3407 = vxor.u32 %v3351, 2147483648
    %v3408 = vxor.u32 %v3352, 2147483648
    %v3409 = vxor.u32 %v3353, 2147483648
    %v3410 = vmul.f32 %v3406, 1.442695
    %v3411 = vpow.pop %v3410
    %v3412 = vmul.f32 %v3407, 1.442695
    %v3413 = vpow.pop %v3412
    %v3414 = vmul.f32 %v3408, 1.442695
    %v3415 = vpow.pop %v3414
    %v3416 = vmul.f32 %v3409, 1.442695
    %v3417 = vpow.pop %v3416
    %v3418 = vadd.f32 %v3411, 1.0
    %v3419 = vadd.f32 %v3413, 1.0
    %v3420 = vadd.f32 %v3415, 1.0
    %v3421 = vadd.f32 %v3417, 1.0
    %v3422 = vrcp.pop %v3418
    %v3423 = vmul.f32 1.0, %v3422
    %v3424 = vrcp.pop %v3419
    %v3425 = vmul.f32 1.0, %v3424
    %v3426 = vrcp.pop %v3420
    %v3427 = vmul.f32 1.0, %v3426
    %v3428 = vrcp.pop %v3421
    %v3429 = vmul.f32 1.0, %v3428
    %v3430 = vmul.f32 %v3395, %v2919
    %v3431 = vmul.f32 %v3397, %v2920
    %v3432 = vmul.f32 %v3399, %v2921
    %v3433 = vmul.f32 %v3401, %v2922
    %v3434 = vmul.f32 %v3371, %v3402
    %v3435 = vmul.f32 %v3373, %v3403
    %v3436 = vmul.f32 %v3375, %v3404
    %v3437 = vmul.f32 %v3377, %v3405
    %v3438 = vadd.f32 %v3430, %v3434
    %v3439 = vadd.f32 %v3431, %v3435
    %v3440 = vadd.f32 %v3432, %v3436
    %v3441 = vadd.f32 %v3433, %v3437
    %v3442 = vtanh.pop %v3438
    %v3443 = vtanh.pop %v3439
    %v3444 = vtanh.pop %v3440
    %v3445 = vtanh.pop %v3441
    %v3446 = vmul.f32 %v3423, %v3442
    %v3447 = vmul.f32 %v3425, %v3443
    %v3448 = vmul.f32 %v3427, %v3444
    %v3449 = vmul.f32 %v3429, %v3445
    %s3450 = scalar_lea.vmem %s0, 48
    %v3451 = vld [vmem:[%s3450] sm:$0xff]
    %v3452 = vld [vmem:[%s3450 + $0x8] sm:$0xff]
    %v3453 = vld [vmem:[%s3450 + $0x10] sm:$0xff]
    %3454 = vmatprep.subr.mxu0 0.0
    %3455 = vmatpush1.msra.mxu0 %v3451
    %3456 = vmatprep.subr.mxu0 0.0
    %3457 = vmatpush1.msra.mxu0 %v3452
    %3458 = vmatprep.subr.mxu0 0.0
    %3459 = vmatpush1.msra.mxu0 %v3453
    %3460 = vmatprep.subr.mxu0 0.0
    %3461 = vmatpush1.msra.mxu0 0.0
    %3462 = vmatprep.subr.mxu0 0.0
    %3463 = vmatpush1.msra.mxu0 0.0
    %3464 = vmatprep.subr.mxu0 0.0
    %3465 = vmatpush1.msra.mxu0 0.0
    %3466 = vmatprep.subr.mxu0 0.0
    %3467 = vmatpush1.msra.mxu0 0.0
    %3468 = vmatprep.subr.mxu0 0.0
    %3469 = vmatpush1.msra.mxu0 0.0
    %3470 = vmatprep.subr.mxu0 0.0
    %3471 = vmatpush1.msra.mxu0 0.0
    %3472 = vmatprep.subr.mxu0 0.0
    %3473 = vmatpush1.msra.mxu0 0.0
    %3474 = vmatprep.subr.mxu0 0.0
    %3475 = vmatpush1.msra.mxu0 0.0
    %3476 = vmatprep.subr.mxu0 0.0
    %3477 = vmatpush1.msra.mxu0 0.0
    %3478 = vmatprep.subr.mxu0 0.0
    %3479 = vmatpush1.msra.mxu0 0.0
    %3480 = vmatprep.subr.mxu0 0.0
    %3481 = vmatpush1.msra.mxu0 0.0
    %3482 = vmatprep.subr.mxu0 0.0
    %3483 = vmatpush1.msra.mxu0 0.0
    %3484 = vmatprep.subr.mxu0 0.0
    %3485 = vmatpush1.msra.mxu0 0.0
    %3486 = vmatprep.subr.mxu0 0.0
    %3487 = vmatpush1.msra.mxu0 0.0
    %3488 = vmatprep.subr.mxu0 0.0
    %3489 = vmatpush1.msra.mxu0 0.0
    %3490 = vmatprep.subr.mxu0 0.0
    %3491 = vmatpush1.msra.mxu0 0.0
    %3492 = vmatprep.subr.mxu0 0.0
    %3493 = vmatpush1.msra.mxu0 0.0
    %3494 = vmatprep.subr.mxu0 0.0
    %3495 = vmatpush1.msra.mxu0 0.0
    %3496 = vmatprep.subr.mxu0 0.0
    %3497 = vmatpush1.msra.mxu0 0.0
    %3498 = vmatprep.subr.mxu0 0.0
    %3499 = vmatpush1.msra.mxu0 0.0
    %3500 = vmatprep.subr.mxu0 0.0
    %3501 = vmatpush1.msra.mxu0 0.0
    %3502 = vmatprep.subr.mxu0 0.0
    %3503 = vmatpush1.msra.mxu0 0.0
    %3504 = vmatprep.subr.mxu0 0.0
    %3505 = vmatpush1.msra.mxu0 0.0
    %3506 = vmatprep.subr.mxu0 0.0
    %3507 = vmatpush1.msra.mxu0 0.0
    %3508 = vmatprep.subr.mxu0 0.0
    %3509 = vmatpush1.msra.mxu0 0.0
    %3510 = vmatprep.subr.mxu0 0.0
    %3511 = vmatpush1.msra.mxu0 0.0
    %3512 = vmatprep.subr.mxu0 0.0
    %3513 = vmatpush1.msra.mxu0 0.0
    %3514 = vmatprep.subr.mxu0 0.0
    %3515 = vmatpush1.msra.mxu0 0.0
    %3516 = vmatprep.subr.mxu0 0.0
    %3517 = vmatpush1.msra.mxu0 0.0
    %3518 = vmatprep.mubr.f32.mxu0 0.0
    %3519 = vmatmul.mubr.f32.gmra.mrb[0].mxu0 %v219
    %v3520 = vpop.f32.mrb[0].mxu0
    %v3521 = vadd.f32 %v81, %v3520
    %v3522 = vpop.f32.mrb[0].mxu0
    %3523 = vmatprep.mubr.f32.mxu0 0.0
    %3524 = vmatmul.mubr.f32.gmra.mrb[0].mxu0 %v222
    %v3525 = vpop.f32.mrb[0].mxu0
    %v3526 = vadd.f32 %v86, %v3525
    %v3527 = vpop.f32.mrb[0].mxu0
    %3528 = vmatprep.mubr.f32.mxu0 0.0
    %3529 = vmatmul.mubr.f32.gmra.mrb[0].mxu0 %v225
    %v3530 = vpop.f32.mrb[0].mxu0
    %v3531 = vadd.f32 %v91, %v3530
    %v3532 = vpop.f32.mrb[0].mxu0
    %3533 = vmatprep.mubr.f32.mxu0 0.0
    %3534 = vmatmul.mubr.f32.gmra.mrb[0].mxu0 %v228
    %v3535 = vpop.f32.mrb[0].mxu0
    %v3536 = vadd.f32 %v96, %v3535
    %v3537 = vpop.f32.mrb[0].mxu0
    %3538 = vmatprep.mubr.f32.mxu0 0.0
    %3539 = vmatmul.mubr.f32.gmra.mrb[0].mxu0 %v231
    %v3540 = vpop.f32.mrb[0].mxu0
    %v3541 = vadd.f32 %v101, %v3540
    %v3542 = vpop.f32.mrb[0].mxu0
    %3543 = vmatprep.mubr.f32.mxu0 0.0
    %3544 = vmatmul.mubr.f32.gmra.mrb[0].mxu0 %v234
    %v3545 = vpop.f32.mrb[0].mxu0
    %v3546 = vadd.f32 %v106, %v3545
    %v3547 = vpop.f32.mrb[0].mxu0
    %3548 = vmatprep.mubr.f32.mxu0 0.0
    %3549 = vmatmul.mubr.f32.gmra.mrb[0].mxu0 %v237
    %v3550 = vpop.f32.mrb[0].mxu0
    %v3551 = vadd.f32 %v111, %v3550
    %v3552 = vpop.f32.mrb[0].mxu0
    %3553 = vmatprep.mubr.f32.mxu0 0.0
    %3554 = vmatmul.mubr.f32.gmra.mrb[0].mxu0 %v240
    %v3555 = vpop.f32.mrb[0].mxu0
    %v3556 = vadd.f32 %v116, %v3555
    %v3557 = vpop.f32.mrb[0].mxu0
    %3558 = vdwg.mxu0
    %v3559 = vmax.f32 %v3521, 0.0
    %v3560 = vmax.f32 %v3526, 0.0
    %v3561 = vmax.f32 %v3531, 0.0
    %v3562 = vmax.f32 %v3536, 0.0
    %v3563 = vmax.f32 %v3541, 0.0
    %v3564 = vmax.f32 %v3546, 0.0
    %v3565 = vmax.f32 %v3551, 0.0
    %v3566 = vmax.f32 %v3556, 0.0
    %3567 = vmatprep.subr.mxu0 0.0
    %3568 = vmatpush1.msra.mxu0 %v3559
    %3569 = vmatprep.subr.mxu0 0.0
    %3570 = vmatpush1.msra.mxu0 %v3560
    %3571 = vmatprep.subr.mxu0 0.0
    %3572 = vmatpush1.msra.mxu0 %v3561
    %3573 = vmatprep.subr.mxu0 0.0
    %3574 = vmatpush1.msra.mxu0 %v3562
    %3575 = vmatprep.subr.mxu0 0.0
    %3576 = vmatpush1.msra.mxu0 %v3563
    %3577 = vmatprep.subr.mxu0 0.0
    %3578 = vmatpush1.msra.mxu0 %v3564
    %3579 = vmatprep.subr.mxu0 0.0
    %3580 = vmatpush1.msra.mxu0 %v3565
    %3581 = vmatprep.subr.mxu0 0.0
    %3582 = vmatpush1.msra.mxu0 %v3566
    %3583 = vmatprep.subr.mxu0 0.0
    %3584 = vmatpush1.msra.mxu0 0.0
    %3585 = vmatprep.subr.mxu0 0.0
    %3586 = vmatpush1.msra.mxu0 0.0
    %3587 = vmatprep.subr.mxu0 0.0
    %3588 = vmatpush1.msra.mxu0 0.0
    %3589 = vmatprep.subr.mxu0 0.0
    %3590 = vmatpush1.msra.mxu0 0.0
    %3591 = vmatprep.subr.mxu0 0.0
    %3592 = vmatpush1.msra.mxu0 0.0
    %3593 = vmatprep.subr.mxu0 0.0
    %3594 = vmatpush1.msra.mxu0 0.0
    %3595 = vmatprep.subr.mxu0 0.0
    %3596 = vmatpush1.msra.mxu0 0.0
    %3597 = vmatprep.subr.mxu0 0.0
    %3598 = vmatpush1.msra.mxu0 0.0
    %3599 = vmatprep.subr.mxu0 0.0
    %3600 = vmatpush1.msra.mxu0 0.0
    %3601 = vmatprep.subr.mxu0 0.0
    %3602 = vmatpush1.msra.mxu0 0.0
    %3603 = vmatprep.subr.mxu0 0.0
    %3604 = vmatpush1.msra.mxu0 0.0
    %3605 = vmatprep.subr.mxu0 0.0
    %3606 = vmatpush1.msra.mxu0 0.0
    %3607 = vmatprep.subr.mxu0 0.0
    %3608 = vmatpush1.msra.mxu0 0.0
    %3609 = vmatprep.subr.mxu0 0.0
    %3610 = vmatpush1.msra.mxu0 0.0
    %3611 = vmatprep.subr.mxu0 0.0
    %3612 = vmatpush1.msra.mxu0 0.0
    %3613 = vmatprep.subr.mxu0 0.0
    %3614 = vmatpush1.msra.mxu0 0.0
    %3615 = vmatprep.subr.mxu0 0.0
    %3616 = vmatpush1.msra.mxu0 0.0
    %3617 = vmatprep.subr.mxu0 0.0
    %3618 = vmatpush1.msra.mxu0 0.0
    %3619 = vmatprep.subr.mxu0 0.0
    %3620 = vmatpush1.msra.mxu0 0.0
    %3621 = vmatprep.subr.mxu0 0.0
    %3622 = vmatpush1.msra.mxu0 0.0
    %3623 = vmatprep.subr.mxu0 0.0
    %3624 = vmatpush1.msra.mxu0 0.0
    %3625 = vmatprep.subr.mxu0 0.0
    %3626 = vmatpush1.msra.mxu0 0.0
    %3627 = vmatprep.subr.mxu0 0.0
    %3628 = vmatpush1.msra.mxu0 0.0
    %3629 = vmatprep.subr.mxu0 0.0
    %3630 = vmatpush1.msra.mxu0 0.0
    %3631 = vmatprep.mubr.f32.mxu0 0.0
    %3632 = vmatmul.mubr.f32.gmra.mrb[0].mxu0 %v357
    %v3633 = vpop.f32.mrb[0].mxu0
    %v3634 = vadd.f32 %v137, %v3633
    %v3635 = vpop.f32.mrb[0].mxu0
    %3636 = vmatprep.mubr.f32.mxu0 0.0
    %3637 = vmatmul.mubr.f32.gmra.mrb[0].mxu0 %v360
    %v3638 = vpop.f32.mrb[0].mxu0
    %v3639 = vadd.f32 %v142, %v3638
    %v3640 = vpop.f32.mrb[0].mxu0
    %3641 = vmatprep.mubr.f32.mxu0 0.0
    %3642 = vmatmul.mubr.f32.gmra.mrb[0].mxu0 %v363
    %v3643 = vpop.f32.mrb[0].mxu0
    %v3644 = vadd.f32 %v147, %v3643
    %v3645 = vpop.f32.mrb[0].mxu0
    %3646 = vmatprep.mubr.f32.mxu0 0.0
    %3647 = vmatmul.mubr.f32.gmra.mrb[0].mxu0 %v366
    %v3648 = vpop.f32.mrb[0].mxu0
    %v3649 = vadd.f32 %v152, %v3648
    %v3650 = vpop.f32.mrb[0].mxu0
    %3651 = vmatprep.mubr.f32.mxu0 0.0
    %3652 = vmatmul.mubr.f32.gmra.mrb[0].mxu0 %v369
    %v3653 = vpop.f32.mrb[0].mxu0
    %v3654 = vadd.f32 %v157, %v3653
    %v3655 = vpop.f32.mrb[0].mxu0
    %3656 = vmatprep.mubr.f32.mxu0 0.0
    %3657 = vmatmul.mubr.f32.gmra.mrb[0].mxu0 %v372
    %v3658 = vpop.f32.mrb[0].mxu0
    %v3659 = vadd.f32 %v162, %v3658
    %v3660 = vpop.f32.mrb[0].mxu0
    %3661 = vmatprep.mubr.f32.mxu0 0.0
    %3662 = vmatmul.mubr.f32.gmra.mrb[0].mxu0 %v375
    %v3663 = vpop.f32.mrb[0].mxu0
    %v3664 = vadd.f32 %v167, %v3663
    %v3665 = vpop.f32.mrb[0].mxu0
    %3666 = vmatprep.mubr.f32.mxu0 0.0
    %3667 = vmatmul.mubr.f32.gmra.mrb[0].mxu0 %v378
    %v3668 = vpop.f32.mrb[0].mxu0
    %v3669 = vadd.f32 %v172, %v3668
    %v3670 = vpop.f32.mrb[0].mxu0
    %3671 = vmatprep.mubr.f32.mxu0 0.0
    %3672 = vmatmul.mubr.f32.gmra.mrb[0].mxu0 %v381
    %v3673 = vpop.f32.mrb[0].mxu0
    %v3674 = vadd.f32 %v177, %v3673
    %v3675 = vpop.f32.mrb[0].mxu0
    %3676 = vmatprep.mubr.f32.mxu0 0.0
    %3677 = vmatmul.mubr.f32.gmra.mrb[0].mxu0 %v384
    %v3678 = vpop.f32.mrb[0].mxu0
    %v3679 = vadd.f32 %v182, %v3678
    %v3680 = vpop.f32.mrb[0].mxu0
    %3681 = vmatprep.mubr.f32.mxu0 0.0
    %3682 = vmatmul.mubr.f32.gmra.mrb[0].mxu0 %v387
    %v3683 = vpop.f32.mrb[0].mxu0
    %v3684 = vadd.f32 %v187, %v3683
    %v3685 = vpop.f32.mrb[0].mxu0
    %3686 = vmatprep.mubr.f32.mxu0 0.0
    %3687 = vmatmul.mubr.f32.gmra.mrb[0].mxu0 %v390
    %v3688 = vpop.f32.mrb[0].mxu0
    %v3689 = vadd.f32 %v192, %v3688
    %v3690 = vpop.f32.mrb[0].mxu0
    %3691 = vmatprep.mubr.f32.mxu0 0.0
    %3692 = vmatmul.mubr.f32.gmra.mrb[0].mxu0 %v393
    %v3693 = vpop.f32.mrb[0].mxu0
    %v3694 = vadd.f32 %v197, %v3693
    %v3695 = vpop.f32.mrb[0].mxu0
    %3696 = vmatprep.mubr.f32.mxu0 0.0
    %3697 = vmatmul.mubr.f32.gmra.mrb[0].mxu0 %v396
    %v3698 = vpop.f32.mrb[0].mxu0
    %v3699 = vadd.f32 %v202, %v3698
    %v3700 = vpop.f32.mrb[0].mxu0
    %3701 = vmatprep.mubr.f32.mxu0 0.0
    %3702 = vmatmul.mubr.f32.gmra.mrb[0].mxu0 %v399
    %v3703 = vpop.f32.mrb[0].mxu0
    %v3704 = vadd.f32 %v207, %v3703
    %v3705 = vpop.f32.mrb[0].mxu0
    %3706 = vmatprep.mubr.f32.mxu0 0.0
    %3707 = vmatmul.mubr.f32.gmra.mrb[0].mxu0 %v402
    %v3708 = vpop.f32.mrb[0].mxu0
    %v3709 = vadd.f32 %v212, %v3708
    %v3710 = vpop.f32.mrb[0].mxu0
    %3711 = vdwg.mxu0
    %3712 = vmatprep.subr.mxu0 0.0
    %3713 = vmatpush1.msra.mxu0 %v3446
    %3714 = vmatprep.subr.mxu0 0.0
    %3715 = vmatpush1.msra.mxu0 %v3447
    %3716 = vmatprep.subr.mxu0 0.0
    %3717 = vmatpush1.msra.mxu0 %v3448
    %3718 = vmatprep.subr.mxu0 0.0
    %3719 = vmatpush1.msra.mxu0 %v3449
    %3720 = vmatprep.subr.mxu0 0.0
    %3721 = vmatpush1.msra.mxu0 0.0
    %3722 = vmatprep.subr.mxu0 0.0
    %3723 = vmatpush1.msra.mxu0 0.0
    %3724 = vmatprep.subr.mxu0 0.0
    %3725 = vmatpush1.msra.mxu0 0.0
    %3726 = vmatprep.subr.mxu0 0.0
    %3727 = vmatpush1.msra.mxu0 0.0
    %3728 = vmatprep.subr.mxu0 0.0
    %3729 = vmatpush1.msra.mxu0 0.0
    %3730 = vmatprep.subr.mxu0 0.0
    %3731 = vmatpush1.msra.mxu0 0.0
    %3732 = vmatprep.subr.mxu0 0.0
    %3733 = vmatpush1.msra.mxu0 0.0
    %3734 = vmatprep.subr.mxu0 0.0
    %3735 = vmatpush1.msra.mxu0 0.0
    %3736 = vmatprep.subr.mxu0 0.0
    %3737 = vmatpush1.msra.mxu0 0.0
    %3738 = vmatprep.subr.mxu0 0.0
    %3739 = vmatpush1.msra.mxu0 0.0
    %3740 = vmatprep.subr.mxu0 0.0
    %3741 = vmatpush1.msra.mxu0 0.0
    %3742 = vmatprep.subr.mxu0 0.0
    %3743 = vmatpush1.msra.mxu0 0.0
    %3744 = vmatprep.subr.mxu0 0.0
    %3745 = vmatpush1.msra.mxu0 0.0
    %3746 = vmatprep.subr.mxu0 0.0
    %3747 = vmatpush1.msra.mxu0 0.0
    %3748 = vmatprep.subr.mxu0 0.0
    %3749 = vmatpush1.msra.mxu0 0.0
    %3750 = vmatprep.subr.mxu0 0.0
    %3751 = vmatpush1.msra.mxu0 0.0
    %3752 = vmatprep.subr.mxu0 0.0
    %3753 = vmatpush1.msra.mxu0 0.0
    %3754 = vmatprep.subr.mxu0 0.0
    %3755 = vmatpush1.msra.mxu0 0.0
    %3756 = vmatprep.subr.mxu0 0.0
    %3757 = vmatpush1.msra.mxu0 0.0
    %3758 = vmatprep.subr.mxu0 0.0
    %3759 = vmatpush1.msra.mxu0 0.0
    %3760 = vmatprep.subr.mxu0 0.0
    %3761 = vmatpush1.msra.mxu0 0.0
    %3762 = vmatprep.subr.mxu0 0.0
    %3763 = vmatpush1.msra.mxu0 0.0
    %3764 = vmatprep.subr.mxu0 0.0
    %3765 = vmatpush1.msra.mxu0 0.0
    %3766 = vmatprep.subr.mxu0 0.0
    %3767 = vmatpush1.msra.mxu0 0.0
    %3768 = vmatprep.subr.mxu0 0.0
    %3769 = vmatpush1.msra.mxu0 0.0
    %3770 = vmatprep.subr.mxu0 0.0
    %3771 = vmatpush1.msra.mxu0 0.0
    %3772 = vmatprep.subr.mxu0 0.0
    %3773 = vmatpush1.msra.mxu0 0.0
    %3774 = vmatprep.subr.mxu0 0.0
    %3775 = vmatpush1.msra.mxu0 0.0
    %3776 = vmatprep.mubr.f32.mxu0 0.0
    %3777 = vmatmul.mubr.f32.gmra.mrb[0].mxu0 %v551
    %v3778 = vpop.f32.mrb[0].mxu0
    %v3779 = vadd.f32 0.0, %v3778
    %v3780 = vpop.f32.mrb[0].mxu0
    %3781 = vmatprep.mubr.f32.mxu0 0.0
    %3782 = vmatmul.mubr.f32.gmra.mrb[0].mxu0 %v554
    %v3783 = vpop.f32.mrb[0].mxu0
    %v3784 = vadd.f32 0.0, %v3783
    %v3785 = vpop.f32.mrb[0].mxu0
    %3786 = vmatprep.mubr.f32.mxu0 0.0
    %3787 = vmatmul.mubr.f32.gmra.mrb[0].mxu0 %v557
    %v3788 = vpop.f32.mrb[0].mxu0
    %v3789 = vadd.f32 0.0, %v3788
    %v3790 = vpop.f32.mrb[0].mxu0
    %3791 = vmatprep.mubr.f32.mxu0 0.0
    %3792 = vmatmul.mubr.f32.gmra.mrb[0].mxu0 %v560
    %v3793 = vpop.f32.mrb[0].mxu0
    %v3794 = vadd.f32 0.0, %v3793
    %v3795 = vpop.f32.mrb[0].mxu0
    %3796 = vmatprep.mubr.f32.mxu0 0.0
    %3797 = vmatmul.mubr.f32.gmra.mrb[0].mxu0 %v563
    %v3798 = vpop.f32.mrb[0].mxu0
    %v3799 = vadd.f32 0.0, %v3798
    %v3800 = vpop.f32.mrb[0].mxu0
    %3801 = vmatprep.mubr.f32.mxu0 0.0
    %3802 = vmatmul.mubr.f32.gmra.mrb[0].mxu0 %v566
    %v3803 = vpop.f32.mrb[0].mxu0
    %v3804 = vadd.f32 0.0, %v3803
    %v3805 = vpop.f32.mrb[0].mxu0
    %3806 = vmatprep.mubr.f32.mxu0 0.0
    %3807 = vmatmul.mubr.f32.gmra.mrb[0].mxu0 %v569
    %v3808 = vpop.f32.mrb[0].mxu0
    %v3809 = vadd.f32 0.0, %v3808
    %v3810 = vpop.f32.mrb[0].mxu0
    %3811 = vmatprep.mubr.f32.mxu0 0.0
    %3812 = vmatmul.mubr.f32.gmra.mrb[0].mxu0 %v572
    %v3813 = vpop.f32.mrb[0].mxu0
    %v3814 = vadd.f32 0.0, %v3813
    %v3815 = vpop.f32.mrb[0].mxu0
    %3816 = vmatprep.mubr.f32.mxu0 0.0
    %3817 = vmatmul.mubr.f32.gmra.mrb[0].mxu0 %v575
    %v3818 = vpop.f32.mrb[0].mxu0
    %v3819 = vadd.f32 0.0, %v3818
    %v3820 = vpop.f32.mrb[0].mxu0
    %3821 = vmatprep.mubr.f32.mxu0 0.0
    %3822 = vmatmul.mubr.f32.gmra.mrb[0].mxu0 %v578
    %v3823 = vpop.f32.mrb[0].mxu0
    %v3824 = vadd.f32 0.0, %v3823
    %v3825 = vpop.f32.mrb[0].mxu0
    %3826 = vmatprep.mubr.f32.mxu0 0.0
    %3827 = vmatmul.mubr.f32.gmra.mrb[0].mxu0 %v581
    %v3828 = vpop.f32.mrb[0].mxu0
    %v3829 = vadd.f32 0.0, %v3828
    %v3830 = vpop.f32.mrb[0].mxu0
    %3831 = vmatprep.mubr.f32.mxu0 0.0
    %3832 = vmatmul.mubr.f32.gmra.mrb[0].mxu0 %v584
    %v3833 = vpop.f32.mrb[0].mxu0
    %v3834 = vadd.f32 0.0, %v3833
    %v3835 = vpop.f32.mrb[0].mxu0
    %3836 = vmatprep.mubr.f32.mxu0 0.0
    %3837 = vmatmul.mubr.f32.gmra.mrb[0].mxu0 %v587
    %v3838 = vpop.f32.mrb[0].mxu0
    %v3839 = vadd.f32 0.0, %v3838
    %v3840 = vpop.f32.mrb[0].mxu0
    %3841 = vmatprep.mubr.f32.mxu0 0.0
    %3842 = vmatmul.mubr.f32.gmra.mrb[0].mxu0 %v590
    %v3843 = vpop.f32.mrb[0].mxu0
    %v3844 = vadd.f32 0.0, %v3843
    %v3845 = vpop.f32.mrb[0].mxu0
    %3846 = vmatprep.mubr.f32.mxu0 0.0
    %3847 = vmatmul.mubr.f32.gmra.mrb[0].mxu0 %v593
    %v3848 = vpop.f32.mrb[0].mxu0
    %v3849 = vadd.f32 0.0, %v3848
    %v3850 = vpop.f32.mrb[0].mxu0
    %3851 = vmatprep.mubr.f32.mxu0 0.0
    %3852 = vmatmul.mubr.f32.gmra.mrb[0].mxu0 %v596
    %v3853 = vpop.f32.mrb[0].mxu0
    %v3854 = vadd.f32 0.0, %v3853
    %v3855 = vpop.f32.mrb[0].mxu0
    %3856 = vdwg.mxu0
    %v3857 = vadd.f32 %v3634, %v3779
    %v3858 = vadd.f32 %v3639, %v3784
    %v3859 = vadd.f32 %v3644, %v3789
    %v3860 = vadd.f32 %v3649, %v3794
    %v3861 = vadd.f32 %v3654, %v3799
    %v3862 = vadd.f32 %v3659, %v3804
    %v3863 = vadd.f32 %v3664, %v3809
    %v3864 = vadd.f32 %v3669, %v3814
    %v3865 = vadd.f32 %v3674, %v3819
    %v3866 = vadd.f32 %v3679, %v3824
    %v3867 = vadd.f32 %v3684, %v3829
    %v3868 = vadd.f32 %v3689, %v3834
    %v3869 = vadd.f32 %v3694, %v3839
    %v3870 = vadd.f32 %v3699, %v3844
    %v3871 = vadd.f32 %v3704, %v3849
    %v3872 = vadd.f32 %v3709, %v3854
    %v3873 = vxor.u32 %v3857, 2147483648
    %v3874 = vxor.u32 %v3858, 2147483648
    %v3875 = vxor.u32 %v3859, 2147483648
    %v3876 = vxor.u32 %v3860, 2147483648
    %v3877 = vmul.f32 %v3873, 1.442695
    %v3878 = vpow.pop %v3877
    %v3879 = vmul.f32 %v3874, 1.442695
    %v3880 = vpow.pop %v3879
    %v3881 = vmul.f32 %v3875, 1.442695
    %v3882 = vpow.pop %v3881
    %v3883 = vmul.f32 %v3876, 1.442695
    %v3884 = vpow.pop %v3883
    %v3885 = vadd.f32 %v3878, 1.0
    %v3886 = vadd.f32 %v3880, 1.0
    %v3887 = vadd.f32 %v3882, 1.0
    %v3888 = vadd.f32 %v3884, 1.0
    %v3889 = vrcp.pop %v3885
    %v3890 = vmul.f32 1.0, %v3889
    %v3891 = vrcp.pop %v3886
    %v3892 = vmul.f32 1.0, %v3891
    %v3893 = vrcp.pop %v3887
    %v3894 = vmul.f32 1.0, %v3893
    %v3895 = vrcp.pop %v3888
    %v3896 = vmul.f32 1.0, %v3895
    %v3897 = vxor.u32 %v3861, 2147483648
    %v3898 = vxor.u32 %v3862, 2147483648
    %v3899 = vxor.u32 %v3863, 2147483648
    %v3900 = vxor.u32 %v3864, 2147483648
    %v3901 = vmul.f32 %v3897, 1.442695
    %v3902 = vpow.pop %v3901
    %v3903 = vmul.f32 %v3898, 1.442695
    %v3904 = vpow.pop %v3903
    %v3905 = vmul.f32 %v3899, 1.442695
    %v3906 = vpow.pop %v3905
    %v3907 = vmul.f32 %v3900, 1.442695
    %v3908 = vpow.pop %v3907
    %v3909 = vadd.f32 %v3902, 1.0
    %v3910 = vadd.f32 %v3904, 1.0
    %v3911 = vadd.f32 %v3906, 1.0
    %v3912 = vadd.f32 %v3908, 1.0
    %v3913 = vrcp.pop %v3909
    %v3914 = vmul.f32 1.0, %v3913
    %v3915 = vrcp.pop %v3910
    %v3916 = vmul.f32 1.0, %v3915
    %v3917 = vrcp.pop %v3911
    %v3918 = vmul.f32 1.0, %v3917
    %v3919 = vrcp.pop %v3912
    %v3920 = vmul.f32 1.0, %v3919
    %v3921 = vtanh.pop %v3865
    %v3922 = vtanh.pop %v3866
    %v3923 = vtanh.pop %v3867
    %v3924 = vtanh.pop %v3868
    %v3925 = vxor.u32 %v3869, 2147483648
    %v3926 = vxor.u32 %v3870, 2147483648
    %v3927 = vxor.u32 %v3871, 2147483648
    %v3928 = vxor.u32 %v3872, 2147483648
    %v3929 = vmul.f32 %v3925, 1.442695
    %v3930 = vpow.pop %v3929
    %v3931 = vmul.f32 %v3926, 1.442695
    %v3932 = vpow.pop %v3931
    %v3933 = vmul.f32 %v3927, 1.442695
    %v3934 = vpow.pop %v3933
    %v3935 = vmul.f32 %v3928, 1.442695
    %v3936 = vpow.pop %v3935
    %v3937 = vadd.f32 %v3930, 1.0
    %v3938 = vadd.f32 %v3932, 1.0
    %v3939 = vadd.f32 %v3934, 1.0
    %v3940 = vadd.f32 %v3936, 1.0
    %v3941 = vrcp.pop %v3937
    %v3942 = vmul.f32 1.0, %v3941
    %v3943 = vrcp.pop %v3938
    %v3944 = vmul.f32 1.0, %v3943
    %v3945 = vrcp.pop %v3939
    %v3946 = vmul.f32 1.0, %v3945
    %v3947 = vrcp.pop %v3940
    %v3948 = vmul.f32 1.0, %v3947
    %v3949 = vmul.f32 %v3914, %v3438
    %v3950 = vmul.f32 %v3916, %v3439
    %v3951 = vmul.f32 %v3918, %v3440
    %v3952 = vmul.f32 %v3920, %v3441
    %v3953 = vmul.f32 %v3890, %v3921
    %v3954 = vmul.f32 %v3892, %v3922
    %v3955 = vmul.f32 %v3894, %v3923
    %v3956 = vmul.f32 %v3896, %v3924
    %v3957 = vadd.f32 %v3949, %v3953
    %v3958 = vadd.f32 %v3950, %v3954
    %v3959 = vadd.f32 %v3951, %v3955
    %v3960 = vadd.f32 %v3952, %v3956
    %v3961 = vtanh.pop %v3957
    %v3962 = vtanh.pop %v3958
    %v3963 = vtanh.pop %v3959
    %v3964 = vtanh.pop %v3960
    %v3965 = vmul.f32 %v3942, %v3961
    %v3966 = vmul.f32 %v3944, %v3962
    %v3967 = vmul.f32 %v3946, %v3963
    %v3968 = vmul.f32 %v3948, %v3964
    %s3969 = scalar_lea.vmem %s0, 56
    %v3970 = vld [vmem:[%s3969] sm:$0xff]
    %v3971 = vld [vmem:[%s3969 + $0x8] sm:$0xff]
    %v3972 = vld [vmem:[%s3969 + $0x10] sm:$0xff]
    %3973 = vmatprep.subr.mxu0 0.0
    %3974 = vmatpush1.msra.mxu0 %v3970
    %3975 = vmatprep.subr.mxu0 0.0
    %3976 = vmatpush1.msra.mxu0 %v3971
    %3977 = vmatprep.subr.mxu0 0.0
    %3978 = vmatpush1.msra.mxu0 %v3972
    %3979 = vmatprep.subr.mxu0 0.0
    %3980 = vmatpush1.msra.mxu0 0.0
    %3981 = vmatprep.subr.mxu0 0.0
    %3982 = vmatpush1.msra.mxu0 0.0
    %3983 = vmatprep.subr.mxu0 0.0
    %3984 = vmatpush1.msra.mxu0 0.0
    %3985 = vmatprep.subr.mxu0 0.0
    %3986 = vmatpush1.msra.mxu0 0.0
    %3987 = vmatprep.subr.mxu0 0.0
    %3988 = vmatpush1.msra.mxu0 0.0
    %3989 = vmatprep.subr.mxu0 0.0
    %3990 = vmatpush1.msra.mxu0 0.0
    %3991 = vmatprep.subr.mxu0 0.0
    %3992 = vmatpush1.msra.mxu0 0.0
    %3993 = vmatprep.subr.mxu0 0.0
    %3994 = vmatpush1.msra.mxu0 0.0
    %3995 = vmatprep.subr.mxu0 0.0
    %3996 = vmatpush1.msra.mxu0 0.0
    %3997 = vmatprep.subr.mxu0 0.0
    %3998 = vmatpush1.msra.mxu0 0.0
    %3999 = vmatprep.subr.mxu0 0.0
    %4000 = vmatpush1.msra.mxu0 0.0
    %4001 = vmatprep.subr.mxu0 0.0
    %4002 = vmatpush1.msra.mxu0 0.0
    %4003 = vmatprep.subr.mxu0 0.0
    %4004 = vmatpush1.msra.mxu0 0.0
    %4005 = vmatprep.subr.mxu0 0.0
    %4006 = vmatpush1.msra.mxu0 0.0
    %4007 = vmatprep.subr.mxu0 0.0
    %4008 = vmatpush1.msra.mxu0 0.0
    %4009 = vmatprep.subr.mxu0 0.0
    %4010 = vmatpush1.msra.mxu0 0.0
    %4011 = vmatprep.subr.mxu0 0.0
    %4012 = vmatpush1.msra.mxu0 0.0
    %4013 = vmatprep.subr.mxu0 0.0
    %4014 = vmatpush1.msra.mxu0 0.0
    %4015 = vmatprep.subr.mxu0 0.0
    %4016 = vmatpush1.msra.mxu0 0.0
    %4017 = vmatprep.subr.mxu0 0.0
    %4018 = vmatpush1.msra.mxu0 0.0
    %4019 = vmatprep.subr.mxu0 0.0
    %4020 = vmatpush1.msra.mxu0 0.0
    %4021 = vmatprep.subr.mxu0 0.0
    %4022 = vmatpush1.msra.mxu0 0.0
    %4023 = vmatprep.subr.mxu0 0.0
    %4024 = vmatpush1.msra.mxu0 0.0
    %4025 = vmatprep.subr.mxu0 0.0
    %4026 = vmatpush1.msra.mxu0 0.0
    %4027 = vmatprep.subr.mxu0 0.0
    %4028 = vmatpush1.msra.mxu0 0.0
    %4029 = vmatprep.subr.mxu0 0.0
    %4030 = vmatpush1.msra.mxu0 0.0
    %4031 = vmatprep.subr.mxu0 0.0
    %4032 = vmatpush1.msra.mxu0 0.0
    %4033 = vmatprep.subr.mxu0 0.0
    %4034 = vmatpush1.msra.mxu0 0.0
    %4035 = vmatprep.subr.mxu0 0.0
    %4036 = vmatpush1.msra.mxu0 0.0
    %4037 = vmatprep.mubr.f32.mxu0 0.0
    %4038 = vmatmul.mubr.f32.gmra.mrb[0].mxu0 %v219
    %v4039 = vpop.f32.mrb[0].mxu0
    %v4040 = vadd.f32 %v81, %v4039
    %v4041 = vpop.f32.mrb[0].mxu0
    %4042 = vmatprep.mubr.f32.mxu0 0.0
    %4043 = vmatmul.mubr.f32.gmra.mrb[0].mxu0 %v222
    %v4044 = vpop.f32.mrb[0].mxu0
    %v4045 = vadd.f32 %v86, %v4044
    %v4046 = vpop.f32.mrb[0].mxu0
    %4047 = vmatprep.mubr.f32.mxu0 0.0
    %4048 = vmatmul.mubr.f32.gmra.mrb[0].mxu0 %v225
    %v4049 = vpop.f32.mrb[0].mxu0
    %v4050 = vadd.f32 %v91, %v4049
    %v4051 = vpop.f32.mrb[0].mxu0
    %4052 = vmatprep.mubr.f32.mxu0 0.0
    %4053 = vmatmul.mubr.f32.gmra.mrb[0].mxu0 %v228
    %v4054 = vpop.f32.mrb[0].mxu0
    %v4055 = vadd.f32 %v96, %v4054
    %v4056 = vpop.f32.mrb[0].mxu0
    %4057 = vmatprep.mubr.f32.mxu0 0.0
    %4058 = vmatmul.mubr.f32.gmra.mrb[0].mxu0 %v231
    %v4059 = vpop.f32.mrb[0].mxu0
    %v4060 = vadd.f32 %v101, %v4059
    %v4061 = vpop.f32.mrb[0].mxu0
    %4062 = vmatprep.mubr.f32.mxu0 0.0
    %4063 = vmatmul.mubr.f32.gmra.mrb[0].mxu0 %v234
    %v4064 = vpop.f32.mrb[0].mxu0
    %v4065 = vadd.f32 %v106, %v4064
    %v4066 = vpop.f32.mrb[0].mxu0
    %4067 = vmatprep.mubr.f32.mxu0 0.0
    %4068 = vmatmul.mubr.f32.gmra.mrb[0].mxu0 %v237
    %v4069 = vpop.f32.mrb[0].mxu0
    %v4070 = vadd.f32 %v111, %v4069
    %v4071 = vpop.f32.mrb[0].mxu0
    %4072 = vmatprep.mubr.f32.mxu0 0.0
    %4073 = vmatmul.mubr.f32.gmra.mrb[0].mxu0 %v240
    %v4074 = vpop.f32.mrb[0].mxu0
    %v4075 = vadd.f32 %v116, %v4074
    %v4076 = vpop.f32.mrb[0].mxu0
    %4077 = vdwg.mxu0
    %v4078 = vmax.f32 %v4040, 0.0
    %v4079 = vmax.f32 %v4045, 0.0
    %v4080 = vmax.f32 %v4050, 0.0
    %v4081 = vmax.f32 %v4055, 0.0
    %v4082 = vmax.f32 %v4060, 0.0
    %v4083 = vmax.f32 %v4065, 0.0
    %v4084 = vmax.f32 %v4070, 0.0
    %v4085 = vmax.f32 %v4075, 0.0
    %4086 = vmatprep.subr.mxu0 0.0
    %4087 = vmatpush1.msra.mxu0 %v4078
    %4088 = vmatprep.subr.mxu0 0.0
    %4089 = vmatpush1.msra.mxu0 %v4079
    %4090 = vmatprep.subr.mxu0 0.0
    %4091 = vmatpush1.msra.mxu0 %v4080
    %4092 = vmatprep.subr.mxu0 0.0
    %4093 = vmatpush1.msra.mxu0 %v4081
    %4094 = vmatprep.subr.mxu0 0.0
    %4095 = vmatpush1.msra.mxu0 %v4082
    %4096 = vmatprep.subr.mxu0 0.0
    %4097 = vmatpush1.msra.mxu0 %v4083
    %4098 = vmatprep.subr.mxu0 0.0
    %4099 = vmatpush1.msra.mxu0 %v4084
    %4100 = vmatprep.subr.mxu0 0.0
    %4101 = vmatpush1.msra.mxu0 %v4085
    %4102 = vmatprep.subr.mxu0 0.0
    %4103 = vmatpush1.msra.mxu0 0.0
    %4104 = vmatprep.subr.mxu0 0.0
    %4105 = vmatpush1.msra.mxu0 0.0
    %4106 = vmatprep.subr.mxu0 0.0
    %4107 = vmatpush1.msra.mxu0 0.0
    %4108 = vmatprep.subr.mxu0 0.0
    %4109 = vmatpush1.msra.mxu0 0.0
    %4110 = vmatprep.subr.mxu0 0.0
    %4111 = vmatpush1.msra.mxu0 0.0
    %4112 = vmatprep.subr.mxu0 0.0
    %4113 = vmatpush1.msra.mxu0 0.0
    %4114 = vmatprep.subr.mxu0 0.0
    %4115 = vmatpush1.msra.mxu0 0.0
    %4116 = vmatprep.subr.mxu0 0.0
    %4117 = vmatpush1.msra.mxu0 0.0
    %4118 = vmatprep.subr.mxu0 0.0
    %4119 = vmatpush1.msra.mxu0 0.0
    %4120 = vmatprep.subr.mxu0 0.0
    %4121 = vmatpush1.msra.mxu0 0.0
    %4122 = vmatprep.subr.mxu0 0.0
    %4123 = vmatpush1.msra.mxu0 0.0
    %4124 = vmatprep.subr.mxu0 0.0
    %4125 = vmatpush1.msra.mxu0 0.0
    %4126 = vmatprep.subr.mxu0 0.0
    %4127 = vmatpush1.msra.mxu0 0.0
    %4128 = vmatprep.subr.mxu0 0.0
    %4129 = vmatpush1.msra.mxu0 0.0
    %4130 = vmatprep.subr.mxu0 0.0
    %4131 = vmatpush1.msra.mxu0 0.0
    %4132 = vmatprep.subr.mxu0 0.0
    %4133 = vmatpush1.msra.mxu0 0.0
    %4134 = vmatprep.subr.mxu0 0.0
    %4135 = vmatpush1.msra.mxu0 0.0
    %4136 = vmatprep.subr.mxu0 0.0
    %4137 = vmatpush1.msra.mxu0 0.0
    %4138 = vmatprep.subr.mxu0 0.0
    %4139 = vmatpush1.msra.mxu0 0.0
    %4140 = vmatprep.subr.mxu0 0.0
    %4141 = vmatpush1.msra.mxu0 0.0
    %4142 = vmatprep.subr.mxu0 0.0
    %4143 = vmatpush1.msra.mxu0 0.0
    %4144 = vmatprep.subr.mxu0 0.0
    %4145 = vmatpush1.msra.mxu0 0.0
    %4146 = vmatprep.subr.mxu0 0.0
    %4147 = vmatpush1.msra.mxu0 0.0
    %4148 = vmatprep.subr.mxu0 0.0
    %4149 = vmatpush1.msra.mxu0 0.0
    %4150 = vmatprep.mubr.f32.mxu0 0.0
    %4151 = vmatmul.mubr.f32.gmra.mrb[0].mxu0 %v357
    %v4152 = vpop.f32.mrb[0].mxu0
    %v4153 = vadd.f32 %v137, %v4152
    %v4154 = vpop.f32.mrb[0].mxu0
    %4155 = vmatprep.mubr.f32.mxu0 0.0
    %4156 = vmatmul.mubr.f32.gmra.mrb[0].mxu0 %v360
    %v4157 = vpop.f32.mrb[0].mxu0
    %v4158 = vadd.f32 %v142, %v4157
    %v4159 = vpop.f32.mrb[0].mxu0
    %4160 = vmatprep.mubr.f32.mxu0 0.0
    %4161 = vmatmul.mubr.f32.gmra.mrb[0].mxu0 %v363
    %v4162 = vpop.f32.mrb[0].mxu0
    %v4163 = vadd.f32 %v147, %v4162
    %v4164 = vpop.f32.mrb[0].mxu0
    %4165 = vmatprep.mubr.f32.mxu0 0.0
    %4166 = vmatmul.mubr.f32.gmra.mrb[0].mxu0 %v366
    %v4167 = vpop.f32.mrb[0].mxu0
    %v4168 = vadd.f32 %v152, %v4167
    %v4169 = vpop.f32.mrb[0].mxu0
    %4170 = vmatprep.mubr.f32.mxu0 0.0
    %4171 = vmatmul.mubr.f32.gmra.mrb[0].mxu0 %v369
    %v4172 = vpop.f32.mrb[0].mxu0
    %v4173 = vadd.f32 %v157, %v4172
    %v4174 = vpop.f32.mrb[0].mxu0
    %4175 = vmatprep.mubr.f32.mxu0 0.0
    %4176 = vmatmul.mubr.f32.gmra.mrb[0].mxu0 %v372
    %v4177 = vpop.f32.mrb[0].mxu0
    %v4178 = vadd.f32 %v162, %v4177
    %v4179 = vpop.f32.mrb[0].mxu0
    %4180 = vmatprep.mubr.f32.mxu0 0.0
    %4181 = vmatmul.mubr.f32.gmra.mrb[0].mxu0 %v375
    %v4182 = vpop.f32.mrb[0].mxu0
    %v4183 = vadd.f32 %v167, %v4182
    %v4184 = vpop.f32.mrb[0].mxu0
    %4185 = vmatprep.mubr.f32.mxu0 0.0
    %4186 = vmatmul.mubr.f32.gmra.mrb[0].mxu0 %v378
    %v4187 = vpop.f32.mrb[0].mxu0
    %v4188 = vadd.f32 %v172, %v4187
    %v4189 = vpop.f32.mrb[0].mxu0
    %4190 = vmatprep.mubr.f32.mxu0 0.0
    %4191 = vmatmul.mubr.f32.gmra.mrb[0].mxu0 %v381
    %v4192 = vpop.f32.mrb[0].mxu0
    %v4193 = vadd.f32 %v177, %v4192
    %v4194 = vpop.f32.mrb[0].mxu0
    %4195 = vmatprep.mubr.f32.mxu0 0.0
    %4196 = vmatmul.mubr.f32.gmra.mrb[0].mxu0 %v384
    %v4197 = vpop.f32.mrb[0].mxu0
    %v4198 = vadd.f32 %v182, %v4197
    %v4199 = vpop.f32.mrb[0].mxu0
    %4200 = vmatprep.mubr.f32.mxu0 0.0
    %4201 = vmatmul.mubr.f32.gmra.mrb[0].mxu0 %v387
    %v4202 = vpop.f32.mrb[0].mxu0
    %v4203 = vadd.f32 %v187, %v4202
    %v4204 = vpop.f32.mrb[0].mxu0
    %4205 = vmatprep.mubr.f32.mxu0 0.0
    %4206 = vmatmul.mubr.f32.gmra.mrb[0].mxu0 %v390
    %v4207 = vpop.f32.mrb[0].mxu0
    %v4208 = vadd.f32 %v192, %v4207
    %v4209 = vpop.f32.mrb[0].mxu0
    %4210 = vmatprep.mubr.f32.mxu0 0.0
    %4211 = vmatmul.mubr.f32.gmra.mrb[0].mxu0 %v393
    %v4212 = vpop.f32.mrb[0].mxu0
    %v4213 = vadd.f32 %v197, %v4212
    %v4214 = vpop.f32.mrb[0].mxu0
    %4215 = vmatprep.mubr.f32.mxu0 0.0
    %4216 = vmatmul.mubr.f32.gmra.mrb[0].mxu0 %v396
    %v4217 = vpop.f32.mrb[0].mxu0
    %v4218 = vadd.f32 %v202, %v4217
    %v4219 = vpop.f32.mrb[0].mxu0
    %4220 = vmatprep.mubr.f32.mxu0 0.0
    %4221 = vmatmul.mubr.f32.gmra.mrb[0].mxu0 %v399
    %v4222 = vpop.f32.mrb[0].mxu0
    %v4223 = vadd.f32 %v207, %v4222
    %v4224 = vpop.f32.mrb[0].mxu0
    %4225 = vmatprep.mubr.f32.mxu0 0.0
    %4226 = vmatmul.mubr.f32.gmra.mrb[0].mxu0 %v402
    %v4227 = vpop.f32.mrb[0].mxu0
    %v4228 = vadd.f32 %v212, %v4227
    %v4229 = vpop.f32.mrb[0].mxu0
    %4230 = vdwg.mxu0
    %4231 = vmatprep.subr.mxu0 0.0
    %4232 = vmatpush1.msra.mxu0 %v3965
    %4233 = vmatprep.subr.mxu0 0.0
    %4234 = vmatpush1.msra.mxu0 %v3966
    %4235 = vmatprep.subr.mxu0 0.0
    %4236 = vmatpush1.msra.mxu0 %v3967
    %4237 = vmatprep.subr.mxu0 0.0
    %4238 = vmatpush1.msra.mxu0 %v3968
    %4239 = vmatprep.subr.mxu0 0.0
    %4240 = vmatpush1.msra.mxu0 0.0
    %4241 = vmatprep.subr.mxu0 0.0
    %4242 = vmatpush1.msra.mxu0 0.0
    %4243 = vmatprep.subr.mxu0 0.0
    %4244 = vmatpush1.msra.mxu0 0.0
    %4245 = vmatprep.subr.mxu0 0.0
    %4246 = vmatpush1.msra.mxu0 0.0
    %4247 = vmatprep.subr.mxu0 0.0
    %4248 = vmatpush1.msra.mxu0 0.0
    %4249 = vmatprep.subr.mxu0 0.0
    %4250 = vmatpush1.msra.mxu0 0.0
    %4251 = vmatprep.subr.mxu0 0.0
    %4252 = vmatpush1.msra.mxu0 0.0
    %4253 = vmatprep.subr.mxu0 0.0
    %4254 = vmatpush1.msra.mxu0 0.0
    %4255 = vmatprep.subr.mxu0 0.0
    %4256 = vmatpush1.msra.mxu0 0.0
    %4257 = vmatprep.subr.mxu0 0.0
    %4258 = vmatpush1.msra.mxu0 0.0
    %4259 = vmatprep.subr.mxu0 0.0
    %4260 = vmatpush1.msra.mxu0 0.0
    %4261 = vmatprep.subr.mxu0 0.0
    %4262 = vmatpush1.msra.mxu0 0.0
    %4263 = vmatprep.subr.mxu0 0.0
    %4264 = vmatpush1.msra.mxu0 0.0
    %4265 = vmatprep.subr.mxu0 0.0
    %4266 = vmatpush1.msra.mxu0 0.0
    %4267 = vmatprep.subr.mxu0 0.0
    %4268 = vmatpush1.msra.mxu0 0.0
    %4269 = vmatprep.subr.mxu0 0.0
    %4270 = vmatpush1.msra.mxu0 0.0
    %4271 = vmatprep.subr.mxu0 0.0
    %4272 = vmatpush1.msra.mxu0 0.0
    %4273 = vmatprep.subr.mxu0 0.0
    %4274 = vmatpush1.msra.mxu0 0.0
    %4275 = vmatprep.subr.mxu0 0.0
    %4276 = vmatpush1.msra.mxu0 0.0
    %4277 = vmatprep.subr.mxu0 0.0
    %4278 = vmatpush1.msra.mxu0 0.0
    %4279 = vmatprep.subr.mxu0 0.0
    %4280 = vmatpush1.msra.mxu0 0.0
    %4281 = vmatprep.subr.mxu0 0.0
    %4282 = vmatpush1.msra.mxu0 0.0
    %4283 = vmatprep.subr.mxu0 0.0
    %4284 = vmatpush1.msra.mxu0 0.0
    %4285 = vmatprep.subr.mxu0 0.0
    %4286 = vmatpush1.msra.mxu0 0.0
    %4287 = vmatprep.subr.mxu0 0.0
    %4288 = vmatpush1.msra.mxu0 0.0
    %4289 = vmatprep.subr.mxu0 0.0
    %4290 = vmatpush1.msra.mxu0 0.0
    %4291 = vmatprep.subr.mxu0 0.0
    %4292 = vmatpush1.msra.mxu0 0.0
    %4293 = vmatprep.subr.mxu0 0.0
    %4294 = vmatpush1.msra.mxu0 0.0
    %4295 = vmatprep.mubr.f32.mxu0 0.0
    %4296 = vmatmul.mubr.f32.gmra.mrb[0].mxu0 %v551
    %v4297 = vpop.f32.mrb[0].mxu0
    %v4298 = vadd.f32 0.0, %v4297
    %v4299 = vpop.f32.mrb[0].mxu0
    %4300 = vmatprep.mubr.f32.mxu0 0.0
    %4301 = vmatmul.mubr.f32.gmra.mrb[0].mxu0 %v554
    %v4302 = vpop.f32.mrb[0].mxu0
    %v4303 = vadd.f32 0.0, %v4302
    %v4304 = vpop.f32.mrb[0].mxu0
    %4305 = vmatprep.mubr.f32.mxu0 0.0
    %4306 = vmatmul.mubr.f32.gmra.mrb[0].mxu0 %v557
    %v4307 = vpop.f32.mrb[0].mxu0
    %v4308 = vadd.f32 0.0, %v4307
    %v4309 = vpop.f32.mrb[0].mxu0
    %4310 = vmatprep.mubr.f32.mxu0 0.0
    %4311 = vmatmul.mubr.f32.gmra.mrb[0].mxu0 %v560
    %v4312 = vpop.f32.mrb[0].mxu0
    %v4313 = vadd.f32 0.0, %v4312
    %v4314 = vpop.f32.mrb[0].mxu0
    %4315 = vmatprep.mubr.f32.mxu0 0.0
    %4316 = vmatmul.mubr.f32.gmra.mrb[0].mxu0 %v563
    %v4317 = vpop.f32.mrb[0].mxu0
    %v4318 = vadd.f32 0.0, %v4317
    %v4319 = vpop.f32.mrb[0].mxu0
    %4320 = vmatprep.mubr.f32.mxu0 0.0
    %4321 = vmatmul.mubr.f32.gmra.mrb[0].mxu0 %v566
    %v4322 = vpop.f32.mrb[0].mxu0
    %v4323 = vadd.f32 0.0, %v4322
    %v4324 = vpop.f32.mrb[0].mxu0
    %4325 = vmatprep.mubr.f32.mxu0 0.0
    %4326 = vmatmul.mubr.f32.gmra.mrb[0].mxu0 %v569
    %v4327 = vpop.f32.mrb[0].mxu0
    %v4328 = vadd.f32 0.0, %v4327
    %v4329 = vpop.f32.mrb[0].mxu0
    %4330 = vmatprep.mubr.f32.mxu0 0.0
    %4331 = vmatmul.mubr.f32.gmra.mrb[0].mxu0 %v572
    %v4332 = vpop.f32.mrb[0].mxu0
    %v4333 = vadd.f32 0.0, %v4332
    %v4334 = vpop.f32.mrb[0].mxu0
    %4335 = vmatprep.mubr.f32.mxu0 0.0
    %4336 = vmatmul.mubr.f32.gmra.mrb[0].mxu0 %v575
    %v4337 = vpop.f32.mrb[0].mxu0
    %v4338 = vadd.f32 0.0, %v4337
    %v4339 = vpop.f32.mrb[0].mxu0
    %4340 = vmatprep.mubr.f32.mxu0 0.0
    %4341 = vmatmul.mubr.f32.gmra.mrb[0].mxu0 %v578
    %v4342 = vpop.f32.mrb[0].mxu0
    %v4343 = vadd.f32 0.0, %v4342
    %v4344 = vpop.f32.mrb[0].mxu0
    %4345 = vmatprep.mubr.f32.mxu0 0.0
    %4346 = vmatmul.mubr.f32.gmra.mrb[0].mxu0 %v581
    %v4347 = vpop.f32.mrb[0].mxu0
    %v4348 = vadd.f32 0.0, %v4347
    %v4349 = vpop.f32.mrb[0].mxu0
    %4350 = vmatprep.mubr.f32.mxu0 0.0
    %4351 = vmatmul.mubr.f32.gmra.mrb[0].mxu0 %v584
    %v4352 = vpop.f32.mrb[0].mxu0
    %v4353 = vadd.f32 0.0, %v4352
    %v4354 = vpop.f32.mrb[0].mxu0
    %4355 = vmatprep.mubr.f32.mxu0 0.0
    %4356 = vmatmul.mubr.f32.gmra.mrb[0].mxu0 %v587
    %v4357 = vpop.f32.mrb[0].mxu0
    %v4358 = vadd.f32 0.0, %v4357
    %v4359 = vpop.f32.mrb[0].mxu0
    %4360 = vmatprep.mubr.f32.mxu0 0.0
    %4361 = vmatmul.mubr.f32.gmra.mrb[0].mxu0 %v590
    %v4362 = vpop.f32.mrb[0].mxu0
    %v4363 = vadd.f32 0.0, %v4362
    %v4364 = vpop.f32.mrb[0].mxu0
    %4365 = vmatprep.mubr.f32.mxu0 0.0
    %4366 = vmatmul.mubr.f32.gmra.mrb[0].mxu0 %v593
    %v4367 = vpop.f32.mrb[0].mxu0
    %v4368 = vadd.f32 0.0, %v4367
    %v4369 = vpop.f32.mrb[0].mxu0
    %4370 = vmatprep.mubr.f32.mxu0 0.0
    %4371 = vmatmul.mubr.f32.gmra.mrb[0].mxu0 %v596
    %v4372 = vpop.f32.mrb[0].mxu0
    %v4373 = vadd.f32 0.0, %v4372
    %v4374 = vpop.f32.mrb[0].mxu0
    %4375 = vdwg.mxu0
    %v4376 = vadd.f32 %v4153, %v4298
    %v4377 = vadd.f32 %v4158, %v4303
    %v4378 = vadd.f32 %v4163, %v4308
    %v4379 = vadd.f32 %v4168, %v4313
    %v4380 = vadd.f32 %v4173, %v4318
    %v4381 = vadd.f32 %v4178, %v4323
    %v4382 = vadd.f32 %v4183, %v4328
    %v4383 = vadd.f32 %v4188, %v4333
    %v4384 = vadd.f32 %v4193, %v4338
    %v4385 = vadd.f32 %v4198, %v4343
    %v4386 = vadd.f32 %v4203, %v4348
    %v4387 = vadd.f32 %v4208, %v4353
    %v4388 = vadd.f32 %v4213, %v4358
    %v4389 = vadd.f32 %v4218, %v4363
    %v4390 = vadd.f32 %v4223, %v4368
    %v4391 = vadd.f32 %v4228, %v4373
    %v4392 = vxor.u32 %v4376, 2147483648
    %v4393 = vxor.u32 %v4377, 2147483648
    %v4394 = vxor.u32 %v4378, 2147483648
    %v4395 = vxor.u32 %v4379, 2147483648
    %v4396 = vmul.f32 %v4392, 1.442695
    %v4397 = vpow.pop %v4396
    %v4398 = vmul.f32 %v4393, 1.442695
    %v4399 = vpow.pop %v4398
    %v4400 = vmul.f32 %v4394, 1.442695
    %v4401 = vpow.pop %v4400
    %v4402 = vmul.f32 %v4395, 1.442695
    %v4403 = vpow.pop %v4402
    %v4404 = vadd.f32 %v4397, 1.0
    %v4405 = vadd.f32 %v4399, 1.0
    %v4406 = vadd.f32 %v4401, 1.0
    %v4407 = vadd.f32 %v4403, 1.0
    %v4408 = vrcp.pop %v4404
    %v4409 = vmul.f32 1.0, %v4408
    %v4410 = vrcp.pop %v4405
    %v4411 = vmul.f32 1.0, %v4410
    %v4412 = vrcp.pop %v4406
    %v4413 = vmul.f32 1.0, %v4412
    %v4414 = vrcp.pop %v4407
    %v4415 = vmul.f32 1.0, %v4414
    %v4416 = vxor.u32 %v4380, 2147483648
    %v4417 = vxor.u32 %v4381, 2147483648
    %v4418 = vxor.u32 %v4382, 2147483648
    %v4419 = vxor.u32 %v4383, 2147483648
    %v4420 = vmul.f32 %v4416, 1.442695
    %v4421 = vpow.pop %v4420
    %v4422 = vmul.f32 %v4417, 1.442695
    %v4423 = vpow.pop %v4422
    %v4424 = vmul.f32 %v4418, 1.442695
    %v4425 = vpow.pop %v4424
    %v4426 = vmul.f32 %v4419, 1.442695
    %v4427 = vpow.pop %v4426
    %v4428 = vadd.f32 %v4421, 1.0
    %v4429 = vadd.f32 %v4423, 1.0
    %v4430 = vadd.f32 %v4425, 1.0
    %v4431 = vadd.f32 %v4427, 1.0
    %v4432 = vrcp.pop %v4428
    %v4433 = vmul.f32 1.0, %v4432
    %v4434 = vrcp.pop %v4429
    %v4435 = vmul.f32 1.0, %v4434
    %v4436 = vrcp.pop %v4430
    %v4437 = vmul.f32 1.0, %v4436
    %v4438 = vrcp.pop %v4431
    %v4439 = vmul.f32 1.0, %v4438
    %v4440 = vtanh.pop %v4384
    %v4441 = vtanh.pop %v4385
    %v4442 = vtanh.pop %v4386
    %v4443 = vtanh.pop %v4387
    %v4444 = vxor.u32 %v4388, 2147483648
    %v4445 = vxor.u32 %v4389, 2147483648
    %v4446 = vxor.u32 %v4390, 2147483648
    %v4447 = vxor.u32 %v4391, 2147483648
    %v4448 = vmul.f32 %v4444, 1.442695
    %v4449 = vpow.pop %v4448
    %v4450 = vmul.f32 %v4445, 1.442695
    %v4451 = vpow.pop %v4450
    %v4452 = vmul.f32 %v4446, 1.442695
    %v4453 = vpow.pop %v4452
    %v4454 = vmul.f32 %v4447, 1.442695
    %v4455 = vpow.pop %v4454
    %v4456 = vadd.f32 %v4449, 1.0
    %v4457 = vadd.f32 %v4451, 1.0
    %v4458 = vadd.f32 %v4453, 1.0
    %v4459 = vadd.f32 %v4455, 1.0
    %v4460 = vrcp.pop %v4456
    %v4461 = vmul.f32 1.0, %v4460
    %v4462 = vrcp.pop %v4457
    %v4463 = vmul.f32 1.0, %v4462
    %v4464 = vrcp.pop %v4458
    %v4465 = vmul.f32 1.0, %v4464
    %v4466 = vrcp.pop %v4459
    %v4467 = vmul.f32 1.0, %v4466
    %v4468 = vmul.f32 %v4433, %v3957
    %v4469 = vmul.f32 %v4435, %v3958
    %v4470 = vmul.f32 %v4437, %v3959
    %v4471 = vmul.f32 %v4439, %v3960
    %v4472 = vmul.f32 %v4409, %v4440
    %v4473 = vmul.f32 %v4411, %v4441
    %v4474 = vmul.f32 %v4413, %v4442
    %v4475 = vmul.f32 %v4415, %v4443
    %v4476 = vadd.f32 %v4468, %v4472
    %v4477 = vadd.f32 %v4469, %v4473
    %v4478 = vadd.f32 %v4470, %v4474
    %v4479 = vadd.f32 %v4471, %v4475
    %v4480 = vtanh.pop %v4476
    %v4481 = vtanh.pop %v4477
    %v4482 = vtanh.pop %v4478
    %v4483 = vtanh.pop %v4479
    %v4484 = vmul.f32 %v4461, %v4480
    %v4485 = vmul.f32 %v4463, %v4481
    %v4486 = vmul.f32 %v4465, %v4482
    %v4487 = vmul.f32 %v4467, %v4483
    %v4488 = vld [vmem:[%s6] sm:$0xff]
    %v4489 = vld [vmem:[%s7] sm:$0xff]
    %4491 = vset.pattern.permute.xlu0 0
    %4492 = vperm.xlu0 %4491, %v4489
    %v4493 = vpop.permute.xlu0 %4492
    %v4496 = vsel %vm549, %v4488, 0
    %4498 = vmatprep.subr.mxu0 0.0
    %4499 = vmatpush1.msra.mxu0 %v4484
    %4500 = vmatprep.subr.mxu0 0.0
    %4501 = vmatpush1.msra.mxu0 %v4485
    %4502 = vmatprep.subr.mxu0 0.0
    %4503 = vmatpush1.msra.mxu0 %v4486
    %4504 = vmatprep.subr.mxu0 0.0
    %4505 = vmatpush1.msra.mxu0 %v4487
    %4506 = vmatprep.subr.mxu0 0.0
    %4507 = vmatpush1.msra.mxu0 0.0
    %4508 = vmatprep.subr.mxu0 0.0
    %4509 = vmatpush1.msra.mxu0 0.0
    %4510 = vmatprep.subr.mxu0 0.0
    %4511 = vmatpush1.msra.mxu0 0.0
    %4512 = vmatprep.subr.mxu0 0.0
    %4513 = vmatpush1.msra.mxu0 0.0
    %4514 = vmatprep.subr.mxu0 0.0
    %4515 = vmatpush1.msra.mxu0 0.0
    %4516 = vmatprep.subr.mxu0 0.0
    %4517 = vmatpush1.msra.mxu0 0.0
    %4518 = vmatprep.subr.mxu0 0.0
    %4519 = vmatpush1.msra.mxu0 0.0
    %4520 = vmatprep.subr.mxu0 0.0
    %4521 = vmatpush1.msra.mxu0 0.0
    %4522 = vmatprep.subr.mxu0 0.0
    %4523 = vmatpush1.msra.mxu0 0.0
    %4524 = vmatprep.subr.mxu0 0.0
    %4525 = vmatpush1.msra.mxu0 0.0
    %4526 = vmatprep.subr.mxu0 0.0
    %4527 = vmatpush1.msra.mxu0 0.0
    %4528 = vmatprep.subr.mxu0 0.0
    %4529 = vmatpush1.msra.mxu0 0.0
    %4530 = vmatprep.subr.mxu0 0.0
    %4531 = vmatpush1.msra.mxu0 0.0
    %4532 = vmatprep.subr.mxu0 0.0
    %4533 = vmatpush1.msra.mxu0 0.0
    %4534 = vmatprep.subr.mxu0 0.0
    %4535 = vmatpush1.msra.mxu0 0.0
    %4536 = vmatprep.subr.mxu0 0.0
    %4537 = vmatpush1.msra.mxu0 0.0
    %4538 = vmatprep.subr.mxu0 0.0
    %4539 = vmatpush1.msra.mxu0 0.0
    %4540 = vmatprep.subr.mxu0 0.0
    %4541 = vmatpush1.msra.mxu0 0.0
    %4542 = vmatprep.subr.mxu0 0.0
    %4543 = vmatpush1.msra.mxu0 0.0
    %4544 = vmatprep.subr.mxu0 0.0
    %4545 = vmatpush1.msra.mxu0 0.0
    %4546 = vmatprep.subr.mxu0 0.0
    %4547 = vmatpush1.msra.mxu0 0.0
    %4548 = vmatprep.subr.mxu0 0.0
    %4549 = vmatpush1.msra.mxu0 0.0
    %4550 = vmatprep.subr.mxu0 0.0
    %4551 = vmatpush1.msra.mxu0 0.0
    %4552 = vmatprep.subr.mxu0 0.0
    %4553 = vmatpush1.msra.mxu0 0.0
    %4554 = vmatprep.subr.mxu0 0.0
    %4555 = vmatpush1.msra.mxu0 0.0
    %4556 = vmatprep.subr.mxu0 0.0
    %4557 = vmatpush1.msra.mxu0 0.0
    %4558 = vmatprep.subr.mxu0 0.0
    %4559 = vmatpush1.msra.mxu0 0.0
    %4560 = vmatprep.subr.mxu0 0.0
    %4561 = vmatpush1.msra.mxu0 0.0
    %4562 = vmatprep.mubr.f32.mxu0 0.0
    %4563 = vmatmul.mubr.f32.gmra.mrb[0].mxu0 %v4496
    %v4564 = vpop.f32.mrb[0].mxu0
    %v4565 = vadd.f32 %v4493, %v4564
    %v4566 = vpop.f32.mrb[0].mxu0
    %4567 = vdwg.mxu0
    %v4568 = vrot.slane %v4565, 4
    %v4569 = vmax.f32 %v4565, %v4568
    %v4570 = vrot.slane %v4569, 2
    %v4571 = vmax.f32 %v4569, %v4570
    %v4572 = vrot.slane %v4571, 1
    %v4573 = vmax.f32 %v4571, %v4572
    %v4574 = vsub.f32 %v4565, %v4573
    %v4575 = vmul.f32 %v4574, 1.442695
    %v4576 = vpow.pop %v4575
    %v4577 = vrot.slane %v4576, 4
    %v4578 = vadd.f32 %v4576, %v4577
    %v4579 = vrot.slane %v4578, 2
    %v4580 = vadd.f32 %v4578, %v4579
    %v4581 = vrot.slane %v4580, 1
    %v4582 = vadd.f32 %v4580, %v4581
    %v4583 = vrcp.pop %v4582
    %v4584 = vmul.f32 %v4576, %v4583
    %4585 = vst [vmem:[#allocation2] sm:$0xff] %v4584
    // Predicated region
    $region34: #{tpu_custom_call.1} parent=1 // pred_check
      _
    $region35: #{tpu_custom_call.1} parent=1 // pred_check_branch
      %4587 = sbr.rel (0) target = $region37
    $region36: #{tpu_custom_call.1} parent=1 // pred_region
      %s4589 = ssub.s32 128, 128
      %4590 = vsyncadd [#allocation3], %s4589
      %s4592 = sshll.u32 [#allocation2], 4
      %s4593 = int_to_ptr.vmem [resolvable:$true] %s4592
      %4595 = dma.vmem_to_hbm [thread:$0]  %s4593, 128, %s8, [#allocation3]
    $region37: #{tpu_custom_call.1} parent=1 // pred_fallthru
      _
    // Predicated region
    $region38: #{tpu_custom_call.1} parent=1 // pred_check
      _
    $region39: #{tpu_custom_call.1} parent=1 // pred_check_branch
      %4597 = sbr.rel (0) target = $region41
    $region40: #{tpu_custom_call.1} parent=1 // pred_region
      %4598 = dma.done [#allocation3], 128
    $region41: #{tpu_custom_call.1} parent=1 // pred_fallthru
      _
    %4599 = vsyncpa [#allocation3], 1

</llo_original>
